<compile_context>
chip_gen: v6e
topology: v6e:2x2x1
jax: 0.10.0
libtpu: 0.0.40
codegen_flags: <defaults>
</compile_context>

<pallas_src>
import functools

import jax
import jax.numpy as jnp
from jax.experimental import pallas as pl
from jax.experimental.pallas import tpu as pltpu

NUM_CLASSES = 9
NUM_FEATURES = 1536     # efficientnet_b3 classifier[1].in_features
STEM_CH = 40            # efficientnet_b3 stem conv output channels
STEM_CH_PAD = 128       # lane-dense padding of stem output channels
K_IM2COL = 27           # 3*3*3
K_PAD = 32              # padded contraction dim
OUT_PAD = 128           # lane-dense padding of the logits
BN_EPS = 1e-5
STEM_TILE_M = 4096      # im2col rows per grid step (perf review: 2048-8192)
VMEM_LIMIT = 32 * 1024 * 1024


def _round_up(x, m):
    return (x + m - 1) // m * m


# ----------------------------------------------------------------------------
# Fused Pallas kernel: stem conv + BN + SiLU + avg-pool + projection + head
# ----------------------------------------------------------------------------
def _fused_forward_kernel(x_ref, ws_ref, ts_ref,
                          wp_ref, tp_ref,
                          w1_ref, t1_ref,
                          w2_ref, t2_ref,
                          w3_ref, b3_ref,
                          o_ref, acc_ref, *, n_valid_rows, tile_m):
    s = pl.program_id(1)
    last = pl.num_programs(1) - 1

    @pl.when(s == 0)
    def _():
        acc_ref[...] = jnp.zeros_like(acc_ref)

    # Stem conv tile: im2col rows @ W (BN scale pre-folded into W), + shift,
    # SiLU in f32; bf16 operands on the MXU, f32 accumulation.
    y = jnp.dot(x_ref[0], ws_ref[...], preferred_element_type=jnp.float32)
    y = y + ts_ref[...]
    y = y * jax.nn.sigmoid(y)                    # SiLU (f32)

    needs_mask = (n_valid_rows % tile_m) != 0    # static: only last tile padded
    if needs_mask:
        @pl.when(s == last)
        def _():
            row = jax.lax.broadcasted_iota(jnp.int32, (tile_m, 1), 0) + s * tile_m
            acc_ref[...] += jnp.sum(jnp.where(row < n_valid_rows, y, 0.0),
                                    axis=0, keepdims=True)

        @pl.when(s != last)
        def _():
            acc_ref[...] += jnp.sum(y, axis=0, keepdims=True)
    else:
        acc_ref[...] += jnp.sum(y, axis=0, keepdims=True)

    # Finalize: pooled mean -> projection (BN+SiLU) -> classifier head.
    @pl.when(s == last)
    def _():
        pooled = acc_ref[...] * (1.0 / n_valid_rows)            # [1, 128] f32
        h = jnp.dot(pooled.astype(jnp.bfloat16), wp_ref[...],
                    preferred_element_type=jnp.float32) + tp_ref[...]
        h = h * jax.nn.sigmoid(h)                               # SiLU
        h = jnp.maximum(jnp.dot(h.astype(jnp.bfloat16), w1_ref[...],
                                preferred_element_type=jnp.float32)
                        + t1_ref[...], 0.0)                     # Linear+BN+ReLU
        h = jnp.maximum(jnp.dot(h.astype(jnp.bfloat16), w2_ref[...],
                                preferred_element_type=jnp.float32)
                        + t2_ref[...], 0.0)                     # Linear+BN+ReLU
        o_ref[0] = jnp.dot(h.astype(jnp.bfloat16), w3_ref[...],
                           preferred_element_type=jnp.float32) + b3_ref[...]


def fused_forward(patches, pp, *, spatial, tile_m):
    """patches: [N, S_pad, K_PAD] bf16 -> logits [N, NUM_CLASSES] f32."""
    n, s_pad, k = patches.shape
    n_tiles = s_pad // tile_m
    hp = pp["head"]
    kernel = functools.partial(_fused_forward_kernel,
                               n_valid_rows=spatial, tile_m=tile_m)
    const = lambda r, c: pl.BlockSpec((r, c), lambda i, j: (0, 0))
    logits = pl.pallas_call(
        kernel,
        out_shape=jax.ShapeDtypeStruct((n, 1, OUT_PAD), jnp.float32),
        grid=(n, n_tiles),
        in_specs=[
            pl.BlockSpec((1, tile_m, k), lambda i, j: (i, j, 0)),
            const(K_PAD, STEM_CH_PAD), const(1, STEM_CH_PAD),
            const(STEM_CH_PAD, NUM_FEATURES), const(1, NUM_FEATURES),
            const(NUM_FEATURES, 512), const(1, 512),
            const(512, 256), const(1, 256),
            const(256, OUT_PAD), const(1, OUT_PAD),
        ],
        out_specs=pl.BlockSpec((1, 1, OUT_PAD), lambda i, j: (i, 0, 0)),
        scratch_shapes=[pltpu.VMEM((1, STEM_CH_PAD), jnp.float32)],
        compiler_params=pltpu.CompilerParams(
            dimension_semantics=("parallel", "arbitrary"),
            vmem_limit_bytes=VMEM_LIMIT),
    )(patches, pp["stem_w"], pp["stem_shift"],
      hp["wp"], hp["tp"], hp["w1"], hp["t1"],
      hp["w2"], hp["t2"], hp["w3"], hp["b3"])
    return logits.reshape(n, OUT_PAD)[:, :NUM_CLASSES]


# ----------------------------------------------------------------------------
# Glue (plain JAX): im2col, BN folding, parameter init / preparation
# ----------------------------------------------------------------------------
def _im2col(x_nhwc, kh, kw, stride, pad):
    x = jnp.pad(x_nhwc, ((0, 0), (pad, pad), (pad, pad), (0, 0)))
    n, h, w, c = x.shape
    ho = (h - kh) // stride + 1
    wo = (w - kw) // stride + 1
    cols = []
    for i in range(kh):
        for j in range(kw):
            cols.append(x[:, i:i + ho * stride:stride,
                          j:j + wo * stride:stride, :])
    patches = jnp.concatenate(cols, axis=-1)            # [N, ho, wo, kh*kw*C]
    return patches.reshape(n, ho * wo, kh * kw * c), (ho, wo)


def _fold_bn(gamma, beta, mean, var, eps=BN_EPS):
    scale = gamma / jnp.sqrt(var + eps)
    shift = beta - mean * scale
    return scale.reshape(1, -1), shift.reshape(1, -1)


def init_params(key):
    ks = jax.random.split(key, 16)
    p = {}
    # backbone stem conv: 3x3, 3->40, BN
    p["w_stem"] = jax.random.normal(ks[0], (K_IM2COL, STEM_CH), jnp.float32) * 0.1
    p["bn_stem"] = (jnp.ones((STEM_CH,)), jnp.zeros((STEM_CH,)),
                    jax.random.normal(ks[1], (STEM_CH,)) * 0.05,
                    jax.random.uniform(ks[2], (STEM_CH,), minval=0.5, maxval=1.5))
    # backbone head projection: 40 -> 1536, BN
    p["w_proj"] = jax.random.normal(ks[3], (STEM_CH, NUM_FEATURES), jnp.float32) * 0.1
    p["bn_proj"] = (jnp.ones((NUM_FEATURES,)), jnp.zeros((NUM_FEATURES,)),
                    jax.random.normal(ks[4], (NUM_FEATURES,)) * 0.05,
                    jax.random.uniform(ks[5], (NUM_FEATURES,), minval=0.5, maxval=1.5))
    # classifier head
    p["w1"] = jax.random.normal(ks[6], (NUM_FEATURES, 512), jnp.float32) * 0.02
    p["b1"] = jax.random.normal(ks[7], (512,)) * 0.01
    p["bn1"] = (jnp.ones((512,)), jnp.zeros((512,)),
                jax.random.normal(ks[8], (512,)) * 0.05,
                jax.random.uniform(ks[9], (512,), minval=0.5, maxval=1.5))
    p["w2"] = jax.random.normal(ks[10], (512, 256), jnp.float32) * 0.05
    p["b2"] = jax.random.normal(ks[11], (256,)) * 0.01
    p["bn2"] = (jnp.ones((256,)), jnp.zeros((256,)),
                jax.random.normal(ks[12], (256,)) * 0.05,
                jax.random.uniform(ks[13], (256,), minval=0.5, maxval=1.5))
    p["w3"] = jax.random.normal(ks[14], (256, NUM_CLASSES), jnp.float32) * 0.05
    p["b3"] = jax.random.normal(ks[15], (NUM_CLASSES,)) * 0.01
    return p


def prepare_params(p):
    """Fold BN scales into weights, biases into shifts, pad lane-dense, cast bf16."""
    pp = {}
    # stem: y = X @ (W*scale) + shift ; pad K 27->32, channels 40->128.
    s, t = _fold_bn(*p["bn_stem"])
    w = p["w_stem"] * s                                            # [27, 40]
    w_pad = jnp.zeros((K_PAD, STEM_CH_PAD), jnp.float32).at[:K_IM2COL, :STEM_CH].set(w)
    pp["stem_w"] = w_pad.astype(jnp.bfloat16)
    pp["stem_shift"] = jnp.zeros((1, STEM_CH_PAD), jnp.float32).at[:, :STEM_CH].set(t)
    # projection: rows 40..127 zero so padded pooled channels are inert.
    sp, tp = _fold_bn(*p["bn_proj"])
    wp = p["w_proj"] * sp                                          # [40, 1536]
    wp_pad = jnp.zeros((STEM_CH_PAD, NUM_FEATURES), jnp.float32).at[:STEM_CH].set(wp)
    # classifier: BN(Wx + b) = (W*s) x + (s*b + t)
    s1, t1 = _fold_bn(*p["bn1"])
    s2, t2 = _fold_bn(*p["bn2"])
    w3_pad = jnp.zeros((256, OUT_PAD), jnp.float32).at[:, :NUM_CLASSES].set(p["w3"])
    b3_pad = jnp.zeros((1, OUT_PAD), jnp.float32).at[:, :NUM_CLASSES].set(
        p["b3"].reshape(1, -1))
    pp["head"] = {
        "wp": wp_pad.astype(jnp.bfloat16), "tp": tp,
        "w1": (p["w1"] * s1).astype(jnp.bfloat16),
        "t1": s1 * p["b1"].reshape(1, -1) + t1,
        "w2": (p["w2"] * s2).astype(jnp.bfloat16),
        "t2": s2 * p["b2"].reshape(1, -1) + t2,
        "w3": w3_pad.astype(jnp.bfloat16), "b3": b3_pad,
    }
    return pp


def skin_cancer_classifier_forward(x_nchw, pp):
    """Eval-mode forward. x_nchw: [N, 3, H, W] float32 -> [N, 9] logits."""
    # Cast to bf16 BEFORE im2col: the 9x-duplicated patches intermediate is the
    # largest wrapper-side HBM cost (esp. on v5e's lower HBM bandwidth).
    x_nhwc = jnp.transpose(x_nchw, (0, 2, 3, 1)).astype(jnp.bfloat16)

    # im2col for the stem conv (3x3, stride 2, pad 1); K padded 27->32,
    # spatial rows padded to a multiple of the tile (masked in-kernel, last
    # tile only).
    patches, _ = _im2col(x_nhwc, 3, 3, stride=2, pad=1)            # [N, S, 27]
    n, s, k = patches.shape
    tile_m = min(STEM_TILE_M, _round_up(s, 8))
    s_pad = _round_up(s, tile_m)
    patches = jnp.pad(patches, ((0, 0), (0, s_pad - s), (0, K_PAD - k)))

    # Fused stem conv + BN + SiLU + global avg pool + projection + head.
    return fused_forward(patches, pp, spatial=s, tile_m=tile_m)


if __name__ == "__main__":
    key = jax.random.PRNGKey(0)
    k_in, k_par = jax.random.split(key)
    x = jax.random.normal(k_in, (2, 3, 32, 32), dtype=jnp.float32)  # NCHW
    params = prepare_params(init_params(k_par))

    fwd = jax.jit(skin_cancer_classifier_forward)
    out = jax.block_until_ready(fwd(x, params))
    assert out.shape == (2, NUM_CLASSES), out.shape
    assert out.dtype == jnp.float32
    assert bool(jnp.all(jnp.isfinite(out)))
    print("KERNEL_OK")
</pallas_src>

<mosaic_0001>
module attributes {stable_mosaic.version = 11 : i64} {
  func.func @_fused_forward_kernel(%arg0: i32, %arg1: i32, %arg2: memref<1x256x32xbf16, #tpu.memory_space<vmem>>, %arg3: memref<32x128xbf16, #tpu.memory_space<vmem>>, %arg4: memref<1x128xf32, #tpu.memory_space<vmem>>, %arg5: memref<128x1536xbf16, #tpu.memory_space<vmem>>, %arg6: memref<1x1536xf32, #tpu.memory_space<vmem>>, %arg7: memref<1536x512xbf16, #tpu.memory_space<vmem>>, %arg8: memref<1x512xf32, #tpu.memory_space<vmem>>, %arg9: memref<512x256xbf16, #tpu.memory_space<vmem>>, %arg10: memref<1x256xf32, #tpu.memory_space<vmem>>, %arg11: memref<256x128xbf16, #tpu.memory_space<vmem>>, %arg12: memref<1x128xf32, #tpu.memory_space<vmem>>, %arg13: memref<1x1x128xf32, #tpu.memory_space<vmem>>, %arg14: memref<1x128xf32, #tpu.memory_space<vmem>>) attributes {dimension_semantics = [#tpu.dimension_semantics<parallel>, #tpu.dimension_semantics<arbitrary>], iteration_bounds = array<i64: 2, 1>, scalar_prefetch = 0 : i64, scratch_operands = 1 : i64, tpu.core_type = #tpu.core_type<tc>, window_params = [{transform_indices = @transform_0, window_bounds = array<i64: 1, 256, 32>}, {pipeline_mode = #tpu.pipeline_mode<synchronous>, transform_indices = @transform_1, window_bounds = array<i64: 32, 128>}, {pipeline_mode = #tpu.pipeline_mode<synchronous>, transform_indices = @transform_2, window_bounds = array<i64: 1, 128>}, {pipeline_mode = #tpu.pipeline_mode<synchronous>, transform_indices = @transform_3, window_bounds = array<i64: 128, 1536>}, {pipeline_mode = #tpu.pipeline_mode<synchronous>, transform_indices = @transform_4, window_bounds = array<i64: 1, 1536>}, {pipeline_mode = #tpu.pipeline_mode<synchronous>, transform_indices = @transform_5, window_bounds = array<i64: 1536, 512>}, {pipeline_mode = #tpu.pipeline_mode<synchronous>, transform_indices = @transform_6, window_bounds = array<i64: 1, 512>}, {pipeline_mode = #tpu.pipeline_mode<synchronous>, transform_indices = @transform_7, window_bounds = array<i64: 512, 256>}, {pipeline_mode = #tpu.pipeline_mode<synchronous>, transform_indices = @transform_8, window_bounds = array<i64: 1, 256>}, {pipeline_mode = #tpu.pipeline_mode<synchronous>, transform_indices = @transform_9, window_bounds = array<i64: 256, 128>}, {pipeline_mode = #tpu.pipeline_mode<synchronous>, transform_indices = @transform_10, window_bounds = array<i64: 1, 128>}, {transform_indices = @transform_11, window_bounds = array<i64: 1, 1, 128>}]} {
    %c0_i32 = arith.constant 0 : i32
    %0 = arith.cmpi eq, %arg1, %c0_i32 : i32
    %1 = arith.extui %0 : i1 to i32
    %c0_i32_0 = arith.constant 0 : i32
    %2 = arith.cmpi ne, %1, %c0_i32_0 : i32
    scf.if %2 {
      %cst_15 = arith.constant 0.000000e+00 : f32
      %24 = vector.broadcast %cst_15 : f32 to vector<1x128xf32>
      %c0_16 = arith.constant 0 : index
      %c0_17 = arith.constant 0 : index
      %25 = vector.load %arg14[%c0_16, %c0_17] : memref<1x128xf32, #tpu.memory_space<vmem>>, vector<1x128xf32>
      tpu.vector_store %arg14[%c0_16, %c0_17], %24 {strides = array<i32>} : memref<1x128xf32, #tpu.memory_space<vmem>>, vector<1x128xf32>,
    } else {
    }
    %c0 = arith.constant 0 : index
    %c0_1 = arith.constant 0 : index
    %c0_2 = arith.constant 0 : index
    %3 = vector.load %arg2[%c0, %c0_1, %c0_2] : memref<1x256x32xbf16, #tpu.memory_space<vmem>>, vector<1x256x32xbf16>
    %4 = vector.shape_cast %3 : vector<1x256x32xbf16> to vector<256x32xbf16>
    %c0_3 = arith.constant 0 : index
    %c0_4 = arith.constant 0 : index
    %5 = vector.load %arg3[%c0_3, %c0_4] : memref<32x128xbf16, #tpu.memory_space<vmem>>, vector<32x128xbf16>
    %cst = arith.constant dense<0.000000e+00> : vector<256x128xf32>
    %6 = tpu.matmul %4, %5, %cst {dimension_numbers = #tpu.dot_dimension_numbers<[1], [0], [0], [1], [0, 0, 1, 1], [], []>} : vector<256x32xbf16>, vector<32x128xbf16>, vector<256x128xf32> -> vector<256x128xf32>
    %c0_5 = arith.constant 0 : index
    %c0_6 = arith.constant 0 : index
    %7 = vector.load %arg4[%c0_5, %c0_6] : memref<1x128xf32, #tpu.memory_space<vmem>>, vector<1x128xf32>
    %8 = vector.broadcast %7 : vector<1x128xf32> to vector<256x128xf32>
    %9 = arith.addf %6, %8 : vector<256x128xf32>
    %10 = arith.negf %9 : vector<256x128xf32>
    %11 = math.exp %10 : vector<256x128xf32>
    %cst_7 = arith.constant 1.000000e+00 : f32
    %12 = vector.broadcast %cst_7 : f32 to vector<256x128xf32>
    %13 = arith.addf %12, %11 : vector<256x128xf32>
    %14 = arith.divf %12, %13 : vector<256x128xf32>
    %15 = arith.mulf %9, %14 : vector<256x128xf32>
    %c0_8 = arith.constant 0 : index
    %c0_9 = arith.constant 0 : index
    %16 = vector.load %arg14[%c0_8, %c0_9] : memref<1x128xf32, #tpu.memory_space<vmem>>, vector<1x128xf32>
    %cst_10 = arith.constant dense<0.000000e+00> : vector<128xf32>
    %17 = vector.multi_reduction <add>, %15, %cst_10 [0] : vector<256x128xf32> to vector<128xf32>
    %18 = vector.shape_cast %17 : vector<128xf32> to vector<1x128xf32>
    %19 = arith.addf %16, %18 : vector<1x128xf32>
    %c0_11 = arith.constant 0 : index
    %c0_12 = arith.constant 0 : index
    %20 = vector.load %arg14[%c0_11, %c0_12] : memref<1x128xf32, #tpu.memory_space<vmem>>, vector<1x128xf32>
    tpu.vector_store %arg14[%c0_11, %c0_12], %19 {strides = array<i32>} : memref<1x128xf32, #tpu.memory_space<vmem>>, vector<1x128xf32>,
    %c0_i32_13 = arith.constant 0 : i32
    %21 = arith.cmpi eq, %arg1, %c0_i32_13 : i32
    %22 = arith.extui %21 : i1 to i32
    %c0_i32_14 = arith.constant 0 : i32
    %23 = arith.cmpi ne, %22, %c0_i32_14 : i32
    scf.if %23 {
      %c0_15 = arith.constant 0 : index
      %c0_16 = arith.constant 0 : index
      %24 = vector.load %arg14[%c0_15, %c0_16] : memref<1x128xf32, #tpu.memory_space<vmem>>, vector<1x128xf32>
      %cst_17 = arith.constant 3.906250e-03 : f32
      %25 = vector.broadcast %cst_17 : f32 to vector<1x128xf32>
      %26 = arith.mulf %24, %25 : vector<1x128xf32>
      %27 = arith.truncf %26 : vector<1x128xf32> to vector<1x128xbf16>
      %c0_18 = arith.constant 0 : index
      %c0_19 = arith.constant 0 : index
      %28 = vector.load %arg5[%c0_18, %c0_19] : memref<128x1536xbf16, #tpu.memory_space<vmem>>, vector<128x1536xbf16>
      %cst_20 = arith.constant dense<0.000000e+00> : vector<1x1536xf32>
      %29 = tpu.matmul %27, %28, %cst_20 {dimension_numbers = #tpu.dot_dimension_numbers<[1], [0], [0], [1], [0, 0, 1, 1], [], []>} : vector<1x128xbf16>, vector<128x1536xbf16>, vector<1x1536xf32> -> vector<1x1536xf32>
      %c0_21 = arith.constant 0 : index
      %c0_22 = arith.constant 0 : index
      %30 = vector.load %arg6[%c0_21, %c0_22] : memref<1x1536xf32, #tpu.memory_space<vmem>>, vector<1x1536xf32>
      %31 = arith.addf %29, %30 : vector<1x1536xf32>
      %32 = arith.negf %31 : vector<1x1536xf32>
      %33 = math.exp %32 : vector<1x1536xf32>
      %cst_23 = arith.constant 1.000000e+00 : f32
      %34 = vector.broadcast %cst_23 : f32 to vector<1x1536xf32>
      %35 = arith.addf %34, %33 : vector<1x1536xf32>
      %36 = arith.divf %34, %35 : vector<1x1536xf32>
      %37 = arith.mulf %31, %36 : vector<1x1536xf32>
      %38 = arith.truncf %37 : vector<1x1536xf32> to vector<1x1536xbf16>
      %c0_24 = arith.constant 0 : index
      %c0_25 = arith.constant 0 : index
      %39 = vector.load %arg7[%c0_24, %c0_25] : memref<1536x512xbf16, #tpu.memory_space<vmem>>, vector<1536x512xbf16>
      %cst_26 = arith.constant dense<0.000000e+00> : vector<1x512xf32>
      %40 = tpu.matmul %38, %39, %cst_26 {dimension_numbers = #tpu.dot_dimension_numbers<[1], [0], [0], [1], [0, 0, 1, 1], [], []>} : vector<1x1536xbf16>, vector<1536x512xbf16>, vector<1x512xf32> -> vector<1x512xf32>
      %c0_27 = arith.constant 0 : index
      %c0_28 = arith.constant 0 : index
      %41 = vector.load %arg8[%c0_27, %c0_28] : memref<1x512xf32, #tpu.memory_space<vmem>>, vector<1x512xf32>
      %42 = arith.addf %40, %41 : vector<1x512xf32>
      %cst_29 = arith.constant 0.000000e+00 : f32
      %43 = vector.broadcast %cst_29 : f32 to vector<1x512xf32>
      %44 = arith.maximumf %42, %43 : vector<1x512xf32>
      %45 = arith.truncf %44 : vector<1x512xf32> to vector<1x512xbf16>
      %c0_30 = arith.constant 0 : index
      %c0_31 = arith.constant 0 : index
      %46 = vector.load %arg9[%c0_30, %c0_31] : memref<512x256xbf16, #tpu.memory_space<vmem>>, vector<512x256xbf16>
      %cst_32 = arith.constant dense<0.000000e+00> : vector<1x256xf32>
      %47 = tpu.matmul %45, %46, %cst_32 {dimension_numbers = #tpu.dot_dimension_numbers<[1], [0], [0], [1], [0, 0, 1, 1], [], []>} : vector<1x512xbf16>, vector<512x256xbf16>, vector<1x256xf32> -> vector<1x256xf32>
      %c0_33 = arith.constant 0 : index
      %c0_34 = arith.constant 0 : index
      %48 = vector.load %arg10[%c0_33, %c0_34] : memref<1x256xf32, #tpu.memory_space<vmem>>, vector<1x256xf32>
      %49 = arith.addf %47, %48 : vector<1x256xf32>
      %cst_35 = arith.constant 0.000000e+00 : f32
      %50 = vector.broadcast %cst_35 : f32 to vector<1x256xf32>
      %51 = arith.maximumf %49, %50 : vector<1x256xf32>
      %52 = arith.truncf %51 : vector<1x256xf32> to vector<1x256xbf16>
      %c0_36 = arith.constant 0 : index
      %c0_37 = arith.constant 0 : index
      %53 = vector.load %arg11[%c0_36, %c0_37] : memref<256x128xbf16, #tpu.memory_space<vmem>>, vector<256x128xbf16>
      %cst_38 = arith.constant dense<0.000000e+00> : vector<1x128xf32>
      %54 = tpu.matmul %52, %53, %cst_38 {dimension_numbers = #tpu.dot_dimension_numbers<[1], [0], [0], [1], [0, 0, 1, 1], [], []>} : vector<1x256xbf16>, vector<256x128xbf16>, vector<1x128xf32> -> vector<1x128xf32>
      %c0_39 = arith.constant 0 : index
      %c0_40 = arith.constant 0 : index
      %55 = vector.load %arg12[%c0_39, %c0_40] : memref<1x128xf32, #tpu.memory_space<vmem>>, vector<1x128xf32>
      %56 = arith.addf %54, %55 : vector<1x128xf32>
      %c0_41 = arith.constant 0 : index
      %c0_42 = arith.constant 0 : index
      %c0_43 = arith.constant 0 : index
      %57 = vector.load %arg13[%c0_41, %c0_42, %c0_43] : memref<1x1x128xf32, #tpu.memory_space<vmem>>, vector<1x1x128xf32>
      %58 = vector.shape_cast %57 : vector<1x1x128xf32> to vector<1x128xf32>
      %59 = vector.shape_cast %56 : vector<1x128xf32> to vector<1x1x128xf32>
      tpu.vector_store %arg13[%c0_41, %c0_42, %c0_43], %59 {strides = array<i32>} : memref<1x1x128xf32, #tpu.memory_space<vmem>>, vector<1x1x128xf32>,
    } else {
    }
    return
  }
  func.func @transform_0(%arg0: i32, %arg1: i32) -> (i32, i32, i32) {
    %c0_i32 = arith.constant 0 : i32
    %c0_i32_0 = arith.constant 0 : i32
    return %arg0, %arg1, %c0_i32 : i32, i32, i32
  }
  func.func @transform_1(%arg0: i32, %arg1: i32) -> (i32, i32) {
    %c0_i32 = arith.constant 0 : i32
    %c0_i32_0 = arith.constant 0 : i32
    %c0_i32_1 = arith.constant 0 : i32
    return %c0_i32, %c0_i32_0 : i32, i32
  }
  func.func @transform_2(%arg0: i32, %arg1: i32) -> (i32, i32) {
    %c0_i32 = arith.constant 0 : i32
    %c0_i32_0 = arith.constant 0 : i32
    %c0_i32_1 = arith.constant 0 : i32
    return %c0_i32, %c0_i32_0 : i32, i32
  }
  func.func @transform_3(%arg0: i32, %arg1: i32) -> (i32, i32) {
    %c0_i32 = arith.constant 0 : i32
    %c0_i32_0 = arith.constant 0 : i32
    %c0_i32_1 = arith.constant 0 : i32
    return %c0_i32, %c0_i32_0 : i32, i32
  }
  func.func @transform_4(%arg0: i32, %arg1: i32) -> (i32, i32) {
    %c0_i32 = arith.constant 0 : i32
    %c0_i32_0 = arith.constant 0 : i32
    %c0_i32_1 = arith.constant 0 : i32
    return %c0_i32, %c0_i32_0 : i32, i32
  }
  func.func @transform_5(%arg0: i32, %arg1: i32) -> (i32, i32) {
    %c0_i32 = arith.constant 0 : i32
    %c0_i32_0 = arith.constant 0 : i32
    %c0_i32_1 = arith.constant 0 : i32
    return %c0_i32, %c0_i32_0 : i32, i32
  }
  func.func @transform_6(%arg0: i32, %arg1: i32) -> (i32, i32) {
    %c0_i32 = arith.constant 0 : i32
    %c0_i32_0 = arith.constant 0 : i32
    %c0_i32_1 = arith.constant 0 : i32
    return %c0_i32, %c0_i32_0 : i32, i32
  }
  func.func @transform_7(%arg0: i32, %arg1: i32) -> (i32, i32) {
    %c0_i32 = arith.constant 0 : i32
    %c0_i32_0 = arith.constant 0 : i32
    %c0_i32_1 = arith.constant 0 : i32
    return %c0_i32, %c0_i32_0 : i32, i32
  }
  func.func @transform_8(%arg0: i32, %arg1: i32) -> (i32, i32) {
    %c0_i32 = arith.constant 0 : i32
    %c0_i32_0 = arith.constant 0 : i32
    %c0_i32_1 = arith.constant 0 : i32
    return %c0_i32, %c0_i32_0 : i32, i32
  }
  func.func @transform_9(%arg0: i32, %arg1: i32) -> (i32, i32) {
    %c0_i32 = arith.constant 0 : i32
    %c0_i32_0 = arith.constant 0 : i32
    %c0_i32_1 = arith.constant 0 : i32
    return %c0_i32, %c0_i32_0 : i32, i32
  }
  func.func @transform_10(%arg0: i32, %arg1: i32) -> (i32, i32) {
    %c0_i32 = arith.constant 0 : i32
    %c0_i32_0 = arith.constant 0 : i32
    %c0_i32_1 = arith.constant 0 : i32
    return %c0_i32, %c0_i32_0 : i32, i32
  }
  func.func @transform_11(%arg0: i32, %arg1: i32) -> (i32, i32, i32) {
    %c0_i32 = arith.constant 0 : i32
    %c0_i32_0 = arith.constant 0 : i32
    %c0_i32_1 = arith.constant 0 : i32
    return %arg0, %c0_i32, %c0_i32_0 : i32, i32, i32
  }
}

</mosaic_0001>

<llo_original>
// kernel: skin_cancer_classifier_forward.1
$region0: #{skin_cancer_classifier_forward.1}
  #allocation0 [shape = 'u32[]', space=smem, size = 0x4, offset = 0x4, fixed_abs, tag = 'smem constant byte address 0x4 - core index']
  #allocation1 [shape = 'u32[144,128]{1,0:T(1,128)}', space=vmem, size = 0x12000, scoped, tag = 'internal scratch']
  #allocation2 [shape = 'f32[1,128]{1,0:T(1,128)}', space=vmem, size = 0x200, scoped, tag = 'scratch operand']
  %s0 = inlined_call_operand.vmem [shape: bf16[2,256,32], index: 0, kind: input, shape index: {}]
  %s1 = inlined_call_operand.vmem [shape: bf16[32,128], index: 1, kind: input, shape index: {}]
  %s2 = inlined_call_operand.vmem [shape: f32[1,128], index: 2, kind: input, shape index: {}]
  %s3 = inlined_call_operand.hbm [shape: bf16[128,1536], index: 3, kind: input, shape index: {}]
  %s4 = inlined_call_operand.vmem [shape: f32[1,1536], index: 4, kind: input, shape index: {}]
  %s5 = inlined_call_operand.vmem [shape: bf16[1536,512], index: 5, kind: input, shape index: {}]
  %s6 = inlined_call_operand.vmem [shape: f32[1,512], index: 6, kind: input, shape index: {}]
  %s7 = inlined_call_operand.hbm [shape: bf16[512,256], index: 7, kind: input, shape index: {}]
  %s8 = inlined_call_operand.vmem [shape: f32[1,256], index: 8, kind: input, shape index: {}]
  %s9 = inlined_call_operand.vmem [shape: bf16[256,128], index: 9, kind: input, shape index: {}]
  %s10 = inlined_call_operand.vmem [shape: f32[1,128], index: 10, kind: input, shape index: {}]
  %s11 = inlined_call_operand.hbm [shape: f32[2,1,128], index: 11, kind: output, shape index: {}]
  %s12 = sld [smem:[#allocation0]]
  $region93: #{skin_cancer_classifier_forward.1} parent=0
    _
  %s14 = ssub.s32 1, %s12
  %s15 = scalar_select 0, %s14, %s12
  $region1: #{skin_cancer_classifier_forward.1} parent=0
    #allocation3 [shape = 'u8[393216]{0}', space=vmem, size = 0x60000, scoped, tag = 'input window, operand 3, single buffered']
    #allocation4 [shape = 's32[2]{0}', space=sflag, size = 0x8, scoped, tag = 'scoped memory for skin_cancer_classifier_forward.1']
    #allocation5 [shape = 's32[2]{0}', space=sflag, size = 0x8, scoped, tag = 'scoped memory for skin_cancer_classifier_forward.1']
    #allocation6 [shape = 'u8[262144]{0}', space=vmem, size = 0x40000, scoped, tag = 'input window, operand 7, single buffered']
    #allocation7 [shape = 's32[1]{0}', space=sflag, size = 0x4, scoped, tag = 'scoped memory for skin_cancer_classifier_forward.1']
    #allocation8 [shape = 'u8[1024]{0}', space=vmem, size = 0x400, scoped, tag = 'output window, operand 0']
    %16 = vsyncpa [#allocation4], 0
    %17 = vsyncpa [#allocation7], 0
    %18 = vsyncpa [#allocation5], 0
    %s19 = scalar_lea.sflag [#allocation5], 1
    %20 = vsyncpa %s19, 0
    loop: start=0, step=1, limit=4
    $region2: #{skin_cancer_classifier_forward.1} parent=1 // loop_pre_header
      _
    $region3: #{skin_cancer_classifier_forward.1} parent=1 // loop_header
      %s22 = sphi 0, %s26
      %p23 = scmp.ge.s32.totalorder %s22, 4
      %s29 = sphi 0, %s41
      %s30 = sphi 0, %s37
      %s31 = sphi 0, %s29
      %s32 = sphi 0, %s30
      %s33 = sphi 0, %s31
      %s34 = sphi 0, %s32
      %s46 = sphi 0, %s48
      %s49 = sphi 0, %s46
      %s50 = sphi 0, %s49
      %s66 = sphi 0, %s50
      %s70 = sphi 0, %s70
      %s72 = sphi 0, %s70
      %s73 = sphi 0, %s72
      %s87 = sphi 0, %s73
      %s91 = sphi 0, %s91
      %s93 = sphi 0, %s91
      %s94 = sphi 0, %s93
      %s108 = sphi 0, %s94
      %s112 = sphi 0, %s112
      %s114 = sphi 0, %s112
      %s115 = sphi 0, %s114
      %s129 = sphi 0, %s115
      %s133 = sphi 0, %s133
      %s135 = sphi 0, %s133
      %s136 = sphi 0, %s135
      %s150 = sphi 0, %s136
      %s154 = sphi 0, %s154
      %s156 = sphi 0, %s154
      %s157 = sphi 0, %s156
      %s171 = sphi 0, %s157
      %s175 = sphi 0, %s175
      %s177 = sphi 0, %s175
      %s178 = sphi 0, %s177
      %s192 = sphi 0, %s178
      %s196 = sphi 0, %s196
      %s198 = sphi 0, %s196
      %s199 = sphi 0, %s198
      %s213 = sphi 0, %s199
      %s217 = sphi 0, %s217
      %s219 = sphi 0, %s217
      %s220 = sphi 0, %s219
      %s234 = sphi 0, %s220
      %s238 = sphi 0, %s238
      %s240 = sphi 0, %s238
      %s241 = sphi 0, %s240
      %s255 = sphi 0, %s241
      %s259 = sphi 0, %s259
      %s261 = sphi 0, %s259
      %s262 = sphi 0, %s261
      %s276 = sphi 0, %s262
      %s282 = sphi 0, %s284
      %s285 = sphi 0, %s282
      %s286 = sphi 0, %s285
      %s302 = sphi 0, %s286
    $region4: #{skin_cancer_classifier_forward.1} parent=1 // loop_header_branch
      %25 = sbr.rel (%p23) target = $region8
    $region5: #{skin_cancer_classifier_forward.1} parent=1 // loop_body
      %s27 = ssub.s32 %s22, 1
      %s28 = ssub.s32 %s22, 2
      %s35 = sadd.s32 1, %s30
      %p36 = scmp.ge.s32.totalorder %s35, 1
      %s37 = scalar_select %p36, 0, %s35
      %s38 = sadd.s32 1, %s29
      %s39 = scalar_select %p36, %s38, %s29
      %p40 = scmp.ge.s32.totalorder %s39, 2
      %s41 = scalar_select %p40, 0, %s39
      %s42 = ssub.s32 %s29, %s41
      %s43 = ssub.s32 %s30, %s37
      %s44 = sor.u32 %s42, %s43
      %p45 = scmp.eq.s32.totalorder %s44, 0
      %s47 = sadd.s32 %s46, 1
      %s48 = scalar_select %p45, %s46, %s47
      %p51 = pneg %p45
      %p52 = scmp.eq.s32.totalorder %s22, 1
      %p53 = por %p51, %p52
      %p54 = scmp.ne.s32.totalorder %s46, %s49
      %p55 = scmp.eq.s32.totalorder %s22, 0
      %p56 = por %p54, %p55
      %p57 = scmp.ne.s32.totalorder %s46, %s49
      %p58 = scmp.eq.s32.totalorder %s27, 1
      %p59 = por %p57, %p58
      %p60 = scmp.ne.s32.totalorder %s49, %s50
      %p61 = scmp.eq.s32.totalorder %s27, 0
      %p62 = por %p60, %p61
      %p63 = scmp.ne.s32.totalorder %s49, %s50
      %p64 = scmp.eq.s32.totalorder %s28, 1
      %p65 = por %p63, %p64
      %p67 = scmp.ne.s32.totalorder %s50, %s66
      %p68 = scmp.eq.s32.totalorder %s28, 0
      %p69 = por %p67, %p68
      %s71 = sadd.s32 %s70, 1
      %p74 = scmp.eq.s32.totalorder %s22, 1
      %p75 = scmp.ne.s32.totalorder %s70, %s72
      %p76 = scmp.eq.s32.totalorder %s22, 0
      %p77 = por %p75, %p76
      %p78 = scmp.ne.s32.totalorder %s70, %s72
      %p79 = scmp.eq.s32.totalorder %s27, 1
      %p80 = por %p78, %p79
      %p81 = scmp.ne.s32.totalorder %s72, %s73
      %p82 = scmp.eq.s32.totalorder %s27, 0
      %p83 = por %p81, %p82
      %p84 = scmp.ne.s32.totalorder %s72, %s73
      %p85 = scmp.eq.s32.totalorder %s28, 1
      %p86 = por %p84, %p85
      %p88 = scmp.ne.s32.totalorder %s73, %s87
      %p89 = scmp.eq.s32.totalorder %s28, 0
      %p90 = por %p88, %p89
      %s92 = sadd.s32 %s91, 1
      %p95 = scmp.eq.s32.totalorder %s22, 1
      %p96 = scmp.ne.s32.totalorder %s91, %s93
      %p97 = scmp.eq.s32.totalorder %s22, 0
      %p98 = por %p96, %p97
      %p99 = scmp.ne.s32.totalorder %s91, %s93
      %p100 = scmp.eq.s32.totalorder %s27, 1
      %p101 = por %p99, %p100
      %p102 = scmp.ne.s32.totalorder %s93, %s94
      %p103 = scmp.eq.s32.totalorder %s27, 0
      %p104 = por %p102, %p103
      %p105 = scmp.ne.s32.totalorder %s93, %s94
      %p106 = scmp.eq.s32.totalorder %s28, 1
      %p107 = por %p105, %p106
      %p109 = scmp.ne.s32.totalorder %s94, %s108
      %p110 = scmp.eq.s32.totalorder %s28, 0
      %p111 = por %p109, %p110
      %s113 = sadd.s32 %s112, 1
      %p116 = scmp.eq.s32.totalorder %s22, 1
      %p117 = scmp.ne.s32.totalorder %s112, %s114
      %p118 = scmp.eq.s32.totalorder %s22, 0
      %p119 = por %p117, %p118
      %p120 = scmp.ne.s32.totalorder %s112, %s114
      %p121 = scmp.eq.s32.totalorder %s27, 1
      %p122 = por %p120, %p121
      %p123 = scmp.ne.s32.totalorder %s114, %s115
      %p124 = scmp.eq.s32.totalorder %s27, 0
      %p125 = por %p123, %p124
      %p126 = scmp.ne.s32.totalorder %s114, %s115
      %p127 = scmp.eq.s32.totalorder %s28, 1
      %p128 = por %p126, %p127
      %p130 = scmp.ne.s32.totalorder %s115, %s129
      %p131 = scmp.eq.s32.totalorder %s28, 0
      %p132 = por %p130, %p131
      %s134 = sadd.s32 %s133, 1
      %p137 = scmp.eq.s32.totalorder %s22, 1
      %p138 = scmp.ne.s32.totalorder %s133, %s135
      %p139 = scmp.eq.s32.totalorder %s22, 0
      %p140 = por %p138, %p139
      %p141 = scmp.ne.s32.totalorder %s133, %s135
      %p142 = scmp.eq.s32.totalorder %s27, 1
      %p143 = por %p141, %p142
      %p144 = scmp.ne.s32.totalorder %s135, %s136
      %p145 = scmp.eq.s32.totalorder %s27, 0
      %p146 = por %p144, %p145
      %p147 = scmp.ne.s32.totalorder %s135, %s136
      %p148 = scmp.eq.s32.totalorder %s28, 1
      %p149 = por %p147, %p148
      %p151 = scmp.ne.s32.totalorder %s136, %s150
      %p152 = scmp.eq.s32.totalorder %s28, 0
      %p153 = por %p151, %p152
      %s155 = sadd.s32 %s154, 1
      %p158 = scmp.eq.s32.totalorder %s22, 1
      %p159 = scmp.ne.s32.totalorder %s154, %s156
      %p160 = scmp.eq.s32.totalorder %s22, 0
      %p161 = por %p159, %p160
      %p162 = scmp.ne.s32.totalorder %s154, %s156
      %p163 = scmp.eq.s32.totalorder %s27, 1
      %p164 = por %p162, %p163
      %p165 = scmp.ne.s32.totalorder %s156, %s157
      %p166 = scmp.eq.s32.totalorder %s27, 0
      %p167 = por %p165, %p166
      %p168 = scmp.ne.s32.totalorder %s156, %s157
      %p169 = scmp.eq.s32.totalorder %s28, 1
      %p170 = por %p168, %p169
      %p172 = scmp.ne.s32.totalorder %s157, %s171
      %p173 = scmp.eq.s32.totalorder %s28, 0
      %p174 = por %p172, %p173
      %s176 = sadd.s32 %s175, 1
      %p179 = scmp.eq.s32.totalorder %s22, 1
      %p180 = scmp.ne.s32.totalorder %s175, %s177
      %p181 = scmp.eq.s32.totalorder %s22, 0
      %p182 = por %p180, %p181
      %p183 = scmp.ne.s32.totalorder %s175, %s177
      %p184 = scmp.eq.s32.totalorder %s27, 1
      %p185 = por %p183, %p184
      %p186 = scmp.ne.s32.totalorder %s177, %s178
      %p187 = scmp.eq.s32.totalorder %s27, 0
      %p188 = por %p186, %p187
      %p189 = scmp.ne.s32.totalorder %s177, %s178
      %p190 = scmp.eq.s32.totalorder %s28, 1
      %p191 = por %p189, %p190
      %p193 = scmp.ne.s32.totalorder %s178, %s192
      %p194 = scmp.eq.s32.totalorder %s28, 0
      %p195 = por %p193, %p194
      %s197 = sadd.s32 %s196, 1
      %p200 = scmp.eq.s32.totalorder %s22, 1
      %p201 = scmp.ne.s32.totalorder %s196, %s198
      %p202 = scmp.eq.s32.totalorder %s22, 0
      %p203 = por %p201, %p202
      %p204 = scmp.ne.s32.totalorder %s196, %s198
      %p205 = scmp.eq.s32.totalorder %s27, 1
      %p206 = por %p204, %p205
      %p207 = scmp.ne.s32.totalorder %s198, %s199
      %p208 = scmp.eq.s32.totalorder %s27, 0
      %p209 = por %p207, %p208
      %p210 = scmp.ne.s32.totalorder %s198, %s199
      %p211 = scmp.eq.s32.totalorder %s28, 1
      %p212 = por %p210, %p211
      %p214 = scmp.ne.s32.totalorder %s199, %s213
      %p215 = scmp.eq.s32.totalorder %s28, 0
      %p216 = por %p214, %p215
      %s218 = sadd.s32 %s217, 1
      %p221 = scmp.eq.s32.totalorder %s22, 1
      %p222 = scmp.ne.s32.totalorder %s217, %s219
      %p223 = scmp.eq.s32.totalorder %s22, 0
      %p224 = por %p222, %p223
      %p225 = scmp.ne.s32.totalorder %s217, %s219
      %p226 = scmp.eq.s32.totalorder %s27, 1
      %p227 = por %p225, %p226
      %p228 = scmp.ne.s32.totalorder %s219, %s220
      %p229 = scmp.eq.s32.totalorder %s27, 0
      %p230 = por %p228, %p229
      %p231 = scmp.ne.s32.totalorder %s219, %s220
      %p232 = scmp.eq.s32.totalorder %s28, 1
      %p233 = por %p231, %p232
      %p235 = scmp.ne.s32.totalorder %s220, %s234
      %p236 = scmp.eq.s32.totalorder %s28, 0
      %p237 = por %p235, %p236
      %s239 = sadd.s32 %s238, 1
      %p242 = scmp.eq.s32.totalorder %s22, 1
      %p243 = scmp.ne.s32.totalorder %s238, %s240
      %p244 = scmp.eq.s32.totalorder %s22, 0
      %p245 = por %p243, %p244
      %p246 = scmp.ne.s32.totalorder %s238, %s240
      %p247 = scmp.eq.s32.totalorder %s27, 1
      %p248 = por %p246, %p247
      %p249 = scmp.ne.s32.totalorder %s240, %s241
      %p250 = scmp.eq.s32.totalorder %s27, 0
      %p251 = por %p249, %p250
      %p252 = scmp.ne.s32.totalorder %s240, %s241
      %p253 = scmp.eq.s32.totalorder %s28, 1
      %p254 = por %p252, %p253
      %p256 = scmp.ne.s32.totalorder %s241, %s255
      %p257 = scmp.eq.s32.totalorder %s28, 0
      %p258 = por %p256, %p257
      %s260 = sadd.s32 %s259, 1
      %p263 = scmp.eq.s32.totalorder %s22, 1
      %p264 = scmp.ne.s32.totalorder %s259, %s261
      %p265 = scmp.eq.s32.totalorder %s22, 0
      %p266 = por %p264, %p265
      %p267 = scmp.ne.s32.totalorder %s259, %s261
      %p268 = scmp.eq.s32.totalorder %s27, 1
      %p269 = por %p267, %p268
      %p270 = scmp.ne.s32.totalorder %s261, %s262
      %p271 = scmp.eq.s32.totalorder %s27, 0
      %p272 = por %p270, %p271
      %p273 = scmp.ne.s32.totalorder %s261, %s262
      %p274 = scmp.eq.s32.totalorder %s28, 1
      %p275 = por %p273, %p274
      %p277 = scmp.ne.s32.totalorder %s262, %s276
      %p278 = scmp.eq.s32.totalorder %s28, 0
      %p279 = por %p277, %p278
      %s280 = ssub.s32 %s29, %s41
      %p281 = scmp.eq.s32.totalorder %s280, 0
      %s283 = sadd.s32 %s282, 1
      %s284 = scalar_select %p281, %s282, %s283
      %p287 = pneg %p281
      %p288 = scmp.eq.s32.totalorder %s22, 1
      %p289 = por %p287, %p288
      %p290 = scmp.ne.s32.totalorder %s282, %s285
      %p291 = scmp.eq.s32.totalorder %s22, 0
      %p292 = por %p290, %p291
      %p293 = scmp.ne.s32.totalorder %s282, %s285
      %p294 = scmp.eq.s32.totalorder %s27, 1
      %p295 = por %p293, %p294
      %p296 = scmp.ne.s32.totalorder %s285, %s286
      %p297 = scmp.eq.s32.totalorder %s27, 0
      %p298 = por %p296, %p297
      %p299 = scmp.ne.s32.totalorder %s285, %s286
      %p300 = scmp.eq.s32.totalorder %s28, 1
      %p301 = por %p299, %p300
      %p303 = scmp.ne.s32.totalorder %s286, %s302
      %p304 = scmp.eq.s32.totalorder %s28, 0
      %p305 = por %p303, %p304
      %p306 = scmp.le.s32.totalorder 1, %s22
      %p307 = scmp.lt.s32.totalorder %s22, 3
      %p308 = pnand %p306, %p307
      %p309 = pneg %p308
      // Predicated region
      $region9: #{skin_cancer_classifier_forward.1} parent=5 // pred_check
        _
      $region10: #{skin_cancer_classifier_forward.1} parent=5 // pred_check_branch
        %311 = sbr.rel (%p308) target = $region12
      $region11: #{skin_cancer_classifier_forward.1} parent=5 // pred_region
        %s312 = ssub.s32 %s22, 1
        // Predicated region
        $region13: #{skin_cancer_classifier_forward.1} parent=11 // pred_check
          %p313 = pneg %p83
        $region14: #{skin_cancer_classifier_forward.1} parent=11 // pred_check_branch
          %315 = sbr.rel (%p313) target = $region16
        $region15: #{skin_cancer_classifier_forward.1} parent=11 // pred_region
          _
        $region16: #{skin_cancer_classifier_forward.1} parent=11 // pred_fallthru
          _
        // Predicated region
        $region17: #{skin_cancer_classifier_forward.1} parent=11 // pred_check
          %p316 = pneg %p104
        $region18: #{skin_cancer_classifier_forward.1} parent=11 // pred_check_branch
          %318 = sbr.rel (%p316) target = $region20
        $region19: #{skin_cancer_classifier_forward.1} parent=11 // pred_region
          _
        $region20: #{skin_cancer_classifier_forward.1} parent=11 // pred_fallthru
          _
        // Predicated region
        $region21: #{skin_cancer_classifier_forward.1} parent=11 // pred_check
          %p319 = pneg %p125
        $region22: #{skin_cancer_classifier_forward.1} parent=11 // pred_check_branch
          %321 = sbr.rel (%p319) target = $region24
        $region23: #{skin_cancer_classifier_forward.1} parent=11 // pred_region
          %s323 = ssub.s32 12288, 12288
          %324 = vsyncadd [#allocation4], %s323
          %s325 = sshll.u32 [#allocation3], 4
          %s326 = int_to_ptr.vmem [resolvable:$true] %s325
          %331 = dma.hbm_to_vmem [thread:$0]  %s3, 12288, %s326, [#allocation4], 768, 768, 48
        $region24: #{skin_cancer_classifier_forward.1} parent=11 // pred_fallthru
          _
        // Predicated region
        $region25: #{skin_cancer_classifier_forward.1} parent=11 // pred_check
          %p332 = pneg %p146
        $region26: #{skin_cancer_classifier_forward.1} parent=11 // pred_check_branch
          %334 = sbr.rel (%p332) target = $region28
        $region27: #{skin_cancer_classifier_forward.1} parent=11 // pred_region
          _
        $region28: #{skin_cancer_classifier_forward.1} parent=11 // pred_fallthru
          _
        // Predicated region
        $region29: #{skin_cancer_classifier_forward.1} parent=11 // pred_check
          %p335 = pneg %p167
        $region30: #{skin_cancer_classifier_forward.1} parent=11 // pred_check_branch
          %337 = sbr.rel (%p335) target = $region32
        $region31: #{skin_cancer_classifier_forward.1} parent=11 // pred_region
          _
        $region32: #{skin_cancer_classifier_forward.1} parent=11 // pred_fallthru
          _
        // Predicated region
        $region33: #{skin_cancer_classifier_forward.1} parent=11 // pred_check
          %p338 = pneg %p188
        $region34: #{skin_cancer_classifier_forward.1} parent=11 // pred_check_branch
          %340 = sbr.rel (%p338) target = $region36
        $region35: #{skin_cancer_classifier_forward.1} parent=11 // pred_region
          _
        $region36: #{skin_cancer_classifier_forward.1} parent=11 // pred_fallthru
          _
        // Predicated region
        $region37: #{skin_cancer_classifier_forward.1} parent=11 // pred_check
          %p341 = pneg %p209
        $region38: #{skin_cancer_classifier_forward.1} parent=11 // pred_check_branch
          %343 = sbr.rel (%p341) target = $region40
        $region39: #{skin_cancer_classifier_forward.1} parent=11 // pred_region
          %s345 = ssub.s32 8192, 8192
          %346 = vsyncadd [#allocation7], %s345
          %s347 = sshll.u32 [#allocation6], 4
          %s348 = int_to_ptr.vmem [resolvable:$true] %s347
          %353 = dma.hbm_to_vmem [thread:$0]  %s7, 8192, %s348, [#allocation7], 128, 128, 8
        $region40: #{skin_cancer_classifier_forward.1} parent=11 // pred_fallthru
          _
        // Predicated region
        $region41: #{skin_cancer_classifier_forward.1} parent=11 // pred_check
          %p354 = pneg %p230
        $region42: #{skin_cancer_classifier_forward.1} parent=11 // pred_check_branch
          %356 = sbr.rel (%p354) target = $region44
        $region43: #{skin_cancer_classifier_forward.1} parent=11 // pred_region
          _
        $region44: #{skin_cancer_classifier_forward.1} parent=11 // pred_fallthru
          _
        // Predicated region
        $region45: #{skin_cancer_classifier_forward.1} parent=11 // pred_check
          %p357 = pneg %p251
        $region46: #{skin_cancer_classifier_forward.1} parent=11 // pred_check_branch
          %359 = sbr.rel (%p357) target = $region48
        $region47: #{skin_cancer_classifier_forward.1} parent=11 // pred_region
          _
        $region48: #{skin_cancer_classifier_forward.1} parent=11 // pred_fallthru
          _
        // Predicated region
        $region49: #{skin_cancer_classifier_forward.1} parent=11 // pred_check
          %p360 = pneg %p272
        $region50: #{skin_cancer_classifier_forward.1} parent=11 // pred_check_branch
          %362 = sbr.rel (%p360) target = $region52
        $region51: #{skin_cancer_classifier_forward.1} parent=11 // pred_region
          _
        $region52: #{skin_cancer_classifier_forward.1} parent=11 // pred_fallthru
          _
      $region12: #{skin_cancer_classifier_forward.1} parent=5 // pred_fallthru
        _
      %p363 = scmp.lt.s32.totalorder %s22, 2
      // Predicated region
      $region53: #{skin_cancer_classifier_forward.1} parent=5 // pred_check
        %p364 = pneg %p363
      $region54: #{skin_cancer_classifier_forward.1} parent=5 // pred_check_branch
        %366 = sbr.rel (%p364) target = $region56
      $region55: #{skin_cancer_classifier_forward.1} parent=5 // pred_region
        // Predicated region
        $region57: #{skin_cancer_classifier_forward.1} parent=55 // pred_check
          %p367 = pneg %p56
        $region58: #{skin_cancer_classifier_forward.1} parent=55 // pred_check_branch
          %369 = sbr.rel (%p367) target = $region60
        $region59: #{skin_cancer_classifier_forward.1} parent=55 // pred_region
          %s370 = smul.u32 32, %s30
          %p371 = scmp.lt.s32.totalorder %s29, 1
          %s372 = scalar_select %p371, %s29, 1
          %p373 = scmp.lt.s32.totalorder %s370, 31
          %s374 = scalar_select %p373, %s370, 31
          %s375 = smul.addr %s372, 32
          %s376 = sadd.s32 %s374, %s375
          %s377 = smul.addr %s376, 4
          %s378 = scalar_lea.vmem %s0, %s377
          %s379 = smul.u32 32, %s30
        $region60: #{skin_cancer_classifier_forward.1} parent=55 // pred_fallthru
          _
      $region56: #{skin_cancer_classifier_forward.1} parent=5 // pred_fallthru
        _
      %p380 = scmp.le.s32.totalorder 1, %s22
      %p381 = scmp.lt.s32.totalorder %s22, 3
      %p382 = pnand %p380, %p381
      %p383 = pneg %p382
      // Predicated region
      $region61: #{skin_cancer_classifier_forward.1} parent=5 // pred_check
        _
      $region62: #{skin_cancer_classifier_forward.1} parent=5 // pred_check_branch
        %385 = sbr.rel (%p382) target = $region64
      $region63: #{skin_cancer_classifier_forward.1} parent=5 // pred_region
        %s386 = ssub.s32 %s22, 1
        // Predicated region
        $region65: #{skin_cancer_classifier_forward.1} parent=63 // pred_check
          %p387 = pneg %p125
        $region66: #{skin_cancer_classifier_forward.1} parent=63 // pred_check_branch
          %389 = sbr.rel (%p387) target = $region68
        $region67: #{skin_cancer_classifier_forward.1} parent=63 // pred_region
          %390 = dma.done [#allocation4], 12288
        $region68: #{skin_cancer_classifier_forward.1} parent=63 // pred_fallthru
          _
        // Predicated region
        $region69: #{skin_cancer_classifier_forward.1} parent=63 // pred_check
          %p391 = pneg %p209
        $region70: #{skin_cancer_classifier_forward.1} parent=63 // pred_check_branch
          %393 = sbr.rel (%p391) target = $region72
        $region71: #{skin_cancer_classifier_forward.1} parent=63 // pred_region
          %394 = dma.done [#allocation7], 8192
        $region72: #{skin_cancer_classifier_forward.1} parent=63 // pred_fallthru
          _
        %s395 = smul.u32 32, %s32
        %p396 = scmp.lt.s32.totalorder %s31, 1
        %s397 = scalar_select %p396, %s31, 1
        %p398 = scmp.lt.s32.totalorder %s395, 31
        %s399 = scalar_select %p398, %s395, 31
        %s400 = smul.addr %s397, 32
        %s401 = sadd.s32 %s399, %s400
        %s402 = smul.addr %s401, 4
        %s403 = scalar_lea.vmem %s0, %s402
        %p404 = pneg %p62
        %p405 = pneg %p59
        %p406 = pneg %p83
        %p407 = pneg %p80
        %p408 = pneg %p104
        %p409 = pneg %p101
        %p410 = pneg %p125
        %p411 = pneg %p122
        %p412 = pneg %p146
        %p413 = pneg %p143
        %p414 = pneg %p167
        %p415 = pneg %p164
        %p416 = pneg %p188
        %p417 = pneg %p185
        %p418 = pneg %p209
        %p419 = pneg %p206
        %p420 = pneg %p230
        %p421 = pneg %p227
        %p422 = pneg %p251
        %p423 = pneg %p248
        %p424 = pneg %p272
        %p425 = pneg %p269
        %p426 = pneg %p298
        %p427 = pneg %p295
        %s428 = sand.u32 %s285, 1
        %s429 = scalar_lea.sflag [#allocation5], %s428
        %s430 = sand.u32 %s285, 1
        %s431 = scalar_lea.vmem [#allocation8], %s430
        %s432 = smul.u32 32, %s32
        %p433 = scmp.lt.s32.totalorder %s31, 1
        %s434 = scalar_select %p433, %s31, 1
        %p435 = scmp.lt.s32.totalorder %s432, 31
        %s436 = scalar_select %p435, %s432, 31
        %s437 = smul.addr %s434, 32
        %s438 = sadd.s32 %s436, %s437
        %s439 = smul.addr %s438, 4
        %s440 = scalar_lea.vmem %s0, %s439
        %s441 = smul.u32 32, %s32
        %p443 = scmp.eq.s32.totalorder %s32, 0
        // Predicated region
        $region73: #{skin_cancer_classifier_forward.1} parent=63 // pred_check
          %p444 = pneg %p443
        $region74: #{skin_cancer_classifier_forward.1} parent=63 // pred_check_branch
          %446 = sbr.rel (%p444) target = $region76
        $region75: #{skin_cancer_classifier_forward.1} parent=63 // pred_region
          %447 = vst [vmem:[#allocation2] sm:$0x1] 0.0
        $region76: #{skin_cancer_classifier_forward.1} parent=63 // pred_fallthru
          _
        %v448 = vld [vmem:[%s440] sm:$0xf]
        %v449 = vld [vmem:[%s440 + $0x4] sm:$0xf]
        %v450 = vld [vmem:[%s440 + $0x8] sm:$0xf]
        %v451 = vld [vmem:[%s440 + $0xc] sm:$0xf]
        %v452 = vld [vmem:[%s440 + $0x10] sm:$0xf]
        %v453 = vld [vmem:[%s440 + $0x14] sm:$0xf]
        %v454 = vld [vmem:[%s440 + $0x18] sm:$0xf]
        %v455 = vld [vmem:[%s440 + $0x1c] sm:$0xf]
        %v456 = vld [vmem:[%s440 + $0x20] sm:$0xf]
        %v457 = vld [vmem:[%s440 + $0x24] sm:$0xf]
        %v458 = vld [vmem:[%s440 + $0x28] sm:$0xf]
        %v459 = vld [vmem:[%s440 + $0x2c] sm:$0xf]
        %v460 = vld [vmem:[%s440 + $0x30] sm:$0xf]
        %v461 = vld [vmem:[%s440 + $0x34] sm:$0xf]
        %v462 = vld [vmem:[%s440 + $0x38] sm:$0xf]
        %v463 = vld [vmem:[%s440 + $0x3c] sm:$0xf]
        %v464 = vld [vmem:[%s440 + $0x40] sm:$0xf]
        %v465 = vld [vmem:[%s440 + $0x44] sm:$0xf]
        %v466 = vld [vmem:[%s440 + $0x48] sm:$0xf]
        %v467 = vld [vmem:[%s440 + $0x4c] sm:$0xf]
        %v468 = vld [vmem:[%s440 + $0x50] sm:$0xf]
        %v469 = vld [vmem:[%s440 + $0x54] sm:$0xf]
        %v470 = vld [vmem:[%s440 + $0x58] sm:$0xf]
        %v471 = vld [vmem:[%s440 + $0x5c] sm:$0xf]
        %v472 = vld [vmem:[%s440 + $0x60] sm:$0xf]
        %v473 = vld [vmem:[%s440 + $0x64] sm:$0xf]
        %v474 = vld [vmem:[%s440 + $0x68] sm:$0xf]
        %v475 = vld [vmem:[%s440 + $0x6c] sm:$0xf]
        %v476 = vld [vmem:[%s440 + $0x70] sm:$0xf]
        %v477 = vld [vmem:[%s440 + $0x74] sm:$0xf]
        %v478 = vld [vmem:[%s440 + $0x78] sm:$0xf]
        %v479 = vld [vmem:[%s440 + $0x7c] sm:$0xf]
        %v480 = vld [vmem:[%s1] sm:$0xf]
        %v481 = vld [vmem:[%s1 + $0x4] sm:$0xf]
        %v482 = vld [vmem:[%s1 + $0x8] sm:$0xf]
        %v483 = vld [vmem:[%s1 + $0xc] sm:$0xf]
        %v484 = vld [vmem:[%s2] sm:$0x1]
        %v486 = vlaneseq
        %v487 = vshrl.u32 %v486, 7
        %v488 = vsub.s32 0, %v487
        %v489 = vrot.slane %v484, %v488
        %v523 = vunpack.c.l.b16 %v448
        %v524 = vunpack.c.l.b16 %v449
        %v525 = vunpack.c.l.b16 %v450
        %v526 = vunpack.c.l.b16 %v451
        %v527 = vunpack.c.l.b16 %v452
        %v528 = vunpack.c.l.b16 %v453
        %v529 = vunpack.c.l.b16 %v454
        %v530 = vunpack.c.l.b16 %v455
        %v531 = vunpack.c.l.b16 %v456
        %v532 = vunpack.c.l.b16 %v457
        %v533 = vunpack.c.l.b16 %v458
        %v534 = vunpack.c.l.b16 %v459
        %v535 = vunpack.c.l.b16 %v460
        %v536 = vunpack.c.l.b16 %v461
        %v537 = vunpack.c.l.b16 %v462
        %v538 = vunpack.c.l.b16 %v463
        %v539 = vunpack.c.l.b16 %v464
        %v540 = vunpack.c.l.b16 %v465
        %v541 = vunpack.c.l.b16 %v466
        %v542 = vunpack.c.l.b16 %v467
        %v543 = vunpack.c.l.b16 %v468
        %v544 = vunpack.c.l.b16 %v469
        %v545 = vunpack.c.l.b16 %v470
        %v546 = vunpack.c.l.b16 %v471
        %v547 = vunpack.c.l.b16 %v472
        %v548 = vunpack.c.l.b16 %v473
        %v549 = vunpack.c.l.b16 %v474
        %v550 = vunpack.c.l.b16 %v475
        %v551 = vunpack.c.l.b16 %v476
        %v552 = vunpack.c.l.b16 %v477
        %v553 = vunpack.c.l.b16 %v478
        %v554 = vunpack.c.l.b16 %v479
        %v555 = vpack.c.b16 %v524, %v523
        %v556 = vpack.c.b16 %v526, %v525
        %v557 = vpack.c.b16 %v528, %v527
        %v558 = vpack.c.b16 %v530, %v529
        %v559 = vpack.c.b16 %v532, %v531
        %v560 = vpack.c.b16 %v534, %v533
        %v561 = vpack.c.b16 %v536, %v535
        %v562 = vpack.c.b16 %v538, %v537
        %v563 = vpack.c.b16 %v540, %v539
        %v564 = vpack.c.b16 %v542, %v541
        %v565 = vpack.c.b16 %v544, %v543
        %v566 = vpack.c.b16 %v546, %v545
        %v567 = vpack.c.b16 %v548, %v547
        %v568 = vpack.c.b16 %v550, %v549
        %v569 = vpack.c.b16 %v552, %v551
        %v570 = vpack.c.b16 %v554, %v553
        %v575 = vunpack.c.l.b16 %v480
        %v576 = vunpack.c.l.b16 %v481
        %v577 = vunpack.c.l.b16 %v482
        %v578 = vunpack.c.l.b16 %v483
        %v579 = vpack.c.b16 %v576, %v575
        %v580 = vpack.c.b16 %v578, %v577
        %vm583 = vcmask 261120
        %v585 = vsel %vm583, %v555, 0
        %v588 = vsel %vm583, %v556, 0
        %v591 = vsel %vm583, %v557, 0
        %v594 = vsel %vm583, %v558, 0
        %v597 = vsel %vm583, %v559, 0
        %v600 = vsel %vm583, %v560, 0
        %v603 = vsel %vm583, %v561, 0
        %v606 = vsel %vm583, %v562, 0
        %v609 = vsel %vm583, %v563, 0
        %v612 = vsel %vm583, %v564, 0
        %v615 = vsel %vm583, %v565, 0
        %v618 = vsel %vm583, %v566, 0
        %v621 = vsel %vm583, %v567, 0
        %v624 = vsel %vm583, %v568, 0
        %v627 = vsel %vm583, %v569, 0
        %v630 = vsel %vm583, %v570, 0
        %632 = vmatprep.subr.bf16.mxu0 0
        %633 = vmatpush1.bf16.msra.mxu0 0
        %634 = vmatprep.subr.bf16.mxu0 0
        %635 = vmatpush1.bf16.msra.mxu0 0
        %636 = vmatprep.subr.bf16.mxu0 0
        %637 = vmatpush1.bf16.msra.mxu0 0
        %638 = vmatprep.subr.bf16.mxu0 0
        %639 = vmatpush1.bf16.msra.mxu0 0
        %640 = vmatprep.subr.bf16.mxu0 0
        %641 = vmatpush1.bf16.msra.mxu0 0
        %642 = vmatprep.subr.bf16.mxu0 0
        %643 = vmatpush1.bf16.msra.mxu0 0
        %644 = vmatprep.subr.bf16.mxu0 0
        %645 = vmatpush1.bf16.msra.mxu0 %v580
        %646 = vmatprep.subr.bf16.mxu0 0
        %647 = vmatpush1.bf16.msra.mxu0 %v579
        %648 = vmatprep.subr.bf16.mxu0 0
        %649 = vmatpush2.bf16.msra.mxu0 0
        %650 = vmatprep.subr.bf16.mxu0 0
        %651 = vmatpush2.bf16.msra.mxu0 0
        %652 = vmatprep.subr.bf16.mxu0 0
        %653 = vmatpush2.bf16.msra.mxu0 0
        %654 = vmatprep.subr.bf16.mxu0 0
        %655 = vmatpush2.bf16.msra.mxu0 0
        %656 = vmatprep.subr.bf16.mxu0 0
        %657 = vmatpush2.bf16.msra.mxu0 0
        %658 = vmatprep.subr.bf16.mxu0 0
        %659 = vmatpush2.bf16.msra.mxu0 0
        %660 = vmatprep.subr.bf16.mxu0 0
        %661 = vmatpush2.bf16.msra.mxu0 0
        %662 = vmatprep.subr.bf16.mxu0 0
        %663 = vmatpush2.bf16.msra.mxu0 0
        %664 = vmatprep.mubr.bf16.mxu0 0
        %665 = vmatmul.mubr.bf16.gmra.mxu0 %v585
        %v666 = vpop.f32.mrf.mxu0
        %v667 = vadd.f32 %v489, %v666
        %v668 = vpop.f32.mrf.mxu0
        %v669 = vpop.f32.mrf.mxu0
        %v670 = vadd.f32 %v489, %v669
        %v671 = vpop.f32.mrf.mxu0
        %672 = vmatprep.mubr.bf16.mxu0 0
        %673 = vmatmul.mubr.bf16.gmra.mxu0 %v588
        %v674 = vpop.f32.mrf.mxu0
        %v675 = vadd.f32 %v489, %v674
        %v676 = vpop.f32.mrf.mxu0
        %v677 = vpop.f32.mrf.mxu0
        %v678 = vadd.f32 %v489, %v677
        %v679 = vpop.f32.mrf.mxu0
        %680 = vmatprep.mubr.bf16.mxu0 0
        %681 = vmatmul.mubr.bf16.gmra.mxu0 %v591
        %v682 = vpop.f32.mrf.mxu0
        %v683 = vadd.f32 %v489, %v682
        %v684 = vpop.f32.mrf.mxu0
        %v685 = vpop.f32.mrf.mxu0
        %v686 = vadd.f32 %v489, %v685
        %v687 = vpop.f32.mrf.mxu0
        %688 = vmatprep.mubr.bf16.mxu0 0
        %689 = vmatmul.mubr.bf16.gmra.mxu0 %v594
        %v690 = vpop.f32.mrf.mxu0
        %v691 = vadd.f32 %v489, %v690
        %v692 = vpop.f32.mrf.mxu0
        %v693 = vpop.f32.mrf.mxu0
        %v694 = vadd.f32 %v489, %v693
        %v695 = vpop.f32.mrf.mxu0
        %696 = vmatprep.mubr.bf16.mxu0 0
        %697 = vmatmul.mubr.bf16.gmra.mxu0 %v597
        %v698 = vpop.f32.mrf.mxu0
        %v699 = vadd.f32 %v489, %v698
        %v700 = vpop.f32.mrf.mxu0
        %v701 = vpop.f32.mrf.mxu0
        %v702 = vadd.f32 %v489, %v701
        %v703 = vpop.f32.mrf.mxu0
        %704 = vmatprep.mubr.bf16.mxu0 0
        %705 = vmatmul.mubr.bf16.gmra.mxu0 %v600
        %v706 = vpop.f32.mrf.mxu0
        %v707 = vadd.f32 %v489, %v706
        %v708 = vpop.f32.mrf.mxu0
        %v709 = vpop.f32.mrf.mxu0
        %v710 = vadd.f32 %v489, %v709
        %v711 = vpop.f32.mrf.mxu0
        %712 = vmatprep.mubr.bf16.mxu0 0
        %713 = vmatmul.mubr.bf16.gmra.mxu0 %v603
        %v714 = vpop.f32.mrf.mxu0
        %v715 = vadd.f32 %v489, %v714
        %v716 = vpop.f32.mrf.mxu0
        %v717 = vpop.f32.mrf.mxu0
        %v718 = vadd.f32 %v489, %v717
        %v719 = vpop.f32.mrf.mxu0
        %720 = vmatprep.mubr.bf16.mxu0 0
        %721 = vmatmul.mubr.bf16.gmra.mxu0 %v606
        %v722 = vpop.f32.mrf.mxu0
        %v723 = vadd.f32 %v489, %v722
        %v724 = vpop.f32.mrf.mxu0
        %v725 = vpop.f32.mrf.mxu0
        %v726 = vadd.f32 %v489, %v725
        %v727 = vpop.f32.mrf.mxu0
        %728 = vmatprep.mubr.bf16.mxu0 0
        %729 = vmatmul.mubr.bf16.gmra.mxu0 %v609
        %v730 = vpop.f32.mrf.mxu0
        %v731 = vadd.f32 %v489, %v730
        %v732 = vpop.f32.mrf.mxu0
        %v733 = vpop.f32.mrf.mxu0
        %v734 = vadd.f32 %v489, %v733
        %v735 = vpop.f32.mrf.mxu0
        %736 = vmatprep.mubr.bf16.mxu0 0
        %737 = vmatmul.mubr.bf16.gmra.mxu0 %v612
        %v738 = vpop.f32.mrf.mxu0
        %v739 = vadd.f32 %v489, %v738
        %v740 = vpop.f32.mrf.mxu0
        %v741 = vpop.f32.mrf.mxu0
        %v742 = vadd.f32 %v489, %v741
        %v743 = vpop.f32.mrf.mxu0
        %744 = vmatprep.mubr.bf16.mxu0 0
        %745 = vmatmul.mubr.bf16.gmra.mxu0 %v615
        %v746 = vpop.f32.mrf.mxu0
        %v747 = vadd.f32 %v489, %v746
        %v748 = vpop.f32.mrf.mxu0
        %v749 = vpop.f32.mrf.mxu0
        %v750 = vadd.f32 %v489, %v749
        %v751 = vpop.f32.mrf.mxu0
        %752 = vmatprep.mubr.bf16.mxu0 0
        %753 = vmatmul.mubr.bf16.gmra.mxu0 %v618
        %v754 = vpop.f32.mrf.mxu0
        %v755 = vadd.f32 %v489, %v754
        %v756 = vpop.f32.mrf.mxu0
        %v757 = vpop.f32.mrf.mxu0
        %v758 = vadd.f32 %v489, %v757
        %v759 = vpop.f32.mrf.mxu0
        %760 = vmatprep.mubr.bf16.mxu0 0
        %761 = vmatmul.mubr.bf16.gmra.mxu0 %v621
        %v762 = vpop.f32.mrf.mxu0
        %v763 = vadd.f32 %v489, %v762
        %v764 = vpop.f32.mrf.mxu0
        %v765 = vpop.f32.mrf.mxu0
        %v766 = vadd.f32 %v489, %v765
        %v767 = vpop.f32.mrf.mxu0
        %768 = vmatprep.mubr.bf16.mxu0 0
        %769 = vmatmul.mubr.bf16.gmra.mxu0 %v624
        %v770 = vpop.f32.mrf.mxu0
        %v771 = vadd.f32 %v489, %v770
        %v772 = vpop.f32.mrf.mxu0
        %v773 = vpop.f32.mrf.mxu0
        %v774 = vadd.f32 %v489, %v773
        %v775 = vpop.f32.mrf.mxu0
        %776 = vmatprep.mubr.bf16.mxu0 0
        %777 = vmatmul.mubr.bf16.gmra.mxu0 %v627
        %v778 = vpop.f32.mrf.mxu0
        %v779 = vadd.f32 %v489, %v778
        %v780 = vpop.f32.mrf.mxu0
        %v781 = vpop.f32.mrf.mxu0
        %v782 = vadd.f32 %v489, %v781
        %v783 = vpop.f32.mrf.mxu0
        %784 = vmatprep.mubr.bf16.mxu0 0
        %785 = vmatmul.mubr.bf16.gmra.mxu0 %v630
        %v786 = vpop.f32.mrf.mxu0
        %v787 = vadd.f32 %v489, %v786
        %v788 = vpop.f32.mrf.mxu0
        %v789 = vpop.f32.mrf.mxu0
        %v790 = vadd.f32 %v489, %v789
        %v791 = vpop.f32.mrf.mxu0
        %792 = vdwg.mxu0
        %v793 = vxor.u32 %v667, 2147483648
        %v794 = vxor.u32 %v670, 2147483648
        %v795 = vxor.u32 %v675, 2147483648
        %v796 = vxor.u32 %v678, 2147483648
        %v797 = vxor.u32 %v683, 2147483648
        %v798 = vxor.u32 %v686, 2147483648
        %v799 = vxor.u32 %v691, 2147483648
        %v800 = vxor.u32 %v694, 2147483648
        %v801 = vxor.u32 %v699, 2147483648
        %v802 = vxor.u32 %v702, 2147483648
        %v803 = vxor.u32 %v707, 2147483648
        %v804 = vxor.u32 %v710, 2147483648
        %v805 = vxor.u32 %v715, 2147483648
        %v806 = vxor.u32 %v718, 2147483648
        %v807 = vxor.u32 %v723, 2147483648
        %v808 = vxor.u32 %v726, 2147483648
        %v809 = vxor.u32 %v731, 2147483648
        %v810 = vxor.u32 %v734, 2147483648
        %v811 = vxor.u32 %v739, 2147483648
        %v812 = vxor.u32 %v742, 2147483648
        %v813 = vxor.u32 %v747, 2147483648
        %v814 = vxor.u32 %v750, 2147483648
        %v815 = vxor.u32 %v755, 2147483648
        %v816 = vxor.u32 %v758, 2147483648
        %v817 = vxor.u32 %v763, 2147483648
        %v818 = vxor.u32 %v766, 2147483648
        %v819 = vxor.u32 %v771, 2147483648
        %v820 = vxor.u32 %v774, 2147483648
        %v821 = vxor.u32 %v779, 2147483648
        %v822 = vxor.u32 %v782, 2147483648
        %v823 = vxor.u32 %v787, 2147483648
        %v824 = vxor.u32 %v790, 2147483648
        %v825 = vmul.f32 %v793, 1.442695
        %v826 = vpow.pop %v825
        %v827 = vmul.f32 %v794, 1.442695
        %v828 = vpow.pop %v827
        %v829 = vmul.f32 %v795, 1.442695
        %v830 = vpow.pop %v829
        %v831 = vmul.f32 %v796, 1.442695
        %v832 = vpow.pop %v831
        %v833 = vmul.f32 %v797, 1.442695
        %v834 = vpow.pop %v833
        %v835 = vmul.f32 %v798, 1.442695
        %v836 = vpow.pop %v835
        %v837 = vmul.f32 %v799, 1.442695
        %v838 = vpow.pop %v837
        %v839 = vmul.f32 %v800, 1.442695
        %v840 = vpow.pop %v839
        %v841 = vmul.f32 %v801, 1.442695
        %v842 = vpow.pop %v841
        %v843 = vmul.f32 %v802, 1.442695
        %v844 = vpow.pop %v843
        %v845 = vmul.f32 %v803, 1.442695
        %v846 = vpow.pop %v845
        %v847 = vmul.f32 %v804, 1.442695
        %v848 = vpow.pop %v847
        %v849 = vmul.f32 %v805, 1.442695
        %v850 = vpow.pop %v849
        %v851 = vmul.f32 %v806, 1.442695
        %v852 = vpow.pop %v851
        %v853 = vmul.f32 %v807, 1.442695
        %v854 = vpow.pop %v853
        %v855 = vmul.f32 %v808, 1.442695
        %v856 = vpow.pop %v855
        %v857 = vmul.f32 %v809, 1.442695
        %v858 = vpow.pop %v857
        %v859 = vmul.f32 %v810, 1.442695
        %v860 = vpow.pop %v859
        %v861 = vmul.f32 %v811, 1.442695
        %v862 = vpow.pop %v861
        %v863 = vmul.f32 %v812, 1.442695
        %v864 = vpow.pop %v863
        %v865 = vmul.f32 %v813, 1.442695
        %v866 = vpow.pop %v865
        %v867 = vmul.f32 %v814, 1.442695
        %v868 = vpow.pop %v867
        %v869 = vmul.f32 %v815, 1.442695
        %v870 = vpow.pop %v869
        %v871 = vmul.f32 %v816, 1.442695
        %v872 = vpow.pop %v871
        %v873 = vmul.f32 %v817, 1.442695
        %v874 = vpow.pop %v873
        %v875 = vmul.f32 %v818, 1.442695
        %v876 = vpow.pop %v875
        %v877 = vmul.f32 %v819, 1.442695
        %v878 = vpow.pop %v877
        %v879 = vmul.f32 %v820, 1.442695
        %v880 = vpow.pop %v879
        %v881 = vmul.f32 %v821, 1.442695
        %v882 = vpow.pop %v881
        %v883 = vmul.f32 %v822, 1.442695
        %v884 = vpow.pop %v883
        %v885 = vmul.f32 %v823, 1.442695
        %v886 = vpow.pop %v885
        %v887 = vmul.f32 %v824, 1.442695
        %v888 = vpow.pop %v887
        %v889 = vadd.f32 %v826, 1.0
        %v890 = vadd.f32 %v828, 1.0
        %v891 = vadd.f32 %v830, 1.0
        %v892 = vadd.f32 %v832, 1.0
        %v893 = vadd.f32 %v834, 1.0
        %v894 = vadd.f32 %v836, 1.0
        %v895 = vadd.f32 %v838, 1.0
        %v896 = vadd.f32 %v840, 1.0
        %v897 = vadd.f32 %v842, 1.0
        %v898 = vadd.f32 %v844, 1.0
        %v899 = vadd.f32 %v846, 1.0
        %v900 = vadd.f32 %v848, 1.0
        %v901 = vadd.f32 %v850, 1.0
        %v902 = vadd.f32 %v852, 1.0
        %v903 = vadd.f32 %v854, 1.0
        %v904 = vadd.f32 %v856, 1.0
        %v905 = vadd.f32 %v858, 1.0
        %v906 = vadd.f32 %v860, 1.0
        %v907 = vadd.f32 %v862, 1.0
        %v908 = vadd.f32 %v864, 1.0
        %v909 = vadd.f32 %v866, 1.0
        %v910 = vadd.f32 %v868, 1.0
        %v911 = vadd.f32 %v870, 1.0
        %v912 = vadd.f32 %v872, 1.0
        %v913 = vadd.f32 %v874, 1.0
        %v914 = vadd.f32 %v876, 1.0
        %v915 = vadd.f32 %v878, 1.0
        %v916 = vadd.f32 %v880, 1.0
        %v917 = vadd.f32 %v882, 1.0
        %v918 = vadd.f32 %v884, 1.0
        %v919 = vadd.f32 %v886, 1.0
        %v920 = vadd.f32 %v888, 1.0
        %v921 = vrcp.pop %v889
        %v922 = vmul.f32 1.0, %v921
        %v923 = vrcp.pop %v890
        %v924 = vmul.f32 1.0, %v923
        %v925 = vrcp.pop %v891
        %v926 = vmul.f32 1.0, %v925
        %v927 = vrcp.pop %v892
        %v928 = vmul.f32 1.0, %v927
        %v929 = vrcp.pop %v893
        %v930 = vmul.f32 1.0, %v929
        %v931 = vrcp.pop %v894
        %v932 = vmul.f32 1.0, %v931
        %v933 = vrcp.pop %v895
        %v934 = vmul.f32 1.0, %v933
        %v935 = vrcp.pop %v896
        %v936 = vmul.f32 1.0, %v935
        %v937 = vrcp.pop %v897
        %v938 = vmul.f32 1.0, %v937
        %v939 = vrcp.pop %v898
        %v940 = vmul.f32 1.0, %v939
        %v941 = vrcp.pop %v899
        %v942 = vmul.f32 1.0, %v941
        %v943 = vrcp.pop %v900
        %v944 = vmul.f32 1.0, %v943
        %v945 = vrcp.pop %v901
        %v946 = vmul.f32 1.0, %v945
        %v947 = vrcp.pop %v902
        %v948 = vmul.f32 1.0, %v947
        %v949 = vrcp.pop %v903
        %v950 = vmul.f32 1.0, %v949
        %v951 = vrcp.pop %v904
        %v952 = vmul.f32 1.0, %v951
        %v953 = vrcp.pop %v905
        %v954 = vmul.f32 1.0, %v953
        %v955 = vrcp.pop %v906
        %v956 = vmul.f32 1.0, %v955
        %v957 = vrcp.pop %v907
        %v958 = vmul.f32 1.0, %v957
        %v959 = vrcp.pop %v908
        %v960 = vmul.f32 1.0, %v959
        %v961 = vrcp.pop %v909
        %v962 = vmul.f32 1.0, %v961
        %v963 = vrcp.pop %v910
        %v964 = vmul.f32 1.0, %v963
        %v965 = vrcp.pop %v911
        %v966 = vmul.f32 1.0, %v965
        %v967 = vrcp.pop %v912
        %v968 = vmul.f32 1.0, %v967
        %v969 = vrcp.pop %v913
        %v970 = vmul.f32 1.0, %v969
        %v971 = vrcp.pop %v914
        %v972 = vmul.f32 1.0, %v971
        %v973 = vrcp.pop %v915
        %v974 = vmul.f32 1.0, %v973
        %v975 = vrcp.pop %v916
        %v976 = vmul.f32 1.0, %v975
        %v977 = vrcp.pop %v917
        %v978 = vmul.f32 1.0, %v977
        %v979 = vrcp.pop %v918
        %v980 = vmul.f32 1.0, %v979
        %v981 = vrcp.pop %v919
        %v982 = vmul.f32 1.0, %v981
        %v983 = vrcp.pop %v920
        %v984 = vmul.f32 1.0, %v983
        %v985 = vmul.f32 %v667, %v922
        %v986 = vmul.f32 %v670, %v924
        %v987 = vmul.f32 %v675, %v926
        %v988 = vmul.f32 %v678, %v928
        %v989 = vmul.f32 %v683, %v930
        %v990 = vmul.f32 %v686, %v932
        %v991 = vmul.f32 %v691, %v934
        %v992 = vmul.f32 %v694, %v936
        %v993 = vmul.f32 %v699, %v938
        %v994 = vmul.f32 %v702, %v940
        %v995 = vmul.f32 %v707, %v942
        %v996 = vmul.f32 %v710, %v944
        %v997 = vmul.f32 %v715, %v946
        %v998 = vmul.f32 %v718, %v948
        %v999 = vmul.f32 %v723, %v950
        %v1000 = vmul.f32 %v726, %v952
        %v1001 = vmul.f32 %v731, %v954
        %v1002 = vmul.f32 %v734, %v956
        %v1003 = vmul.f32 %v739, %v958
        %v1004 = vmul.f32 %v742, %v960
        %v1005 = vmul.f32 %v747, %v962
        %v1006 = vmul.f32 %v750, %v964
        %v1007 = vmul.f32 %v755, %v966
        %v1008 = vmul.f32 %v758, %v968
        %v1009 = vmul.f32 %v763, %v970
        %v1010 = vmul.f32 %v766, %v972
        %v1011 = vmul.f32 %v771, %v974
        %v1012 = vmul.f32 %v774, %v976
        %v1013 = vmul.f32 %v779, %v978
        %v1014 = vmul.f32 %v782, %v980
        %v1015 = vmul.f32 %v787, %v982
        %v1016 = vmul.f32 %v790, %v984
        %v1017 = vld [vmem:[#allocation2] sm:$0x1]
        %v1018 = vadd.f32 %v985, %v986
        %v1019 = vadd.f32 %v1018, %v987
        %v1020 = vadd.f32 %v1019, %v988
        %v1021 = vadd.f32 %v1020, %v989
        %v1022 = vadd.f32 %v1021, %v990
        %v1023 = vadd.f32 %v1022, %v991
        %v1024 = vadd.f32 %v1023, %v992
        %v1025 = vadd.f32 %v1024, %v993
        %v1026 = vadd.f32 %v1025, %v994
        %v1027 = vadd.f32 %v1026, %v995
        %v1028 = vadd.f32 %v1027, %v996
        %v1029 = vadd.f32 %v1028, %v997
        %v1030 = vadd.f32 %v1029, %v998
        %v1031 = vadd.f32 %v1030, %v999
        %v1032 = vadd.f32 %v1031, %v1000
        %v1033 = vadd.f32 %v1032, %v1001
        %v1034 = vadd.f32 %v1033, %v1002
        %v1035 = vadd.f32 %v1034, %v1003
        %v1036 = vadd.f32 %v1035, %v1004
        %v1037 = vadd.f32 %v1036, %v1005
        %v1038 = vadd.f32 %v1037, %v1006
        %v1039 = vadd.f32 %v1038, %v1007
        %v1040 = vadd.f32 %v1039, %v1008
        %v1041 = vadd.f32 %v1040, %v1009
        %v1042 = vadd.f32 %v1041, %v1010
        %v1043 = vadd.f32 %v1042, %v1011
        %v1044 = vadd.f32 %v1043, %v1012
        %v1045 = vadd.f32 %v1044, %v1013
        %v1046 = vadd.f32 %v1045, %v1014
        %v1047 = vadd.f32 %v1046, %v1015
        %v1048 = vadd.f32 %v1047, %v1016
        %v1049 = vrot.slane %v1048, 4
        %v1050 = vadd.f32 %v1048, %v1049
        %v1051 = vrot.slane %v1050, 2
        %v1052 = vadd.f32 %v1050, %v1051
        %v1053 = vrot.slane %v1052, 1
        %v1054 = vadd.f32 %v1052, %v1053
        %v1055 = vadd.f32 %v1017, %v1054
        %1056 = vst [vmem:[#allocation2] sm:$0x1] %v1055
        // Predicated region
        $region77: #{skin_cancer_classifier_forward.1} parent=63 // pred_check
          %p1057 = pneg %p443
        $region78: #{skin_cancer_classifier_forward.1} parent=63 // pred_check_branch
          %1059 = sbr.rel (%p1057) target = $region80
        $region79: #{skin_cancer_classifier_forward.1} parent=63 // pred_region
          %v1060 = vld [vmem:[#allocation2] sm:$0x1]
          %v1061 = vmul.f32 %v1060, 0.00390625
          %v1062 = vpack.c.bf16 %v1061, %v1061
          %v1063 = vld [vmem:[#allocation3] sm:$0xff]
          %v1064 = vld [vmem:[#allocation3 + $0x8] sm:$0xff]
          %v1065 = vld [vmem:[#allocation3 + $0x10] sm:$0xff]
          %v1066 = vld [vmem:[#allocation3 + $0x18] sm:$0xff]
          %v1067 = vld [vmem:[#allocation3 + $0x20] sm:$0xff]
          %v1068 = vld [vmem:[#allocation3 + $0x28] sm:$0xff]
          %v1069 = vld [vmem:[#allocation3 + $0x30] sm:$0xff]
          %v1070 = vld [vmem:[#allocation3 + $0x38] sm:$0xff]
          %v1071 = vld [vmem:[#allocation3 + $0x40] sm:$0xff]
          %v1072 = vld [vmem:[#allocation3 + $0x48] sm:$0xff]
          %v1073 = vld [vmem:[#allocation3 + $0x50] sm:$0xff]
          %v1074 = vld [vmem:[#allocation3 + $0x58] sm:$0xff]
          %v1075 = vld [vmem:[#allocation3 + $0x60] sm:$0xff]
          %v1076 = vld [vmem:[#allocation3 + $0x68] sm:$0xff]
          %v1077 = vld [vmem:[#allocation3 + $0x70] sm:$0xff]
          %v1078 = vld [vmem:[#allocation3 + $0x78] sm:$0xff]
          %v1079 = vld [vmem:[#allocation3 + $0x80] sm:$0xff]
          %v1080 = vld [vmem:[#allocation3 + $0x88] sm:$0xff]
          %v1081 = vld [vmem:[#allocation3 + $0x90] sm:$0xff]
          %v1082 = vld [vmem:[#allocation3 + $0x98] sm:$0xff]
          %v1083 = vld [vmem:[#allocation3 + $0xa0] sm:$0xff]
          %v1084 = vld [vmem:[#allocation3 + $0xa8] sm:$0xff]
          %v1085 = vld [vmem:[#allocation3 + $0xb0] sm:$0xff]
          %v1086 = vld [vmem:[#allocation3 + $0xb8] sm:$0xff]
          %v1087 = vld [vmem:[#allocation3 + $0xc0] sm:$0xff]
          %v1088 = vld [vmem:[#allocation3 + $0xc8] sm:$0xff]
          %v1089 = vld [vmem:[#allocation3 + $0xd0] sm:$0xff]
          %v1090 = vld [vmem:[#allocation3 + $0xd8] sm:$0xff]
          %v1091 = vld [vmem:[#allocation3 + $0xe0] sm:$0xff]
          %v1092 = vld [vmem:[#allocation3 + $0xe8] sm:$0xff]
          %v1093 = vld [vmem:[#allocation3 + $0xf0] sm:$0xff]
          %v1094 = vld [vmem:[#allocation3 + $0xf8] sm:$0xff]
          %v1095 = vld [vmem:[#allocation3 + $0x100] sm:$0xff]
          %v1096 = vld [vmem:[#allocation3 + $0x108] sm:$0xff]
          %v1097 = vld [vmem:[#allocation3 + $0x110] sm:$0xff]
          %v1098 = vld [vmem:[#allocation3 + $0x118] sm:$0xff]
          %v1099 = vld [vmem:[#allocation3 + $0x120] sm:$0xff]
          %v1100 = vld [vmem:[#allocation3 + $0x128] sm:$0xff]
          %v1101 = vld [vmem:[#allocation3 + $0x130] sm:$0xff]
          %v1102 = vld [vmem:[#allocation3 + $0x138] sm:$0xff]
          %v1103 = vld [vmem:[#allocation3 + $0x140] sm:$0xff]
          %v1104 = vld [vmem:[#allocation3 + $0x148] sm:$0xff]
          %v1105 = vld [vmem:[#allocation3 + $0x150] sm:$0xff]
          %v1106 = vld [vmem:[#allocation3 + $0x158] sm:$0xff]
          %v1107 = vld [vmem:[#allocation3 + $0x160] sm:$0xff]
          %v1108 = vld [vmem:[#allocation3 + $0x168] sm:$0xff]
          %v1109 = vld [vmem:[#allocation3 + $0x170] sm:$0xff]
          %v1110 = vld [vmem:[#allocation3 + $0x178] sm:$0xff]
          %v1111 = vld [vmem:[#allocation3 + $0x180] sm:$0xff]
          %v1112 = vld [vmem:[#allocation3 + $0x188] sm:$0xff]
          %v1113 = vld [vmem:[#allocation3 + $0x190] sm:$0xff]
          %v1114 = vld [vmem:[#allocation3 + $0x198] sm:$0xff]
          %v1115 = vld [vmem:[#allocation3 + $0x1a0] sm:$0xff]
          %v1116 = vld [vmem:[#allocation3 + $0x1a8] sm:$0xff]
          %v1117 = vld [vmem:[#allocation3 + $0x1b0] sm:$0xff]
          %v1118 = vld [vmem:[#allocation3 + $0x1b8] sm:$0xff]
          %v1119 = vld [vmem:[#allocation3 + $0x1c0] sm:$0xff]
          %v1120 = vld [vmem:[#allocation3 + $0x1c8] sm:$0xff]
          %v1121 = vld [vmem:[#allocation3 + $0x1d0] sm:$0xff]
          %v1122 = vld [vmem:[#allocation3 + $0x1d8] sm:$0xff]
          %v1123 = vld [vmem:[#allocation3 + $0x1e0] sm:$0xff]
          %v1124 = vld [vmem:[#allocation3 + $0x1e8] sm:$0xff]
          %v1125 = vld [vmem:[#allocation3 + $0x1f0] sm:$0xff]
          %v1126 = vld [vmem:[#allocation3 + $0x1f8] sm:$0xff]
          %v1127 = vld [vmem:[#allocation3 + $0x200] sm:$0xff]
          %v1128 = vld [vmem:[#allocation3 + $0x208] sm:$0xff]
          %v1129 = vld [vmem:[#allocation3 + $0x210] sm:$0xff]
          %v1130 = vld [vmem:[#allocation3 + $0x218] sm:$0xff]
          %v1131 = vld [vmem:[#allocation3 + $0x220] sm:$0xff]
          %v1132 = vld [vmem:[#allocation3 + $0x228] sm:$0xff]
          %v1133 = vld [vmem:[#allocation3 + $0x230] sm:$0xff]
          %v1134 = vld [vmem:[#allocation3 + $0x238] sm:$0xff]
          %v1135 = vld [vmem:[#allocation3 + $0x240] sm:$0xff]
          %v1136 = vld [vmem:[#allocation3 + $0x248] sm:$0xff]
          %v1137 = vld [vmem:[#allocation3 + $0x250] sm:$0xff]
          %v1138 = vld [vmem:[#allocation3 + $0x258] sm:$0xff]
          %v1139 = vld [vmem:[#allocation3 + $0x260] sm:$0xff]
          %v1140 = vld [vmem:[#allocation3 + $0x268] sm:$0xff]
          %v1141 = vld [vmem:[#allocation3 + $0x270] sm:$0xff]
          %v1142 = vld [vmem:[#allocation3 + $0x278] sm:$0xff]
          %v1143 = vld [vmem:[#allocation3 + $0x280] sm:$0xff]
          %v1144 = vld [vmem:[#allocation3 + $0x288] sm:$0xff]
          %v1145 = vld [vmem:[#allocation3 + $0x290] sm:$0xff]
          %v1146 = vld [vmem:[#allocation3 + $0x298] sm:$0xff]
          %v1147 = vld [vmem:[#allocation3 + $0x2a0] sm:$0xff]
          %v1148 = vld [vmem:[#allocation3 + $0x2a8] sm:$0xff]
          %v1149 = vld [vmem:[#allocation3 + $0x2b0] sm:$0xff]
          %v1150 = vld [vmem:[#allocation3 + $0x2b8] sm:$0xff]
          %v1151 = vld [vmem:[#allocation3 + $0x2c0] sm:$0xff]
          %v1152 = vld [vmem:[#allocation3 + $0x2c8] sm:$0xff]
          %v1153 = vld [vmem:[#allocation3 + $0x2d0] sm:$0xff]
          %v1154 = vld [vmem:[#allocation3 + $0x2d8] sm:$0xff]
          %v1155 = vld [vmem:[#allocation3 + $0x2e0] sm:$0xff]
          %v1156 = vld [vmem:[#allocation3 + $0x2e8] sm:$0xff]
          %v1157 = vld [vmem:[#allocation3 + $0x2f0] sm:$0xff]
          %v1158 = vld [vmem:[#allocation3 + $0x2f8] sm:$0xff]
          %v1159 = vld [vmem:[%s4] sm:$0xff]
          %v1160 = vld [vmem:[%s4 + $0x8] sm:$0xf]
          %v1257 = vunpack.c.l.b16 %v1063
          %v1258 = vunpack.c.h.b16 %v1063
          %v1259 = vunpack.c.l.b16 %v1064
          %v1260 = vunpack.c.h.b16 %v1064
          %v1261 = vunpack.c.l.b16 %v1065
          %v1262 = vunpack.c.h.b16 %v1065
          %v1263 = vunpack.c.l.b16 %v1066
          %v1264 = vunpack.c.h.b16 %v1066
          %v1265 = vunpack.c.l.b16 %v1067
          %v1266 = vunpack.c.h.b16 %v1067
          %v1267 = vunpack.c.l.b16 %v1068
          %v1268 = vunpack.c.h.b16 %v1068
          %v1269 = vunpack.c.l.b16 %v1069
          %v1270 = vunpack.c.h.b16 %v1069
          %v1271 = vunpack.c.l.b16 %v1070
          %v1272 = vunpack.c.h.b16 %v1070
          %v1273 = vunpack.c.l.b16 %v1071
          %v1274 = vunpack.c.h.b16 %v1071
          %v1275 = vunpack.c.l.b16 %v1072
          %v1276 = vunpack.c.h.b16 %v1072
          %v1277 = vunpack.c.l.b16 %v1073
          %v1278 = vunpack.c.h.b16 %v1073
          %v1279 = vunpack.c.l.b16 %v1074
          %v1280 = vunpack.c.h.b16 %v1074
          %v1281 = vunpack.c.l.b16 %v1075
          %v1282 = vunpack.c.h.b16 %v1075
          %v1283 = vunpack.c.l.b16 %v1076
          %v1284 = vunpack.c.h.b16 %v1076
          %v1285 = vunpack.c.l.b16 %v1077
          %v1286 = vunpack.c.h.b16 %v1077
          %v1287 = vunpack.c.l.b16 %v1078
          %v1288 = vunpack.c.h.b16 %v1078
          %v1289 = vunpack.c.l.b16 %v1079
          %v1290 = vunpack.c.h.b16 %v1079
          %v1291 = vunpack.c.l.b16 %v1080
          %v1292 = vunpack.c.h.b16 %v1080
          %v1293 = vunpack.c.l.b16 %v1081
          %v1294 = vunpack.c.h.b16 %v1081
          %v1295 = vunpack.c.l.b16 %v1082
          %v1296 = vunpack.c.h.b16 %v1082
          %v1297 = vunpack.c.l.b16 %v1083
          %v1298 = vunpack.c.h.b16 %v1083
          %v1299 = vunpack.c.l.b16 %v1084
          %v1300 = vunpack.c.h.b16 %v1084
          %v1301 = vunpack.c.l.b16 %v1085
          %v1302 = vunpack.c.h.b16 %v1085
          %v1303 = vunpack.c.l.b16 %v1086
          %v1304 = vunpack.c.h.b16 %v1086
          %v1305 = vunpack.c.l.b16 %v1087
          %v1306 = vunpack.c.h.b16 %v1087
          %v1307 = vunpack.c.l.b16 %v1088
          %v1308 = vunpack.c.h.b16 %v1088
          %v1309 = vunpack.c.l.b16 %v1089
          %v1310 = vunpack.c.h.b16 %v1089
          %v1311 = vunpack.c.l.b16 %v1090
          %v1312 = vunpack.c.h.b16 %v1090
          %v1313 = vunpack.c.l.b16 %v1091
          %v1314 = vunpack.c.h.b16 %v1091
          %v1315 = vunpack.c.l.b16 %v1092
          %v1316 = vunpack.c.h.b16 %v1092
          %v1317 = vunpack.c.l.b16 %v1093
          %v1318 = vunpack.c.h.b16 %v1093
          %v1319 = vunpack.c.l.b16 %v1094
          %v1320 = vunpack.c.h.b16 %v1094
          %v1321 = vunpack.c.l.b16 %v1095
          %v1322 = vunpack.c.h.b16 %v1095
          %v1323 = vunpack.c.l.b16 %v1096
          %v1324 = vunpack.c.h.b16 %v1096
          %v1325 = vunpack.c.l.b16 %v1097
          %v1326 = vunpack.c.h.b16 %v1097
          %v1327 = vunpack.c.l.b16 %v1098
          %v1328 = vunpack.c.h.b16 %v1098
          %v1329 = vunpack.c.l.b16 %v1099
          %v1330 = vunpack.c.h.b16 %v1099
          %v1331 = vunpack.c.l.b16 %v1100
          %v1332 = vunpack.c.h.b16 %v1100
          %v1333 = vunpack.c.l.b16 %v1101
          %v1334 = vunpack.c.h.b16 %v1101
          %v1335 = vunpack.c.l.b16 %v1102
          %v1336 = vunpack.c.h.b16 %v1102
          %v1337 = vunpack.c.l.b16 %v1103
          %v1338 = vunpack.c.h.b16 %v1103
          %v1339 = vunpack.c.l.b16 %v1104
          %v1340 = vunpack.c.h.b16 %v1104
          %v1341 = vunpack.c.l.b16 %v1105
          %v1342 = vunpack.c.h.b16 %v1105
          %v1343 = vunpack.c.l.b16 %v1106
          %v1344 = vunpack.c.h.b16 %v1106
          %v1345 = vunpack.c.l.b16 %v1107
          %v1346 = vunpack.c.h.b16 %v1107
          %v1347 = vunpack.c.l.b16 %v1108
          %v1348 = vunpack.c.h.b16 %v1108
          %v1349 = vunpack.c.l.b16 %v1109
          %v1350 = vunpack.c.h.b16 %v1109
          %v1351 = vunpack.c.l.b16 %v1110
          %v1352 = vunpack.c.h.b16 %v1110
          %v1353 = vunpack.c.l.b16 %v1111
          %v1354 = vunpack.c.h.b16 %v1111
          %v1355 = vunpack.c.l.b16 %v1112
          %v1356 = vunpack.c.h.b16 %v1112
          %v1357 = vunpack.c.l.b16 %v1113
          %v1358 = vunpack.c.h.b16 %v1113
          %v1359 = vunpack.c.l.b16 %v1114
          %v1360 = vunpack.c.h.b16 %v1114
          %v1361 = vunpack.c.l.b16 %v1115
          %v1362 = vunpack.c.h.b16 %v1115
          %v1363 = vunpack.c.l.b16 %v1116
          %v1364 = vunpack.c.h.b16 %v1116
          %v1365 = vunpack.c.l.b16 %v1117
          %v1366 = vunpack.c.h.b16 %v1117
          %v1367 = vunpack.c.l.b16 %v1118
          %v1368 = vunpack.c.h.b16 %v1118
          %v1369 = vunpack.c.l.b16 %v1119
          %v1370 = vunpack.c.h.b16 %v1119
          %v1371 = vunpack.c.l.b16 %v1120
          %v1372 = vunpack.c.h.b16 %v1120
          %v1373 = vunpack.c.l.b16 %v1121
          %v1374 = vunpack.c.h.b16 %v1121
          %v1375 = vunpack.c.l.b16 %v1122
          %v1376 = vunpack.c.h.b16 %v1122
          %v1377 = vunpack.c.l.b16 %v1123
          %v1378 = vunpack.c.h.b16 %v1123
          %v1379 = vunpack.c.l.b16 %v1124
          %v1380 = vunpack.c.h.b16 %v1124
          %v1381 = vunpack.c.l.b16 %v1125
          %v1382 = vunpack.c.h.b16 %v1125
          %v1383 = vunpack.c.l.b16 %v1126
          %v1384 = vunpack.c.h.b16 %v1126
          %v1385 = vunpack.c.l.b16 %v1127
          %v1386 = vunpack.c.h.b16 %v1127
          %v1387 = vunpack.c.l.b16 %v1128
          %v1388 = vunpack.c.h.b16 %v1128
          %v1389 = vunpack.c.l.b16 %v1129
          %v1390 = vunpack.c.h.b16 %v1129
          %v1391 = vunpack.c.l.b16 %v1130
          %v1392 = vunpack.c.h.b16 %v1130
          %v1393 = vunpack.c.l.b16 %v1131
          %v1394 = vunpack.c.h.b16 %v1131
          %v1395 = vunpack.c.l.b16 %v1132
          %v1396 = vunpack.c.h.b16 %v1132
          %v1397 = vunpack.c.l.b16 %v1133
          %v1398 = vunpack.c.h.b16 %v1133
          %v1399 = vunpack.c.l.b16 %v1134
          %v1400 = vunpack.c.h.b16 %v1134
          %v1401 = vunpack.c.l.b16 %v1135
          %v1402 = vunpack.c.h.b16 %v1135
          %v1403 = vunpack.c.l.b16 %v1136
          %v1404 = vunpack.c.h.b16 %v1136
          %v1405 = vunpack.c.l.b16 %v1137
          %v1406 = vunpack.c.h.b16 %v1137
          %v1407 = vunpack.c.l.b16 %v1138
          %v1408 = vunpack.c.h.b16 %v1138
          %v1409 = vunpack.c.l.b16 %v1139
          %v1410 = vunpack.c.h.b16 %v1139
          %v1411 = vunpack.c.l.b16 %v1140
          %v1412 = vunpack.c.h.b16 %v1140
          %v1413 = vunpack.c.l.b16 %v1141
          %v1414 = vunpack.c.h.b16 %v1141
          %v1415 = vunpack.c.l.b16 %v1142
          %v1416 = vunpack.c.h.b16 %v1142
          %v1417 = vunpack.c.l.b16 %v1143
          %v1418 = vunpack.c.h.b16 %v1143
          %v1419 = vunpack.c.l.b16 %v1144
          %v1420 = vunpack.c.h.b16 %v1144
          %v1421 = vunpack.c.l.b16 %v1145
          %v1422 = vunpack.c.h.b16 %v1145
          %v1423 = vunpack.c.l.b16 %v1146
          %v1424 = vunpack.c.h.b16 %v1146
          %v1425 = vunpack.c.l.b16 %v1147
          %v1426 = vunpack.c.h.b16 %v1147
          %v1427 = vunpack.c.l.b16 %v1148
          %v1428 = vunpack.c.h.b16 %v1148
          %v1429 = vunpack.c.l.b16 %v1149
          %v1430 = vunpack.c.h.b16 %v1149
          %v1431 = vunpack.c.l.b16 %v1150
          %v1432 = vunpack.c.h.b16 %v1150
          %v1433 = vunpack.c.l.b16 %v1151
          %v1434 = vunpack.c.h.b16 %v1151
          %v1435 = vunpack.c.l.b16 %v1152
          %v1436 = vunpack.c.h.b16 %v1152
          %v1437 = vunpack.c.l.b16 %v1153
          %v1438 = vunpack.c.h.b16 %v1153
          %v1439 = vunpack.c.l.b16 %v1154
          %v1440 = vunpack.c.h.b16 %v1154
          %v1441 = vunpack.c.l.b16 %v1155
          %v1442 = vunpack.c.h.b16 %v1155
          %v1443 = vunpack.c.l.b16 %v1156
          %v1444 = vunpack.c.h.b16 %v1156
          %v1445 = vunpack.c.l.b16 %v1157
          %v1446 = vunpack.c.h.b16 %v1157
          %v1447 = vunpack.c.l.b16 %v1158
          %v1448 = vunpack.c.h.b16 %v1158
          %v1449 = vpack.c.b16 %v1269, %v1257
          %v1450 = vpack.c.b16 %v1270, %v1258
          %v1451 = vpack.c.b16 %v1271, %v1259
          %v1452 = vpack.c.b16 %v1272, %v1260
          %v1453 = vpack.c.b16 %v1273, %v1261
          %v1454 = vpack.c.b16 %v1274, %v1262
          %v1455 = vpack.c.b16 %v1275, %v1263
          %v1456 = vpack.c.b16 %v1276, %v1264
          %v1457 = vpack.c.b16 %v1277, %v1265
          %v1458 = vpack.c.b16 %v1278, %v1266
          %v1459 = vpack.c.b16 %v1279, %v1267
          %v1460 = vpack.c.b16 %v1280, %v1268
          %v1461 = vpack.c.b16 %v1293, %v1281
          %v1462 = vpack.c.b16 %v1294, %v1282
          %v1463 = vpack.c.b16 %v1295, %v1283
          %v1464 = vpack.c.b16 %v1296, %v1284
          %v1465 = vpack.c.b16 %v1297, %v1285
          %v1466 = vpack.c.b16 %v1298, %v1286
          %v1467 = vpack.c.b16 %v1299, %v1287
          %v1468 = vpack.c.b16 %v1300, %v1288
          %v1469 = vpack.c.b16 %v1301, %v1289
          %v1470 = vpack.c.b16 %v1302, %v1290
          %v1471 = vpack.c.b16 %v1303, %v1291
          %v1472 = vpack.c.b16 %v1304, %v1292
          %v1473 = vpack.c.b16 %v1317, %v1305
          %v1474 = vpack.c.b16 %v1318, %v1306
          %v1475 = vpack.c.b16 %v1319, %v1307
          %v1476 = vpack.c.b16 %v1320, %v1308
          %v1477 = vpack.c.b16 %v1321, %v1309
          %v1478 = vpack.c.b16 %v1322, %v1310
          %v1479 = vpack.c.b16 %v1323, %v1311
          %v1480 = vpack.c.b16 %v1324, %v1312
          %v1481 = vpack.c.b16 %v1325, %v1313
          %v1482 = vpack.c.b16 %v1326, %v1314
          %v1483 = vpack.c.b16 %v1327, %v1315
          %v1484 = vpack.c.b16 %v1328, %v1316
          %v1485 = vpack.c.b16 %v1341, %v1329
          %v1486 = vpack.c.b16 %v1342, %v1330
          %v1487 = vpack.c.b16 %v1343, %v1331
          %v1488 = vpack.c.b16 %v1344, %v1332
          %v1489 = vpack.c.b16 %v1345, %v1333
          %v1490 = vpack.c.b16 %v1346, %v1334
          %v1491 = vpack.c.b16 %v1347, %v1335
          %v1492 = vpack.c.b16 %v1348, %v1336
          %v1493 = vpack.c.b16 %v1349, %v1337
          %v1494 = vpack.c.b16 %v1350, %v1338
          %v1495 = vpack.c.b16 %v1351, %v1339
          %v1496 = vpack.c.b16 %v1352, %v1340
          %v1497 = vpack.c.b16 %v1365, %v1353
          %v1498 = vpack.c.b16 %v1366, %v1354
          %v1499 = vpack.c.b16 %v1367, %v1355
          %v1500 = vpack.c.b16 %v1368, %v1356
          %v1501 = vpack.c.b16 %v1369, %v1357
          %v1502 = vpack.c.b16 %v1370, %v1358
          %v1503 = vpack.c.b16 %v1371, %v1359
          %v1504 = vpack.c.b16 %v1372, %v1360
          %v1505 = vpack.c.b16 %v1373, %v1361
          %v1506 = vpack.c.b16 %v1374, %v1362
          %v1507 = vpack.c.b16 %v1375, %v1363
          %v1508 = vpack.c.b16 %v1376, %v1364
          %v1509 = vpack.c.b16 %v1389, %v1377
          %v1510 = vpack.c.b16 %v1390, %v1378
          %v1511 = vpack.c.b16 %v1391, %v1379
          %v1512 = vpack.c.b16 %v1392, %v1380
          %v1513 = vpack.c.b16 %v1393, %v1381
          %v1514 = vpack.c.b16 %v1394, %v1382
          %v1515 = vpack.c.b16 %v1395, %v1383
          %v1516 = vpack.c.b16 %v1396, %v1384
          %v1517 = vpack.c.b16 %v1397, %v1385
          %v1518 = vpack.c.b16 %v1398, %v1386
          %v1519 = vpack.c.b16 %v1399, %v1387
          %v1520 = vpack.c.b16 %v1400, %v1388
          %v1521 = vpack.c.b16 %v1413, %v1401
          %v1522 = vpack.c.b16 %v1414, %v1402
          %v1523 = vpack.c.b16 %v1415, %v1403
          %v1524 = vpack.c.b16 %v1416, %v1404
          %v1525 = vpack.c.b16 %v1417, %v1405
          %v1526 = vpack.c.b16 %v1418, %v1406
          %v1527 = vpack.c.b16 %v1419, %v1407
          %v1528 = vpack.c.b16 %v1420, %v1408
          %v1529 = vpack.c.b16 %v1421, %v1409
          %v1530 = vpack.c.b16 %v1422, %v1410
          %v1531 = vpack.c.b16 %v1423, %v1411
          %v1532 = vpack.c.b16 %v1424, %v1412
          %v1533 = vpack.c.b16 %v1437, %v1425
          %v1534 = vpack.c.b16 %v1438, %v1426
          %v1535 = vpack.c.b16 %v1439, %v1427
          %v1536 = vpack.c.b16 %v1440, %v1428
          %v1537 = vpack.c.b16 %v1441, %v1429
          %v1538 = vpack.c.b16 %v1442, %v1430
          %v1539 = vpack.c.b16 %v1443, %v1431
          %v1540 = vpack.c.b16 %v1444, %v1432
          %v1541 = vpack.c.b16 %v1445, %v1433
          %v1542 = vpack.c.b16 %v1446, %v1434
          %v1543 = vpack.c.b16 %v1447, %v1435
          %v1544 = vpack.c.b16 %v1448, %v1436
          %v1643 = vlaneseq
          %v1644 = vshrl.u32 %v1643, 7
          %v1645 = vsub.s32 0, %v1644
          %v1646 = vrot.slane %v1159, %v1645
          %v1647 = vlaneseq
          %v1648 = vshrl.u32 %v1647, 7
          %v1649 = vsub.s32 1, %v1648
          %v1650 = vrot.slane %v1159, %v1649
          %v1651 = vlaneseq
          %v1652 = vshrl.u32 %v1651, 7
          %v1653 = vsub.s32 2, %v1652
          %v1654 = vrot.slane %v1159, %v1653
          %v1655 = vlaneseq
          %v1656 = vshrl.u32 %v1655, 7
          %v1657 = vsub.s32 3, %v1656
          %v1658 = vrot.slane %v1159, %v1657
          %v1659 = vlaneseq
          %v1660 = vshrl.u32 %v1659, 7
          %v1661 = vsub.s32 4, %v1660
          %v1662 = vrot.slane %v1159, %v1661
          %v1663 = vlaneseq
          %v1664 = vshrl.u32 %v1663, 7
          %v1665 = vsub.s32 5, %v1664
          %v1666 = vrot.slane %v1159, %v1665
          %v1667 = vlaneseq
          %v1668 = vshrl.u32 %v1667, 7
          %v1669 = vsub.s32 6, %v1668
          %v1670 = vrot.slane %v1159, %v1669
          %v1671 = vlaneseq
          %v1672 = vshrl.u32 %v1671, 7
          %v1673 = vsub.s32 7, %v1672
          %v1674 = vrot.slane %v1159, %v1673
          %v1675 = vlaneseq
          %v1676 = vshrl.u32 %v1675, 7
          %v1677 = vsub.s32 0, %v1676
          %v1678 = vrot.slane %v1160, %v1677
          %v1679 = vlaneseq
          %v1680 = vshrl.u32 %v1679, 7
          %v1681 = vsub.s32 1, %v1680
          %v1682 = vrot.slane %v1160, %v1681
          %v1683 = vlaneseq
          %v1684 = vshrl.u32 %v1683, 7
          %v1685 = vsub.s32 2, %v1684
          %v1686 = vrot.slane %v1160, %v1685
          %v1687 = vlaneseq
          %v1688 = vshrl.u32 %v1687, 7
          %v1689 = vsub.s32 3, %v1688
          %v1690 = vrot.slane %v1160, %v1689
          %1703 = vmatprep.subr.bf16.mxu0 %v1534
          %1704 = vmatpush1.bf16.msra.mxu0 %v1533
          %1705 = vmatprep.subr.bf16.mxu0 %v1522
          %1706 = vmatpush1.bf16.msra.mxu0 %v1521
          %1707 = vmatprep.subr.bf16.mxu0 %v1510
          %1708 = vmatpush1.bf16.msra.mxu0 %v1509
          %1709 = vmatprep.subr.bf16.mxu0 %v1498
          %1710 = vmatpush1.bf16.msra.mxu0 %v1497
          %1711 = vmatprep.subr.bf16.mxu0 %v1486
          %1712 = vmatpush1.bf16.msra.mxu0 %v1485
          %1713 = vmatprep.subr.bf16.mxu0 %v1474
          %1714 = vmatpush1.bf16.msra.mxu0 %v1473
          %1715 = vmatprep.subr.bf16.mxu0 %v1462
          %1716 = vmatpush1.bf16.msra.mxu0 %v1461
          %1717 = vmatprep.subr.bf16.mxu0 %v1450
          %1718 = vmatpush1.bf16.msra.mxu0 %v1449
          %1719 = vmatprep.subr.bf16.mxu0 0
          %1720 = vmatpush2.bf16.msra.mxu0 0
          %1721 = vmatprep.subr.bf16.mxu0 0
          %1722 = vmatpush2.bf16.msra.mxu0 0
          %1723 = vmatprep.subr.bf16.mxu0 0
          %1724 = vmatpush2.bf16.msra.mxu0 0
          %1725 = vmatprep.subr.bf16.mxu0 0
          %1726 = vmatpush2.bf16.msra.mxu0 0
          %1727 = vmatprep.subr.bf16.mxu0 0
          %1728 = vmatpush2.bf16.msra.mxu0 0
          %1729 = vmatprep.subr.bf16.mxu0 0
          %1730 = vmatpush2.bf16.msra.mxu0 0
          %1731 = vmatprep.subr.bf16.mxu0 0
          %1732 = vmatpush2.bf16.msra.mxu0 0
          %1733 = vmatprep.subr.bf16.mxu0 0
          %1734 = vmatpush2.bf16.msra.mxu0 0
          %1735 = vmatprep.mubr.bf16.mxu0 0
          %1736 = vmatmul.mubr.bf16.gmra.mxu0 %v1062
          %v1737 = vpop.f32.mrf.mxu0
          %v1738 = vadd.f32 %v1646, %v1737
          %v1739 = vpop.f32.mrf.mxu0
          %v1740 = vadd.f32 %v1650, %v1739
          %v1741 = vpop.f32.mrf.mxu0
          %v1742 = vpop.f32.mrf.mxu0
          %1743 = vdwg.mxu0
          %1744 = vmatprep.subr.bf16.mxu0 %v1536
          %1745 = vmatpush1.bf16.msra.mxu0 %v1535
          %1746 = vmatprep.subr.bf16.mxu0 %v1524
          %1747 = vmatpush1.bf16.msra.mxu0 %v1523
          %1748 = vmatprep.subr.bf16.mxu0 %v1512
          %1749 = vmatpush1.bf16.msra.mxu0 %v1511
          %1750 = vmatprep.subr.bf16.mxu0 %v1500
          %1751 = vmatpush1.bf16.msra.mxu0 %v1499
          %1752 = vmatprep.subr.bf16.mxu0 %v1488
          %1753 = vmatpush1.bf16.msra.mxu0 %v1487
          %1754 = vmatprep.subr.bf16.mxu0 %v1476
          %1755 = vmatpush1.bf16.msra.mxu0 %v1475
          %1756 = vmatprep.subr.bf16.mxu0 %v1464
          %1757 = vmatpush1.bf16.msra.mxu0 %v1463
          %1758 = vmatprep.subr.bf16.mxu0 %v1452
          %1759 = vmatpush1.bf16.msra.mxu0 %v1451
          %1760 = vmatprep.subr.bf16.mxu0 0
          %1761 = vmatpush2.bf16.msra.mxu0 0
          %1762 = vmatprep.subr.bf16.mxu0 0
          %1763 = vmatpush2.bf16.msra.mxu0 0
          %1764 = vmatprep.subr.bf16.mxu0 0
          %1765 = vmatpush2.bf16.msra.mxu0 0
          %1766 = vmatprep.subr.bf16.mxu0 0
          %1767 = vmatpush2.bf16.msra.mxu0 0
          %1768 = vmatprep.subr.bf16.mxu0 0
          %1769 = vmatpush2.bf16.msra.mxu0 0
          %1770 = vmatprep.subr.bf16.mxu0 0
          %1771 = vmatpush2.bf16.msra.mxu0 0
          %1772 = vmatprep.subr.bf16.mxu0 0
          %1773 = vmatpush2.bf16.msra.mxu0 0
          %1774 = vmatprep.subr.bf16.mxu0 0
          %1775 = vmatpush2.bf16.msra.mxu0 0
          %1776 = vmatprep.mubr.bf16.mxu0 0
          %1777 = vmatmul.mubr.bf16.gmra.mxu0 %v1062
          %v1778 = vpop.f32.mrf.mxu0
          %v1779 = vadd.f32 %v1654, %v1778
          %v1780 = vpop.f32.mrf.mxu0
          %v1781 = vadd.f32 %v1658, %v1780
          %v1782 = vpop.f32.mrf.mxu0
          %v1783 = vpop.f32.mrf.mxu0
          %1784 = vdwg.mxu0
          %1785 = vmatprep.subr.bf16.mxu0 %v1538
          %1786 = vmatpush1.bf16.msra.mxu0 %v1537
          %1787 = vmatprep.subr.bf16.mxu0 %v1526
          %1788 = vmatpush1.bf16.msra.mxu0 %v1525
          %1789 = vmatprep.subr.bf16.mxu0 %v1514
          %1790 = vmatpush1.bf16.msra.mxu0 %v1513
          %1791 = vmatprep.subr.bf16.mxu0 %v1502
          %1792 = vmatpush1.bf16.msra.mxu0 %v1501
          %1793 = vmatprep.subr.bf16.mxu0 %v1490
          %1794 = vmatpush1.bf16.msra.mxu0 %v1489
          %1795 = vmatprep.subr.bf16.mxu0 %v1478
          %1796 = vmatpush1.bf16.msra.mxu0 %v1477
          %1797 = vmatprep.subr.bf16.mxu0 %v1466
          %1798 = vmatpush1.bf16.msra.mxu0 %v1465
          %1799 = vmatprep.subr.bf16.mxu0 %v1454
          %1800 = vmatpush1.bf16.msra.mxu0 %v1453
          %1801 = vmatprep.subr.bf16.mxu0 0
          %1802 = vmatpush2.bf16.msra.mxu0 0
          %1803 = vmatprep.subr.bf16.mxu0 0
          %1804 = vmatpush2.bf16.msra.mxu0 0
          %1805 = vmatprep.subr.bf16.mxu0 0
          %1806 = vmatpush2.bf16.msra.mxu0 0
          %1807 = vmatprep.subr.bf16.mxu0 0
          %1808 = vmatpush2.bf16.msra.mxu0 0
          %1809 = vmatprep.subr.bf16.mxu0 0
          %1810 = vmatpush2.bf16.msra.mxu0 0
          %1811 = vmatprep.subr.bf16.mxu0 0
          %1812 = vmatpush2.bf16.msra.mxu0 0
          %1813 = vmatprep.subr.bf16.mxu0 0
          %1814 = vmatpush2.bf16.msra.mxu0 0
          %1815 = vmatprep.subr.bf16.mxu0 0
          %1816 = vmatpush2.bf16.msra.mxu0 0
          %1817 = vmatprep.mubr.bf16.mxu0 0
          %1818 = vmatmul.mubr.bf16.gmra.mxu0 %v1062
          %v1819 = vpop.f32.mrf.mxu0
          %v1820 = vadd.f32 %v1662, %v1819
          %v1821 = vpop.f32.mrf.mxu0
          %v1822 = vadd.f32 %v1666, %v1821
          %v1823 = vpop.f32.mrf.mxu0
          %v1824 = vpop.f32.mrf.mxu0
          %1825 = vdwg.mxu0
          %1826 = vmatprep.subr.bf16.mxu0 %v1540
          %1827 = vmatpush1.bf16.msra.mxu0 %v1539
          %1828 = vmatprep.subr.bf16.mxu0 %v1528
          %1829 = vmatpush1.bf16.msra.mxu0 %v1527
          %1830 = vmatprep.subr.bf16.mxu0 %v1516
          %1831 = vmatpush1.bf16.msra.mxu0 %v1515
          %1832 = vmatprep.subr.bf16.mxu0 %v1504
          %1833 = vmatpush1.bf16.msra.mxu0 %v1503
          %1834 = vmatprep.subr.bf16.mxu0 %v1492
          %1835 = vmatpush1.bf16.msra.mxu0 %v1491
          %1836 = vmatprep.subr.bf16.mxu0 %v1480
          %1837 = vmatpush1.bf16.msra.mxu0 %v1479
          %1838 = vmatprep.subr.bf16.mxu0 %v1468
          %1839 = vmatpush1.bf16.msra.mxu0 %v1467
          %1840 = vmatprep.subr.bf16.mxu0 %v1456
          %1841 = vmatpush1.bf16.msra.mxu0 %v1455
          %1842 = vmatprep.subr.bf16.mxu0 0
          %1843 = vmatpush2.bf16.msra.mxu0 0
          %1844 = vmatprep.subr.bf16.mxu0 0
          %1845 = vmatpush2.bf16.msra.mxu0 0
          %1846 = vmatprep.subr.bf16.mxu0 0
          %1847 = vmatpush2.bf16.msra.mxu0 0
          %1848 = vmatprep.subr.bf16.mxu0 0
          %1849 = vmatpush2.bf16.msra.mxu0 0
          %1850 = vmatprep.subr.bf16.mxu0 0
          %1851 = vmatpush2.bf16.msra.mxu0 0
          %1852 = vmatprep.subr.bf16.mxu0 0
          %1853 = vmatpush2.bf16.msra.mxu0 0
          %1854 = vmatprep.subr.bf16.mxu0 0
          %1855 = vmatpush2.bf16.msra.mxu0 0
          %1856 = vmatprep.subr.bf16.mxu0 0
          %1857 = vmatpush2.bf16.msra.mxu0 0
          %1858 = vmatprep.mubr.bf16.mxu0 0
          %1859 = vmatmul.mubr.bf16.gmra.mxu0 %v1062
          %v1860 = vpop.f32.mrf.mxu0
          %v1861 = vadd.f32 %v1670, %v1860
          %v1862 = vpop.f32.mrf.mxu0
          %v1863 = vadd.f32 %v1674, %v1862
          %v1864 = vpop.f32.mrf.mxu0
          %v1865 = vpop.f32.mrf.mxu0
          %1866 = vdwg.mxu0
          %1867 = vmatprep.subr.bf16.mxu0 %v1542
          %1868 = vmatpush1.bf16.msra.mxu0 %v1541
          %1869 = vmatprep.subr.bf16.mxu0 %v1530
          %1870 = vmatpush1.bf16.msra.mxu0 %v1529
          %1871 = vmatprep.subr.bf16.mxu0 %v1518
          %1872 = vmatpush1.bf16.msra.mxu0 %v1517
          %1873 = vmatprep.subr.bf16.mxu0 %v1506
          %1874 = vmatpush1.bf16.msra.mxu0 %v1505
          %1875 = vmatprep.subr.bf16.mxu0 %v1494
          %1876 = vmatpush1.bf16.msra.mxu0 %v1493
          %1877 = vmatprep.subr.bf16.mxu0 %v1482
          %1878 = vmatpush1.bf16.msra.mxu0 %v1481
          %1879 = vmatprep.subr.bf16.mxu0 %v1470
          %1880 = vmatpush1.bf16.msra.mxu0 %v1469
          %1881 = vmatprep.subr.bf16.mxu0 %v1458
          %1882 = vmatpush1.bf16.msra.mxu0 %v1457
          %1883 = vmatprep.subr.bf16.mxu0 0
          %1884 = vmatpush2.bf16.msra.mxu0 0
          %1885 = vmatprep.subr.bf16.mxu0 0
          %1886 = vmatpush2.bf16.msra.mxu0 0
          %1887 = vmatprep.subr.bf16.mxu0 0
          %1888 = vmatpush2.bf16.msra.mxu0 0
          %1889 = vmatprep.subr.bf16.mxu0 0
          %1890 = vmatpush2.bf16.msra.mxu0 0
          %1891 = vmatprep.subr.bf16.mxu0 0
          %1892 = vmatpush2.bf16.msra.mxu0 0
          %1893 = vmatprep.subr.bf16.mxu0 0
          %1894 = vmatpush2.bf16.msra.mxu0 0
          %1895 = vmatprep.subr.bf16.mxu0 0
          %1896 = vmatpush2.bf16.msra.mxu0 0
          %1897 = vmatprep.subr.bf16.mxu0 0
          %1898 = vmatpush2.bf16.msra.mxu0 0
          %1899 = vmatprep.mubr.bf16.mxu0 0
          %1900 = vmatmul.mubr.bf16.gmra.mxu0 %v1062
          %v1901 = vpop.f32.mrf.mxu0
          %v1902 = vadd.f32 %v1678, %v1901
          %v1903 = vpop.f32.mrf.mxu0
          %v1904 = vadd.f32 %v1682, %v1903
          %v1905 = vpop.f32.mrf.mxu0
          %v1906 = vpop.f32.mrf.mxu0
          %1907 = vdwg.mxu0
          %1908 = vmatprep.subr.bf16.mxu0 %v1544
          %1909 = vmatpush1.bf16.msra.mxu0 %v1543
          %1910 = vmatprep.subr.bf16.mxu0 %v1532
          %1911 = vmatpush1.bf16.msra.mxu0 %v1531
          %1912 = vmatprep.subr.bf16.mxu0 %v1520
          %1913 = vmatpush1.bf16.msra.mxu0 %v1519
          %1914 = vmatprep.subr.bf16.mxu0 %v1508
          %1915 = vmatpush1.bf16.msra.mxu0 %v1507
          %1916 = vmatprep.subr.bf16.mxu0 %v1496
          %1917 = vmatpush1.bf16.msra.mxu0 %v1495
          %1918 = vmatprep.subr.bf16.mxu0 %v1484
          %1919 = vmatpush1.bf16.msra.mxu0 %v1483
          %1920 = vmatprep.subr.bf16.mxu0 %v1472
          %1921 = vmatpush1.bf16.msra.mxu0 %v1471
          %1922 = vmatprep.subr.bf16.mxu0 %v1460
          %1923 = vmatpush1.bf16.msra.mxu0 %v1459
          %1924 = vmatprep.subr.bf16.mxu0 0
          %1925 = vmatpush2.bf16.msra.mxu0 0
          %1926 = vmatprep.subr.bf16.mxu0 0
          %1927 = vmatpush2.bf16.msra.mxu0 0
          %1928 = vmatprep.subr.bf16.mxu0 0
          %1929 = vmatpush2.bf16.msra.mxu0 0
          %1930 = vmatprep.subr.bf16.mxu0 0
          %1931 = vmatpush2.bf16.msra.mxu0 0
          %1932 = vmatprep.subr.bf16.mxu0 0
          %1933 = vmatpush2.bf16.msra.mxu0 0
          %1934 = vmatprep.subr.bf16.mxu0 0
          %1935 = vmatpush2.bf16.msra.mxu0 0
          %1936 = vmatprep.subr.bf16.mxu0 0
          %1937 = vmatpush2.bf16.msra.mxu0 0
          %1938 = vmatprep.subr.bf16.mxu0 0
          %1939 = vmatpush2.bf16.msra.mxu0 0
          %1940 = vmatprep.mubr.bf16.mxu0 0
          %1941 = vmatmul.mubr.bf16.gmra.mxu0 %v1062
          %v1942 = vpop.f32.mrf.mxu0
          %v1943 = vadd.f32 %v1686, %v1942
          %v1944 = vpop.f32.mrf.mxu0
          %v1945 = vadd.f32 %v1690, %v1944
          %v1946 = vpop.f32.mrf.mxu0
          %v1947 = vpop.f32.mrf.mxu0
          %1948 = vdwg.mxu0
          %v1949 = vxor.u32 %v1738, 2147483648
          %v1950 = vxor.u32 %v1740, 2147483648
          %v1951 = vxor.u32 %v1779, 2147483648
          %v1952 = vxor.u32 %v1781, 2147483648
          %v1953 = vxor.u32 %v1820, 2147483648
          %v1954 = vxor.u32 %v1822, 2147483648
          %v1955 = vxor.u32 %v1861, 2147483648
          %v1956 = vxor.u32 %v1863, 2147483648
          %v1957 = vxor.u32 %v1902, 2147483648
          %v1958 = vxor.u32 %v1904, 2147483648
          %v1959 = vxor.u32 %v1943, 2147483648
          %v1960 = vxor.u32 %v1945, 2147483648
          %v1961 = vmul.f32 %v1949, 1.442695
          %v1962 = vpow.pop %v1961
          %v1963 = vmul.f32 %v1950, 1.442695
          %v1964 = vpow.pop %v1963
          %v1965 = vmul.f32 %v1951, 1.442695
          %v1966 = vpow.pop %v1965
          %v1967 = vmul.f32 %v1952, 1.442695
          %v1968 = vpow.pop %v1967
          %v1969 = vmul.f32 %v1953, 1.442695
          %v1970 = vpow.pop %v1969
          %v1971 = vmul.f32 %v1954, 1.442695
          %v1972 = vpow.pop %v1971
          %v1973 = vmul.f32 %v1955, 1.442695
          %v1974 = vpow.pop %v1973
          %v1975 = vmul.f32 %v1956, 1.442695
          %v1976 = vpow.pop %v1975
          %v1977 = vmul.f32 %v1957, 1.442695
          %v1978 = vpow.pop %v1977
          %v1979 = vmul.f32 %v1958, 1.442695
          %v1980 = vpow.pop %v1979
          %v1981 = vmul.f32 %v1959, 1.442695
          %v1982 = vpow.pop %v1981
          %v1983 = vmul.f32 %v1960, 1.442695
          %v1984 = vpow.pop %v1983
          %v1985 = vadd.f32 %v1962, 1.0
          %v1986 = vadd.f32 %v1964, 1.0
          %v1987 = vadd.f32 %v1966, 1.0
          %v1988 = vadd.f32 %v1968, 1.0
          %v1989 = vadd.f32 %v1970, 1.0
          %v1990 = vadd.f32 %v1972, 1.0
          %v1991 = vadd.f32 %v1974, 1.0
          %v1992 = vadd.f32 %v1976, 1.0
          %v1993 = vadd.f32 %v1978, 1.0
          %v1994 = vadd.f32 %v1980, 1.0
          %v1995 = vadd.f32 %v1982, 1.0
          %v1996 = vadd.f32 %v1984, 1.0
          %v1997 = vrcp.pop %v1985
          %v1998 = vmul.f32 1.0, %v1997
          %v1999 = vrcp.pop %v1986
          %v2000 = vmul.f32 1.0, %v1999
          %v2001 = vrcp.pop %v1987
          %v2002 = vmul.f32 1.0, %v2001
          %v2003 = vrcp.pop %v1988
          %v2004 = vmul.f32 1.0, %v2003
          %v2005 = vrcp.pop %v1989
          %v2006 = vmul.f32 1.0, %v2005
          %v2007 = vrcp.pop %v1990
          %v2008 = vmul.f32 1.0, %v2007
          %v2009 = vrcp.pop %v1991
          %v2010 = vmul.f32 1.0, %v2009
          %v2011 = vrcp.pop %v1992
          %v2012 = vmul.f32 1.0, %v2011
          %v2013 = vrcp.pop %v1993
          %v2014 = vmul.f32 1.0, %v2013
          %v2015 = vrcp.pop %v1994
          %v2016 = vmul.f32 1.0, %v2015
          %v2017 = vrcp.pop %v1995
          %v2018 = vmul.f32 1.0, %v2017
          %v2019 = vrcp.pop %v1996
          %v2020 = vmul.f32 1.0, %v2019
          %v2021 = vmul.f32 %v1738, %v1998
          %v2022 = vmul.f32 %v1740, %v2000
          %v2023 = vmul.f32 %v1779, %v2002
          %v2024 = vmul.f32 %v1781, %v2004
          %v2025 = vmul.f32 %v1820, %v2006
          %v2026 = vmul.f32 %v1822, %v2008
          %v2027 = vmul.f32 %v1861, %v2010
          %v2028 = vmul.f32 %v1863, %v2012
          %v2029 = vmul.f32 %v1902, %v2014
          %v2030 = vmul.f32 %v1904, %v2016
          %v2031 = vmul.f32 %v1943, %v2018
          %v2032 = vmul.f32 %v1945, %v2020
          %v2033 = vpack.c.bf16 %v2021, %v2021
          %v2034 = vpack.c.bf16 %v2022, %v2022
          %v2035 = vpack.c.bf16 %v2023, %v2023
          %v2036 = vpack.c.bf16 %v2024, %v2024
          %v2037 = vpack.c.bf16 %v2025, %v2025
          %v2038 = vpack.c.bf16 %v2026, %v2026
          %v2039 = vpack.c.bf16 %v2027, %v2027
          %v2040 = vpack.c.bf16 %v2028, %v2028
          %v2041 = vpack.c.bf16 %v2029, %v2029
          %v2042 = vpack.c.bf16 %v2030, %v2030
          %v2043 = vpack.c.bf16 %v2031, %v2031
          %v2044 = vpack.c.bf16 %v2032, %v2032
          %v2045 = vld [vmem:[%s5] sm:$0xff]
          %v2046 = vld [vmem:[%s5 + $0x8] sm:$0xff]
          %v2047 = vld [vmem:[%s5 + $0x10] sm:$0xff]
          %v2048 = vld [vmem:[%s5 + $0x18] sm:$0xff]
          %v2049 = vld [vmem:[%s5 + $0x20] sm:$0xff]
          %v2050 = vld [vmem:[%s5 + $0x28] sm:$0xff]
          %v2051 = vld [vmem:[%s5 + $0x30] sm:$0xff]
          %v2052 = vld [vmem:[%s5 + $0x38] sm:$0xff]
          %v2053 = vld [vmem:[%s5 + $0x40] sm:$0xff]
          %v2054 = vld [vmem:[%s5 + $0x48] sm:$0xff]
          %v2055 = vld [vmem:[%s5 + $0x50] sm:$0xff]
          %v2056 = vld [vmem:[%s5 + $0x58] sm:$0xff]
          %v2057 = vld [vmem:[%s5 + $0x60] sm:$0xff]
          %v2058 = vld [vmem:[%s5 + $0x68] sm:$0xff]
          %v2059 = vld [vmem:[%s5 + $0x70] sm:$0xff]
          %v2060 = vld [vmem:[%s5 + $0x78] sm:$0xff]
          %v2061 = vld [vmem:[%s5 + $0x80] sm:$0xff]
          %v2062 = vld [vmem:[%s5 + $0x88] sm:$0xff]
          %v2063 = vld [vmem:[%s5 + $0x90] sm:$0xff]
          %v2064 = vld [vmem:[%s5 + $0x98] sm:$0xff]
          %v2065 = vld [vmem:[%s5 + $0xa0] sm:$0xff]
          %v2066 = vld [vmem:[%s5 + $0xa8] sm:$0xff]
          %v2067 = vld [vmem:[%s5 + $0xb0] sm:$0xff]
          %v2068 = vld [vmem:[%s5 + $0xb8] sm:$0xff]
          %v2069 = vld [vmem:[%s5 + $0xc0] sm:$0xff]
          %v2070 = vld [vmem:[%s5 + $0xc8] sm:$0xff]
          %v2071 = vld [vmem:[%s5 + $0xd0] sm:$0xff]
          %v2072 = vld [vmem:[%s5 + $0xd8] sm:$0xff]
          %v2073 = vld [vmem:[%s5 + $0xe0] sm:$0xff]
          %v2074 = vld [vmem:[%s5 + $0xe8] sm:$0xff]
          %v2075 = vld [vmem:[%s5 + $0xf0] sm:$0xff]
          %v2076 = vld [vmem:[%s5 + $0xf8] sm:$0xff]
          %v2077 = vld [vmem:[%s5 + $0x100] sm:$0xff]
          %v2078 = vld [vmem:[%s5 + $0x108] sm:$0xff]
          %v2079 = vld [vmem:[%s5 + $0x110] sm:$0xff]
          %v2080 = vld [vmem:[%s5 + $0x118] sm:$0xff]
          %v2081 = vld [vmem:[%s5 + $0x120] sm:$0xff]
          %v2082 = vld [vmem:[%s5 + $0x128] sm:$0xff]
          %v2083 = vld [vmem:[%s5 + $0x130] sm:$0xff]
          %v2084 = vld [vmem:[%s5 + $0x138] sm:$0xff]
          %v2085 = vld [vmem:[%s5 + $0x140] sm:$0xff]
          %v2086 = vld [vmem:[%s5 + $0x148] sm:$0xff]
          %v2087 = vld [vmem:[%s5 + $0x150] sm:$0xff]
          %v2088 = vld [vmem:[%s5 + $0x158] sm:$0xff]
          %v2089 = vld [vmem:[%s5 + $0x160] sm:$0xff]
          %v2090 = vld [vmem:[%s5 + $0x168] sm:$0xff]
          %v2091 = vld [vmem:[%s5 + $0x170] sm:$0xff]
          %v2092 = vld [vmem:[%s5 + $0x178] sm:$0xff]
          %v2093 = vld [vmem:[%s5 + $0x180] sm:$0xff]
          %v2094 = vld [vmem:[%s5 + $0x188] sm:$0xff]
          %v2095 = vld [vmem:[%s5 + $0x190] sm:$0xff]
          %v2096 = vld [vmem:[%s5 + $0x198] sm:$0xff]
          %v2097 = vld [vmem:[%s5 + $0x1a0] sm:$0xff]
          %v2098 = vld [vmem:[%s5 + $0x1a8] sm:$0xff]
          %v2099 = vld [vmem:[%s5 + $0x1b0] sm:$0xff]
          %v2100 = vld [vmem:[%s5 + $0x1b8] sm:$0xff]
          %v2101 = vld [vmem:[%s5 + $0x1c0] sm:$0xff]
          %v2102 = vld [vmem:[%s5 + $0x1c8] sm:$0xff]
          %v2103 = vld [vmem:[%s5 + $0x1d0] sm:$0xff]
          %v2104 = vld [vmem:[%s5 + $0x1d8] sm:$0xff]
          %v2105 = vld [vmem:[%s5 + $0x1e0] sm:$0xff]
          %v2106 = vld [vmem:[%s5 + $0x1e8] sm:$0xff]
          %v2107 = vld [vmem:[%s5 + $0x1f0] sm:$0xff]
          %v2108 = vld [vmem:[%s5 + $0x1f8] sm:$0xff]
          %v2109 = vld [vmem:[%s5 + $0x200] sm:$0xff]
          %v2110 = vld [vmem:[%s5 + $0x208] sm:$0xff]
          %v2111 = vld [vmem:[%s5 + $0x210] sm:$0xff]
          %v2112 = vld [vmem:[%s5 + $0x218] sm:$0xff]
          %v2113 = vld [vmem:[%s5 + $0x220] sm:$0xff]
          %v2114 = vld [vmem:[%s5 + $0x228] sm:$0xff]
          %v2115 = vld [vmem:[%s5 + $0x230] sm:$0xff]
          %v2116 = vld [vmem:[%s5 + $0x238] sm:$0xff]
          %v2117 = vld [vmem:[%s5 + $0x240] sm:$0xff]
          %v2118 = vld [vmem:[%s5 + $0x248] sm:$0xff]
          %v2119 = vld [vmem:[%s5 + $0x250] sm:$0xff]
          %v2120 = vld [vmem:[%s5 + $0x258] sm:$0xff]
          %v2121 = vld [vmem:[%s5 + $0x260] sm:$0xff]
          %v2122 = vld [vmem:[%s5 + $0x268] sm:$0xff]
          %v2123 = vld [vmem:[%s5 + $0x270] sm:$0xff]
          %v2124 = vld [vmem:[%s5 + $0x278] sm:$0xff]
          %v2125 = vld [vmem:[%s5 + $0x280] sm:$0xff]
          %v2126 = vld [vmem:[%s5 + $0x288] sm:$0xff]
          %v2127 = vld [vmem:[%s5 + $0x290] sm:$0xff]
          %v2128 = vld [vmem:[%s5 + $0x298] sm:$0xff]
          %v2129 = vld [vmem:[%s5 + $0x2a0] sm:$0xff]
          %v2130 = vld [vmem:[%s5 + $0x2a8] sm:$0xff]
          %v2131 = vld [vmem:[%s5 + $0x2b0] sm:$0xff]
          %v2132 = vld [vmem:[%s5 + $0x2b8] sm:$0xff]
          %v2133 = vld [vmem:[%s5 + $0x2c0] sm:$0xff]
          %v2134 = vld [vmem:[%s5 + $0x2c8] sm:$0xff]
          %v2135 = vld [vmem:[%s5 + $0x2d0] sm:$0xff]
          %v2136 = vld [vmem:[%s5 + $0x2d8] sm:$0xff]
          %v2137 = vld [vmem:[%s5 + $0x2e0] sm:$0xff]
          %v2138 = vld [vmem:[%s5 + $0x2e8] sm:$0xff]
          %v2139 = vld [vmem:[%s5 + $0x2f0] sm:$0xff]
          %v2140 = vld [vmem:[%s5 + $0x2f8] sm:$0xff]
          %v2141 = vld [vmem:[%s5 + $0x300] sm:$0xff]
          %v2142 = vld [vmem:[%s5 + $0x308] sm:$0xff]
          %v2143 = vld [vmem:[%s5 + $0x310] sm:$0xff]
          %v2144 = vld [vmem:[%s5 + $0x318] sm:$0xff]
          %v2145 = vld [vmem:[%s5 + $0x320] sm:$0xff]
          %v2146 = vld [vmem:[%s5 + $0x328] sm:$0xff]
          %v2147 = vld [vmem:[%s5 + $0x330] sm:$0xff]
          %v2148 = vld [vmem:[%s5 + $0x338] sm:$0xff]
          %v2149 = vld [vmem:[%s5 + $0x340] sm:$0xff]
          %v2150 = vld [vmem:[%s5 + $0x348] sm:$0xff]
          %v2151 = vld [vmem:[%s5 + $0x350] sm:$0xff]
          %v2152 = vld [vmem:[%s5 + $0x358] sm:$0xff]
          %v2153 = vld [vmem:[%s5 + $0x360] sm:$0xff]
          %v2154 = vld [vmem:[%s5 + $0x368] sm:$0xff]
          %v2155 = vld [vmem:[%s5 + $0x370] sm:$0xff]
          %v2156 = vld [vmem:[%s5 + $0x378] sm:$0xff]
          %v2157 = vld [vmem:[%s5 + $0x380] sm:$0xff]
          %v2158 = vld [vmem:[%s5 + $0x388] sm:$0xff]
          %v2159 = vld [vmem:[%s5 + $0x390] sm:$0xff]
          %v2160 = vld [vmem:[%s5 + $0x398] sm:$0xff]
          %v2161 = vld [vmem:[%s5 + $0x3a0] sm:$0xff]
          %v2162 = vld [vmem:[%s5 + $0x3a8] sm:$0xff]
          %v2163 = vld [vmem:[%s5 + $0x3b0] sm:$0xff]
          %v2164 = vld [vmem:[%s5 + $0x3b8] sm:$0xff]
          %v2165 = vld [vmem:[%s5 + $0x3c0] sm:$0xff]
          %v2166 = vld [vmem:[%s5 + $0x3c8] sm:$0xff]
          %v2167 = vld [vmem:[%s5 + $0x3d0] sm:$0xff]
          %v2168 = vld [vmem:[%s5 + $0x3d8] sm:$0xff]
          %v2169 = vld [vmem:[%s5 + $0x3e0] sm:$0xff]
          %v2170 = vld [vmem:[%s5 + $0x3e8] sm:$0xff]
          %v2171 = vld [vmem:[%s5 + $0x3f0] sm:$0xff]
          %v2172 = vld [vmem:[%s5 + $0x3f8] sm:$0xff]
          %v2173 = vld [vmem:[%s5 + $0x400] sm:$0xff]
          %v2174 = vld [vmem:[%s5 + $0x408] sm:$0xff]
          %v2175 = vld [vmem:[%s5 + $0x410] sm:$0xff]
          %v2176 = vld [vmem:[%s5 + $0x418] sm:$0xff]
          %v2177 = vld [vmem:[%s5 + $0x420] sm:$0xff]
          %v2178 = vld [vmem:[%s5 + $0x428] sm:$0xff]
          %v2179 = vld [vmem:[%s5 + $0x430] sm:$0xff]
          %v2180 = vld [vmem:[%s5 + $0x438] sm:$0xff]
          %v2181 = vld [vmem:[%s5 + $0x440] sm:$0xff]
          %v2182 = vld [vmem:[%s5 + $0x448] sm:$0xff]
          %v2183 = vld [vmem:[%s5 + $0x450] sm:$0xff]
          %v2184 = vld [vmem:[%s5 + $0x458] sm:$0xff]
          %v2185 = vld [vmem:[%s5 + $0x460] sm:$0xff]
          %v2186 = vld [vmem:[%s5 + $0x468] sm:$0xff]
          %v2187 = vld [vmem:[%s5 + $0x470] sm:$0xff]
          %v2188 = vld [vmem:[%s5 + $0x478] sm:$0xff]
          %v2189 = vld [vmem:[%s5 + $0x480] sm:$0xff]
          %v2190 = vld [vmem:[%s5 + $0x488] sm:$0xff]
          %v2191 = vld [vmem:[%s5 + $0x490] sm:$0xff]
          %v2192 = vld [vmem:[%s5 + $0x498] sm:$0xff]
          %v2193 = vld [vmem:[%s5 + $0x4a0] sm:$0xff]
          %v2194 = vld [vmem:[%s5 + $0x4a8] sm:$0xff]
          %v2195 = vld [vmem:[%s5 + $0x4b0] sm:$0xff]
          %v2196 = vld [vmem:[%s5 + $0x4b8] sm:$0xff]
          %v2197 = vld [vmem:[%s5 + $0x4c0] sm:$0xff]
          %v2198 = vld [vmem:[%s5 + $0x4c8] sm:$0xff]
          %v2199 = vld [vmem:[%s5 + $0x4d0] sm:$0xff]
          %v2200 = vld [vmem:[%s5 + $0x4d8] sm:$0xff]
          %v2201 = vld [vmem:[%s5 + $0x4e0] sm:$0xff]
          %v2202 = vld [vmem:[%s5 + $0x4e8] sm:$0xff]
          %v2203 = vld [vmem:[%s5 + $0x4f0] sm:$0xff]
          %v2204 = vld [vmem:[%s5 + $0x4f8] sm:$0xff]
          %v2205 = vld [vmem:[%s5 + $0x500] sm:$0xff]
          %v2206 = vld [vmem:[%s5 + $0x508] sm:$0xff]
          %v2207 = vld [vmem:[%s5 + $0x510] sm:$0xff]
          %v2208 = vld [vmem:[%s5 + $0x518] sm:$0xff]
          %v2209 = vld [vmem:[%s5 + $0x520] sm:$0xff]
          %v2210 = vld [vmem:[%s5 + $0x528] sm:$0xff]
          %v2211 = vld [vmem:[%s5 + $0x530] sm:$0xff]
          %v2212 = vld [vmem:[%s5 + $0x538] sm:$0xff]
          %v2213 = vld [vmem:[%s5 + $0x540] sm:$0xff]
          %v2214 = vld [vmem:[%s5 + $0x548] sm:$0xff]
          %v2215 = vld [vmem:[%s5 + $0x550] sm:$0xff]
          %v2216 = vld [vmem:[%s5 + $0x558] sm:$0xff]
          %v2217 = vld [vmem:[%s5 + $0x560] sm:$0xff]
          %v2218 = vld [vmem:[%s5 + $0x568] sm:$0xff]
          %v2219 = vld [vmem:[%s5 + $0x570] sm:$0xff]
          %v2220 = vld [vmem:[%s5 + $0x578] sm:$0xff]
          %v2221 = vld [vmem:[%s5 + $0x580] sm:$0xff]
          %v2222 = vld [vmem:[%s5 + $0x588] sm:$0xff]
          %v2223 = vld [vmem:[%s5 + $0x590] sm:$0xff]
          %v2224 = vld [vmem:[%s5 + $0x598] sm:$0xff]
          %v2225 = vld [vmem:[%s5 + $0x5a0] sm:$0xff]
          %v2226 = vld [vmem:[%s5 + $0x5a8] sm:$0xff]
          %v2227 = vld [vmem:[%s5 + $0x5b0] sm:$0xff]
          %v2228 = vld [vmem:[%s5 + $0x5b8] sm:$0xff]
          %v2229 = vld [vmem:[%s5 + $0x5c0] sm:$0xff]
          %v2230 = vld [vmem:[%s5 + $0x5c8] sm:$0xff]
          %v2231 = vld [vmem:[%s5 + $0x5d0] sm:$0xff]
          %v2232 = vld [vmem:[%s5 + $0x5d8] sm:$0xff]
          %v2233 = vld [vmem:[%s5 + $0x5e0] sm:$0xff]
          %v2234 = vld [vmem:[%s5 + $0x5e8] sm:$0xff]
          %v2235 = vld [vmem:[%s5 + $0x5f0] sm:$0xff]
          %v2236 = vld [vmem:[%s5 + $0x5f8] sm:$0xff]
          %v2237 = vld [vmem:[%s5 + $0x600] sm:$0xff]
          %v2238 = vld [vmem:[%s5 + $0x608] sm:$0xff]
          %v2239 = vld [vmem:[%s5 + $0x610] sm:$0xff]
          %v2240 = vld [vmem:[%s5 + $0x618] sm:$0xff]
          %v2241 = vld [vmem:[%s5 + $0x620] sm:$0xff]
          %v2242 = vld [vmem:[%s5 + $0x628] sm:$0xff]
          %v2243 = vld [vmem:[%s5 + $0x630] sm:$0xff]
          %v2244 = vld [vmem:[%s5 + $0x638] sm:$0xff]
          %v2245 = vld [vmem:[%s5 + $0x640] sm:$0xff]
          %v2246 = vld [vmem:[%s5 + $0x648] sm:$0xff]
          %v2247 = vld [vmem:[%s5 + $0x650] sm:$0xff]
          %v2248 = vld [vmem:[%s5 + $0x658] sm:$0xff]
          %v2249 = vld [vmem:[%s5 + $0x660] sm:$0xff]
          %v2250 = vld [vmem:[%s5 + $0x668] sm:$0xff]
          %v2251 = vld [vmem:[%s5 + $0x670] sm:$0xff]
          %v2252 = vld [vmem:[%s5 + $0x678] sm:$0xff]
          %v2253 = vld [vmem:[%s5 + $0x680] sm:$0xff]
          %v2254 = vld [vmem:[%s5 + $0x688] sm:$0xff]
          %v2255 = vld [vmem:[%s5 + $0x690] sm:$0xff]
          %v2256 = vld [vmem:[%s5 + $0x698] sm:$0xff]
          %v2257 = vld [vmem:[%s5 + $0x6a0] sm:$0xff]
          %v2258 = vld [vmem:[%s5 + $0x6a8] sm:$0xff]
          %v2259 = vld [vmem:[%s5 + $0x6b0] sm:$0xff]
          %v2260 = vld [vmem:[%s5 + $0x6b8] sm:$0xff]
          %v2261 = vld [vmem:[%s5 + $0x6c0] sm:$0xff]
          %v2262 = vld [vmem:[%s5 + $0x6c8] sm:$0xff]
          %v2263 = vld [vmem:[%s5 + $0x6d0] sm:$0xff]
          %v2264 = vld [vmem:[%s5 + $0x6d8] sm:$0xff]
          %v2265 = vld [vmem:[%s5 + $0x6e0] sm:$0xff]
          %v2266 = vld [vmem:[%s5 + $0x6e8] sm:$0xff]
          %v2267 = vld [vmem:[%s5 + $0x6f0] sm:$0xff]
          %v2268 = vld [vmem:[%s5 + $0x6f8] sm:$0xff]
          %v2269 = vld [vmem:[%s5 + $0x700] sm:$0xff]
          %v2270 = vld [vmem:[%s5 + $0x708] sm:$0xff]
          %v2271 = vld [vmem:[%s5 + $0x710] sm:$0xff]
          %v2272 = vld [vmem:[%s5 + $0x718] sm:$0xff]
          %v2273 = vld [vmem:[%s5 + $0x720] sm:$0xff]
          %v2274 = vld [vmem:[%s5 + $0x728] sm:$0xff]
          %v2275 = vld [vmem:[%s5 + $0x730] sm:$0xff]
          %v2276 = vld [vmem:[%s5 + $0x738] sm:$0xff]
          %v2277 = vld [vmem:[%s5 + $0x740] sm:$0xff]
          %v2278 = vld [vmem:[%s5 + $0x748] sm:$0xff]
          %v2279 = vld [vmem:[%s5 + $0x750] sm:$0xff]
          %v2280 = vld [vmem:[%s5 + $0x758] sm:$0xff]
          %v2281 = vld [vmem:[%s5 + $0x760] sm:$0xff]
          %v2282 = vld [vmem:[%s5 + $0x768] sm:$0xff]
          %v2283 = vld [vmem:[%s5 + $0x770] sm:$0xff]
          %v2284 = vld [vmem:[%s5 + $0x778] sm:$0xff]
          %v2285 = vld [vmem:[%s5 + $0x780] sm:$0xff]
          %v2286 = vld [vmem:[%s5 + $0x788] sm:$0xff]
          %v2287 = vld [vmem:[%s5 + $0x790] sm:$0xff]
          %v2288 = vld [vmem:[%s5 + $0x798] sm:$0xff]
          %v2289 = vld [vmem:[%s5 + $0x7a0] sm:$0xff]
          %v2290 = vld [vmem:[%s5 + $0x7a8] sm:$0xff]
          %v2291 = vld [vmem:[%s5 + $0x7b0] sm:$0xff]
          %v2292 = vld [vmem:[%s5 + $0x7b8] sm:$0xff]
          %v2293 = vld [vmem:[%s5 + $0x7c0] sm:$0xff]
          %v2294 = vld [vmem:[%s5 + $0x7c8] sm:$0xff]
          %v2295 = vld [vmem:[%s5 + $0x7d0] sm:$0xff]
          %v2296 = vld [vmem:[%s5 + $0x7d8] sm:$0xff]
          %v2297 = vld [vmem:[%s5 + $0x7e0] sm:$0xff]
          %v2298 = vld [vmem:[%s5 + $0x7e8] sm:$0xff]
          %v2299 = vld [vmem:[%s5 + $0x7f0] sm:$0xff]
          %v2300 = vld [vmem:[%s5 + $0x7f8] sm:$0xff]
          %v2301 = vld [vmem:[%s5 + $0x800] sm:$0xff]
          %v2302 = vld [vmem:[%s5 + $0x808] sm:$0xff]
          %v2303 = vld [vmem:[%s5 + $0x810] sm:$0xff]
          %v2304 = vld [vmem:[%s5 + $0x818] sm:$0xff]
          %v2305 = vld [vmem:[%s5 + $0x820] sm:$0xff]
          %v2306 = vld [vmem:[%s5 + $0x828] sm:$0xff]
          %v2307 = vld [vmem:[%s5 + $0x830] sm:$0xff]
          %v2308 = vld [vmem:[%s5 + $0x838] sm:$0xff]
          %v2309 = vld [vmem:[%s5 + $0x840] sm:$0xff]
          %v2310 = vld [vmem:[%s5 + $0x848] sm:$0xff]
          %v2311 = vld [vmem:[%s5 + $0x850] sm:$0xff]
          %v2312 = vld [vmem:[%s5 + $0x858] sm:$0xff]
          %v2313 = vld [vmem:[%s5 + $0x860] sm:$0xff]
          %v2314 = vld [vmem:[%s5 + $0x868] sm:$0xff]
          %v2315 = vld [vmem:[%s5 + $0x870] sm:$0xff]
          %v2316 = vld [vmem:[%s5 + $0x878] sm:$0xff]
          %v2317 = vld [vmem:[%s5 + $0x880] sm:$0xff]
          %v2318 = vld [vmem:[%s5 + $0x888] sm:$0xff]
          %v2319 = vld [vmem:[%s5 + $0x890] sm:$0xff]
          %v2320 = vld [vmem:[%s5 + $0x898] sm:$0xff]
          %v2321 = vld [vmem:[%s5 + $0x8a0] sm:$0xff]
          %v2322 = vld [vmem:[%s5 + $0x8a8] sm:$0xff]
          %v2323 = vld [vmem:[%s5 + $0x8b0] sm:$0xff]
          %v2324 = vld [vmem:[%s5 + $0x8b8] sm:$0xff]
          %v2325 = vld [vmem:[%s5 + $0x8c0] sm:$0xff]
          %v2326 = vld [vmem:[%s5 + $0x8c8] sm:$0xff]
          %v2327 = vld [vmem:[%s5 + $0x8d0] sm:$0xff]
          %v2328 = vld [vmem:[%s5 + $0x8d8] sm:$0xff]
          %v2329 = vld [vmem:[%s5 + $0x8e0] sm:$0xff]
          %v2330 = vld [vmem:[%s5 + $0x8e8] sm:$0xff]
          %v2331 = vld [vmem:[%s5 + $0x8f0] sm:$0xff]
          %v2332 = vld [vmem:[%s5 + $0x8f8] sm:$0xff]
          %v2333 = vld [vmem:[%s5 + $0x900] sm:$0xff]
          %v2334 = vld [vmem:[%s5 + $0x908] sm:$0xff]
          %v2335 = vld [vmem:[%s5 + $0x910] sm:$0xff]
          %v2336 = vld [vmem:[%s5 + $0x918] sm:$0xff]
          %v2337 = vld [vmem:[%s5 + $0x920] sm:$0xff]
          %v2338 = vld [vmem:[%s5 + $0x928] sm:$0xff]
          %v2339 = vld [vmem:[%s5 + $0x930] sm:$0xff]
          %v2340 = vld [vmem:[%s5 + $0x938] sm:$0xff]
          %v2341 = vld [vmem:[%s5 + $0x940] sm:$0xff]
          %v2342 = vld [vmem:[%s5 + $0x948] sm:$0xff]
          %v2343 = vld [vmem:[%s5 + $0x950] sm:$0xff]
          %v2344 = vld [vmem:[%s5 + $0x958] sm:$0xff]
          %v2345 = vld [vmem:[%s5 + $0x960] sm:$0xff]
          %v2346 = vld [vmem:[%s5 + $0x968] sm:$0xff]
          %v2347 = vld [vmem:[%s5 + $0x970] sm:$0xff]
          %v2348 = vld [vmem:[%s5 + $0x978] sm:$0xff]
          %v2349 = vld [vmem:[%s5 + $0x980] sm:$0xff]
          %v2350 = vld [vmem:[%s5 + $0x988] sm:$0xff]
          %v2351 = vld [vmem:[%s5 + $0x990] sm:$0xff]
          %v2352 = vld [vmem:[%s5 + $0x998] sm:$0xff]
          %v2353 = vld [vmem:[%s5 + $0x9a0] sm:$0xff]
          %v2354 = vld [vmem:[%s5 + $0x9a8] sm:$0xff]
          %v2355 = vld [vmem:[%s5 + $0x9b0] sm:$0xff]
          %v2356 = vld [vmem:[%s5 + $0x9b8] sm:$0xff]
          %v2357 = vld [vmem:[%s5 + $0x9c0] sm:$0xff]
          %v2358 = vld [vmem:[%s5 + $0x9c8] sm:$0xff]
          %v2359 = vld [vmem:[%s5 + $0x9d0] sm:$0xff]
          %v2360 = vld [vmem:[%s5 + $0x9d8] sm:$0xff]
          %v2361 = vld [vmem:[%s5 + $0x9e0] sm:$0xff]
          %v2362 = vld [vmem:[%s5 + $0x9e8] sm:$0xff]
          %v2363 = vld [vmem:[%s5 + $0x9f0] sm:$0xff]
          %v2364 = vld [vmem:[%s5 + $0x9f8] sm:$0xff]
          %v2365 = vld [vmem:[%s5 + $0xa00] sm:$0xff]
          %v2366 = vld [vmem:[%s5 + $0xa08] sm:$0xff]
          %v2367 = vld [vmem:[%s5 + $0xa10] sm:$0xff]
          %v2368 = vld [vmem:[%s5 + $0xa18] sm:$0xff]
          %v2369 = vld [vmem:[%s5 + $0xa20] sm:$0xff]
          %v2370 = vld [vmem:[%s5 + $0xa28] sm:$0xff]
          %v2371 = vld [vmem:[%s5 + $0xa30] sm:$0xff]
          %v2372 = vld [vmem:[%s5 + $0xa38] sm:$0xff]
          %v2373 = vld [vmem:[%s5 + $0xa40] sm:$0xff]
          %v2374 = vld [vmem:[%s5 + $0xa48] sm:$0xff]
          %v2375 = vld [vmem:[%s5 + $0xa50] sm:$0xff]
          %v2376 = vld [vmem:[%s5 + $0xa58] sm:$0xff]
          %v2377 = vld [vmem:[%s5 + $0xa60] sm:$0xff]
          %v2378 = vld [vmem:[%s5 + $0xa68] sm:$0xff]
          %v2379 = vld [vmem:[%s5 + $0xa70] sm:$0xff]
          %v2380 = vld [vmem:[%s5 + $0xa78] sm:$0xff]
          %v2381 = vld [vmem:[%s5 + $0xa80] sm:$0xff]
          %v2382 = vld [vmem:[%s5 + $0xa88] sm:$0xff]
          %v2383 = vld [vmem:[%s5 + $0xa90] sm:$0xff]
          %v2384 = vld [vmem:[%s5 + $0xa98] sm:$0xff]
          %v2385 = vld [vmem:[%s5 + $0xaa0] sm:$0xff]
          %v2386 = vld [vmem:[%s5 + $0xaa8] sm:$0xff]
          %v2387 = vld [vmem:[%s5 + $0xab0] sm:$0xff]
          %v2388 = vld [vmem:[%s5 + $0xab8] sm:$0xff]
          %v2389 = vld [vmem:[%s5 + $0xac0] sm:$0xff]
          %v2390 = vld [vmem:[%s5 + $0xac8] sm:$0xff]
          %v2391 = vld [vmem:[%s5 + $0xad0] sm:$0xff]
          %v2392 = vld [vmem:[%s5 + $0xad8] sm:$0xff]
          %v2393 = vld [vmem:[%s5 + $0xae0] sm:$0xff]
          %v2394 = vld [vmem:[%s5 + $0xae8] sm:$0xff]
          %v2395 = vld [vmem:[%s5 + $0xaf0] sm:$0xff]
          %v2396 = vld [vmem:[%s5 + $0xaf8] sm:$0xff]
          %v2397 = vld [vmem:[%s5 + $0xb00] sm:$0xff]
          %v2398 = vld [vmem:[%s5 + $0xb08] sm:$0xff]
          %v2399 = vld [vmem:[%s5 + $0xb10] sm:$0xff]
          %v2400 = vld [vmem:[%s5 + $0xb18] sm:$0xff]
          %v2401 = vld [vmem:[%s5 + $0xb20] sm:$0xff]
          %v2402 = vld [vmem:[%s5 + $0xb28] sm:$0xff]
          %v2403 = vld [vmem:[%s5 + $0xb30] sm:$0xff]
          %v2404 = vld [vmem:[%s5 + $0xb38] sm:$0xff]
          %v2405 = vld [vmem:[%s5 + $0xb40] sm:$0xff]
          %v2406 = vld [vmem:[%s5 + $0xb48] sm:$0xff]
          %v2407 = vld [vmem:[%s5 + $0xb50] sm:$0xff]
          %v2408 = vld [vmem:[%s5 + $0xb58] sm:$0xff]
          %v2409 = vld [vmem:[%s5 + $0xb60] sm:$0xff]
          %v2410 = vld [vmem:[%s5 + $0xb68] sm:$0xff]
          %v2411 = vld [vmem:[%s5 + $0xb70] sm:$0xff]
          %v2412 = vld [vmem:[%s5 + $0xb78] sm:$0xff]
          %v2413 = vld [vmem:[%s5 + $0xb80] sm:$0xff]
          %v2414 = vld [vmem:[%s5 + $0xb88] sm:$0xff]
          %v2415 = vld [vmem:[%s5 + $0xb90] sm:$0xff]
          %v2416 = vld [vmem:[%s5 + $0xb98] sm:$0xff]
          %v2417 = vld [vmem:[%s5 + $0xba0] sm:$0xff]
          %v2418 = vld [vmem:[%s5 + $0xba8] sm:$0xff]
          %v2419 = vld [vmem:[%s5 + $0xbb0] sm:$0xff]
          %v2420 = vld [vmem:[%s5 + $0xbb8] sm:$0xff]
          %v2421 = vld [vmem:[%s5 + $0xbc0] sm:$0xff]
          %v2422 = vld [vmem:[%s5 + $0xbc8] sm:$0xff]
          %v2423 = vld [vmem:[%s5 + $0xbd0] sm:$0xff]
          %v2424 = vld [vmem:[%s5 + $0xbd8] sm:$0xff]
          %v2425 = vld [vmem:[%s5 + $0xbe0] sm:$0xff]
          %v2426 = vld [vmem:[%s5 + $0xbe8] sm:$0xff]
          %v2427 = vld [vmem:[%s5 + $0xbf0] sm:$0xff]
          %v2428 = vld [vmem:[%s5 + $0xbf8] sm:$0xff]
          %v2429 = vld [vmem:[%s6] sm:$0xf]
          %v2814 = vunpack.c.l.b16 %v2045
          %v2815 = vunpack.c.h.b16 %v2045
          %v2816 = vunpack.c.l.b16 %v2046
          %v2817 = vunpack.c.h.b16 %v2046
          %v2818 = vunpack.c.l.b16 %v2047
          %v2819 = vunpack.c.h.b16 %v2047
          %v2820 = vunpack.c.l.b16 %v2048
          %v2821 = vunpack.c.h.b16 %v2048
          %v2822 = vunpack.c.l.b16 %v2049
          %v2823 = vunpack.c.h.b16 %v2049
          %v2824 = vunpack.c.l.b16 %v2050
          %v2825 = vunpack.c.h.b16 %v2050
          %v2826 = vunpack.c.l.b16 %v2051
          %v2827 = vunpack.c.h.b16 %v2051
          %v2828 = vunpack.c.l.b16 %v2052
          %v2829 = vunpack.c.h.b16 %v2052
          %v2830 = vunpack.c.l.b16 %v2053
          %v2831 = vunpack.c.h.b16 %v2053
          %v2832 = vunpack.c.l.b16 %v2054
          %v2833 = vunpack.c.h.b16 %v2054
          %v2834 = vunpack.c.l.b16 %v2055
          %v2835 = vunpack.c.h.b16 %v2055
          %v2836 = vunpack.c.l.b16 %v2056
          %v2837 = vunpack.c.h.b16 %v2056
          %v2838 = vunpack.c.l.b16 %v2057
          %v2839 = vunpack.c.h.b16 %v2057
          %v2840 = vunpack.c.l.b16 %v2058
          %v2841 = vunpack.c.h.b16 %v2058
          %v2842 = vunpack.c.l.b16 %v2059
          %v2843 = vunpack.c.h.b16 %v2059
          %v2844 = vunpack.c.l.b16 %v2060
          %v2845 = vunpack.c.h.b16 %v2060
          %v2846 = vunpack.c.l.b16 %v2061
          %v2847 = vunpack.c.h.b16 %v2061
          %v2848 = vunpack.c.l.b16 %v2062
          %v2849 = vunpack.c.h.b16 %v2062
          %v2850 = vunpack.c.l.b16 %v2063
          %v2851 = vunpack.c.h.b16 %v2063
          %v2852 = vunpack.c.l.b16 %v2064
          %v2853 = vunpack.c.h.b16 %v2064
          %v2854 = vunpack.c.l.b16 %v2065
          %v2855 = vunpack.c.h.b16 %v2065
          %v2856 = vunpack.c.l.b16 %v2066
          %v2857 = vunpack.c.h.b16 %v2066
          %v2858 = vunpack.c.l.b16 %v2067
          %v2859 = vunpack.c.h.b16 %v2067
          %v2860 = vunpack.c.l.b16 %v2068
          %v2861 = vunpack.c.h.b16 %v2068
          %v2862 = vunpack.c.l.b16 %v2069
          %v2863 = vunpack.c.h.b16 %v2069
          %v2864 = vunpack.c.l.b16 %v2070
          %v2865 = vunpack.c.h.b16 %v2070
          %v2866 = vunpack.c.l.b16 %v2071
          %v2867 = vunpack.c.h.b16 %v2071
          %v2868 = vunpack.c.l.b16 %v2072
          %v2869 = vunpack.c.h.b16 %v2072
          %v2870 = vunpack.c.l.b16 %v2073
          %v2871 = vunpack.c.h.b16 %v2073
          %v2872 = vunpack.c.l.b16 %v2074
          %v2873 = vunpack.c.h.b16 %v2074
          %v2874 = vunpack.c.l.b16 %v2075
          %v2875 = vunpack.c.h.b16 %v2075
          %v2876 = vunpack.c.l.b16 %v2076
          %v2877 = vunpack.c.h.b16 %v2076
          %v2878 = vunpack.c.l.b16 %v2077
          %v2879 = vunpack.c.h.b16 %v2077
          %v2880 = vunpack.c.l.b16 %v2078
          %v2881 = vunpack.c.h.b16 %v2078
          %v2882 = vunpack.c.l.b16 %v2079
          %v2883 = vunpack.c.h.b16 %v2079
          %v2884 = vunpack.c.l.b16 %v2080
          %v2885 = vunpack.c.h.b16 %v2080
          %v2886 = vunpack.c.l.b16 %v2081
          %v2887 = vunpack.c.h.b16 %v2081
          %v2888 = vunpack.c.l.b16 %v2082
          %v2889 = vunpack.c.h.b16 %v2082
          %v2890 = vunpack.c.l.b16 %v2083
          %v2891 = vunpack.c.h.b16 %v2083
          %v2892 = vunpack.c.l.b16 %v2084
          %v2893 = vunpack.c.h.b16 %v2084
          %v2894 = vunpack.c.l.b16 %v2085
          %v2895 = vunpack.c.h.b16 %v2085
          %v2896 = vunpack.c.l.b16 %v2086
          %v2897 = vunpack.c.h.b16 %v2086
          %v2898 = vunpack.c.l.b16 %v2087
          %v2899 = vunpack.c.h.b16 %v2087
          %v2900 = vunpack.c.l.b16 %v2088
          %v2901 = vunpack.c.h.b16 %v2088
          %v2902 = vunpack.c.l.b16 %v2089
          %v2903 = vunpack.c.h.b16 %v2089
          %v2904 = vunpack.c.l.b16 %v2090
          %v2905 = vunpack.c.h.b16 %v2090
          %v2906 = vunpack.c.l.b16 %v2091
          %v2907 = vunpack.c.h.b16 %v2091
          %v2908 = vunpack.c.l.b16 %v2092
          %v2909 = vunpack.c.h.b16 %v2092
          %v2910 = vunpack.c.l.b16 %v2093
          %v2911 = vunpack.c.h.b16 %v2093
          %v2912 = vunpack.c.l.b16 %v2094
          %v2913 = vunpack.c.h.b16 %v2094
          %v2914 = vunpack.c.l.b16 %v2095
          %v2915 = vunpack.c.h.b16 %v2095
          %v2916 = vunpack.c.l.b16 %v2096
          %v2917 = vunpack.c.h.b16 %v2096
          %v2918 = vunpack.c.l.b16 %v2097
          %v2919 = vunpack.c.h.b16 %v2097
          %v2920 = vunpack.c.l.b16 %v2098
          %v2921 = vunpack.c.h.b16 %v2098
          %v2922 = vunpack.c.l.b16 %v2099
          %v2923 = vunpack.c.h.b16 %v2099
          %v2924 = vunpack.c.l.b16 %v2100
          %v2925 = vunpack.c.h.b16 %v2100
          %v2926 = vunpack.c.l.b16 %v2101
          %v2927 = vunpack.c.h.b16 %v2101
          %v2928 = vunpack.c.l.b16 %v2102
          %v2929 = vunpack.c.h.b16 %v2102
          %v2930 = vunpack.c.l.b16 %v2103
          %v2931 = vunpack.c.h.b16 %v2103
          %v2932 = vunpack.c.l.b16 %v2104
          %v2933 = vunpack.c.h.b16 %v2104
          %v2934 = vunpack.c.l.b16 %v2105
          %v2935 = vunpack.c.h.b16 %v2105
          %v2936 = vunpack.c.l.b16 %v2106
          %v2937 = vunpack.c.h.b16 %v2106
          %v2938 = vunpack.c.l.b16 %v2107
          %v2939 = vunpack.c.h.b16 %v2107
          %v2940 = vunpack.c.l.b16 %v2108
          %v2941 = vunpack.c.h.b16 %v2108
          %v2942 = vunpack.c.l.b16 %v2109
          %v2943 = vunpack.c.h.b16 %v2109
          %v2944 = vunpack.c.l.b16 %v2110
          %v2945 = vunpack.c.h.b16 %v2110
          %v2946 = vunpack.c.l.b16 %v2111
          %v2947 = vunpack.c.h.b16 %v2111
          %v2948 = vunpack.c.l.b16 %v2112
          %v2949 = vunpack.c.h.b16 %v2112
          %v2950 = vunpack.c.l.b16 %v2113
          %v2951 = vunpack.c.h.b16 %v2113
          %v2952 = vunpack.c.l.b16 %v2114
          %v2953 = vunpack.c.h.b16 %v2114
          %v2954 = vunpack.c.l.b16 %v2115
          %v2955 = vunpack.c.h.b16 %v2115
          %v2956 = vunpack.c.l.b16 %v2116
          %v2957 = vunpack.c.h.b16 %v2116
          %v2958 = vunpack.c.l.b16 %v2117
          %v2959 = vunpack.c.h.b16 %v2117
          %v2960 = vunpack.c.l.b16 %v2118
          %v2961 = vunpack.c.h.b16 %v2118
          %v2962 = vunpack.c.l.b16 %v2119
          %v2963 = vunpack.c.h.b16 %v2119
          %v2964 = vunpack.c.l.b16 %v2120
          %v2965 = vunpack.c.h.b16 %v2120
          %v2966 = vunpack.c.l.b16 %v2121
          %v2967 = vunpack.c.h.b16 %v2121
          %v2968 = vunpack.c.l.b16 %v2122
          %v2969 = vunpack.c.h.b16 %v2122
          %v2970 = vunpack.c.l.b16 %v2123
          %v2971 = vunpack.c.h.b16 %v2123
          %v2972 = vunpack.c.l.b16 %v2124
          %v2973 = vunpack.c.h.b16 %v2124
          %v2974 = vunpack.c.l.b16 %v2125
          %v2975 = vunpack.c.h.b16 %v2125
          %v2976 = vunpack.c.l.b16 %v2126
          %v2977 = vunpack.c.h.b16 %v2126
          %v2978 = vunpack.c.l.b16 %v2127
          %v2979 = vunpack.c.h.b16 %v2127
          %v2980 = vunpack.c.l.b16 %v2128
          %v2981 = vunpack.c.h.b16 %v2128
          %v2982 = vunpack.c.l.b16 %v2129
          %v2983 = vunpack.c.h.b16 %v2129
          %v2984 = vunpack.c.l.b16 %v2130
          %v2985 = vunpack.c.h.b16 %v2130
          %v2986 = vunpack.c.l.b16 %v2131
          %v2987 = vunpack.c.h.b16 %v2131
          %v2988 = vunpack.c.l.b16 %v2132
          %v2989 = vunpack.c.h.b16 %v2132
          %v2990 = vunpack.c.l.b16 %v2133
          %v2991 = vunpack.c.h.b16 %v2133
          %v2992 = vunpack.c.l.b16 %v2134
          %v2993 = vunpack.c.h.b16 %v2134
          %v2994 = vunpack.c.l.b16 %v2135
          %v2995 = vunpack.c.h.b16 %v2135
          %v2996 = vunpack.c.l.b16 %v2136
          %v2997 = vunpack.c.h.b16 %v2136
          %v2998 = vunpack.c.l.b16 %v2137
          %v2999 = vunpack.c.h.b16 %v2137
          %v3000 = vunpack.c.l.b16 %v2138
          %v3001 = vunpack.c.h.b16 %v2138
          %v3002 = vunpack.c.l.b16 %v2139
          %v3003 = vunpack.c.h.b16 %v2139
          %v3004 = vunpack.c.l.b16 %v2140
          %v3005 = vunpack.c.h.b16 %v2140
          %v3006 = vunpack.c.l.b16 %v2141
          %v3007 = vunpack.c.h.b16 %v2141
          %v3008 = vunpack.c.l.b16 %v2142
          %v3009 = vunpack.c.h.b16 %v2142
          %v3010 = vunpack.c.l.b16 %v2143
          %v3011 = vunpack.c.h.b16 %v2143
          %v3012 = vunpack.c.l.b16 %v2144
          %v3013 = vunpack.c.h.b16 %v2144
          %v3014 = vunpack.c.l.b16 %v2145
          %v3015 = vunpack.c.h.b16 %v2145
          %v3016 = vunpack.c.l.b16 %v2146
          %v3017 = vunpack.c.h.b16 %v2146
          %v3018 = vunpack.c.l.b16 %v2147
          %v3019 = vunpack.c.h.b16 %v2147
          %v3020 = vunpack.c.l.b16 %v2148
          %v3021 = vunpack.c.h.b16 %v2148
          %v3022 = vunpack.c.l.b16 %v2149
          %v3023 = vunpack.c.h.b16 %v2149
          %v3024 = vunpack.c.l.b16 %v2150
          %v3025 = vunpack.c.h.b16 %v2150
          %v3026 = vunpack.c.l.b16 %v2151
          %v3027 = vunpack.c.h.b16 %v2151
          %v3028 = vunpack.c.l.b16 %v2152
          %v3029 = vunpack.c.h.b16 %v2152
          %v3030 = vunpack.c.l.b16 %v2153
          %v3031 = vunpack.c.h.b16 %v2153
          %v3032 = vunpack.c.l.b16 %v2154
          %v3033 = vunpack.c.h.b16 %v2154
          %v3034 = vunpack.c.l.b16 %v2155
          %v3035 = vunpack.c.h.b16 %v2155
          %v3036 = vunpack.c.l.b16 %v2156
          %v3037 = vunpack.c.h.b16 %v2156
          %v3038 = vunpack.c.l.b16 %v2157
          %v3039 = vunpack.c.h.b16 %v2157
          %v3040 = vunpack.c.l.b16 %v2158
          %v3041 = vunpack.c.h.b16 %v2158
          %v3042 = vunpack.c.l.b16 %v2159
          %v3043 = vunpack.c.h.b16 %v2159
          %v3044 = vunpack.c.l.b16 %v2160
          %v3045 = vunpack.c.h.b16 %v2160
          %v3046 = vunpack.c.l.b16 %v2161
          %v3047 = vunpack.c.h.b16 %v2161
          %v3048 = vunpack.c.l.b16 %v2162
          %v3049 = vunpack.c.h.b16 %v2162
          %v3050 = vunpack.c.l.b16 %v2163
          %v3051 = vunpack.c.h.b16 %v2163
          %v3052 = vunpack.c.l.b16 %v2164
          %v3053 = vunpack.c.h.b16 %v2164
          %v3054 = vunpack.c.l.b16 %v2165
          %v3055 = vunpack.c.h.b16 %v2165
          %v3056 = vunpack.c.l.b16 %v2166
          %v3057 = vunpack.c.h.b16 %v2166
          %v3058 = vunpack.c.l.b16 %v2167
          %v3059 = vunpack.c.h.b16 %v2167
          %v3060 = vunpack.c.l.b16 %v2168
          %v3061 = vunpack.c.h.b16 %v2168
          %v3062 = vunpack.c.l.b16 %v2169
          %v3063 = vunpack.c.h.b16 %v2169
          %v3064 = vunpack.c.l.b16 %v2170
          %v3065 = vunpack.c.h.b16 %v2170
          %v3066 = vunpack.c.l.b16 %v2171
          %v3067 = vunpack.c.h.b16 %v2171
          %v3068 = vunpack.c.l.b16 %v2172
          %v3069 = vunpack.c.h.b16 %v2172
          %v3070 = vunpack.c.l.b16 %v2173
          %v3071 = vunpack.c.h.b16 %v2173
          %v3072 = vunpack.c.l.b16 %v2174
          %v3073 = vunpack.c.h.b16 %v2174
          %v3074 = vunpack.c.l.b16 %v2175
          %v3075 = vunpack.c.h.b16 %v2175
          %v3076 = vunpack.c.l.b16 %v2176
          %v3077 = vunpack.c.h.b16 %v2176
          %v3078 = vunpack.c.l.b16 %v2177
          %v3079 = vunpack.c.h.b16 %v2177
          %v3080 = vunpack.c.l.b16 %v2178
          %v3081 = vunpack.c.h.b16 %v2178
          %v3082 = vunpack.c.l.b16 %v2179
          %v3083 = vunpack.c.h.b16 %v2179
          %v3084 = vunpack.c.l.b16 %v2180
          %v3085 = vunpack.c.h.b16 %v2180
          %v3086 = vunpack.c.l.b16 %v2181
          %v3087 = vunpack.c.h.b16 %v2181
          %v3088 = vunpack.c.l.b16 %v2182
          %v3089 = vunpack.c.h.b16 %v2182
          %v3090 = vunpack.c.l.b16 %v2183
          %v3091 = vunpack.c.h.b16 %v2183
          %v3092 = vunpack.c.l.b16 %v2184
          %v3093 = vunpack.c.h.b16 %v2184
          %v3094 = vunpack.c.l.b16 %v2185
          %v3095 = vunpack.c.h.b16 %v2185
          %v3096 = vunpack.c.l.b16 %v2186
          %v3097 = vunpack.c.h.b16 %v2186
          %v3098 = vunpack.c.l.b16 %v2187
          %v3099 = vunpack.c.h.b16 %v2187
          %v3100 = vunpack.c.l.b16 %v2188
          %v3101 = vunpack.c.h.b16 %v2188
          %v3102 = vunpack.c.l.b16 %v2189
          %v3103 = vunpack.c.h.b16 %v2189
          %v3104 = vunpack.c.l.b16 %v2190
          %v3105 = vunpack.c.h.b16 %v2190
          %v3106 = vunpack.c.l.b16 %v2191
          %v3107 = vunpack.c.h.b16 %v2191
          %v3108 = vunpack.c.l.b16 %v2192
          %v3109 = vunpack.c.h.b16 %v2192
          %v3110 = vunpack.c.l.b16 %v2193
          %v3111 = vunpack.c.h.b16 %v2193
          %v3112 = vunpack.c.l.b16 %v2194
          %v3113 = vunpack.c.h.b16 %v2194
          %v3114 = vunpack.c.l.b16 %v2195
          %v3115 = vunpack.c.h.b16 %v2195
          %v3116 = vunpack.c.l.b16 %v2196
          %v3117 = vunpack.c.h.b16 %v2196
          %v3118 = vunpack.c.l.b16 %v2197
          %v3119 = vunpack.c.h.b16 %v2197
          %v3120 = vunpack.c.l.b16 %v2198
          %v3121 = vunpack.c.h.b16 %v2198
          %v3122 = vunpack.c.l.b16 %v2199
          %v3123 = vunpack.c.h.b16 %v2199
          %v3124 = vunpack.c.l.b16 %v2200
          %v3125 = vunpack.c.h.b16 %v2200
          %v3126 = vunpack.c.l.b16 %v2201
          %v3127 = vunpack.c.h.b16 %v2201
          %v3128 = vunpack.c.l.b16 %v2202
          %v3129 = vunpack.c.h.b16 %v2202
          %v3130 = vunpack.c.l.b16 %v2203
          %v3131 = vunpack.c.h.b16 %v2203
          %v3132 = vunpack.c.l.b16 %v2204
          %v3133 = vunpack.c.h.b16 %v2204
          %v3134 = vunpack.c.l.b16 %v2205
          %v3135 = vunpack.c.h.b16 %v2205
          %v3136 = vunpack.c.l.b16 %v2206
          %v3137 = vunpack.c.h.b16 %v2206
          %v3138 = vunpack.c.l.b16 %v2207
          %v3139 = vunpack.c.h.b16 %v2207
          %v3140 = vunpack.c.l.b16 %v2208
          %v3141 = vunpack.c.h.b16 %v2208
          %v3142 = vunpack.c.l.b16 %v2209
          %v3143 = vunpack.c.h.b16 %v2209
          %v3144 = vunpack.c.l.b16 %v2210
          %v3145 = vunpack.c.h.b16 %v2210
          %v3146 = vunpack.c.l.b16 %v2211
          %v3147 = vunpack.c.h.b16 %v2211
          %v3148 = vunpack.c.l.b16 %v2212
          %v3149 = vunpack.c.h.b16 %v2212
          %v3150 = vunpack.c.l.b16 %v2213
          %v3151 = vunpack.c.h.b16 %v2213
          %v3152 = vunpack.c.l.b16 %v2214
          %v3153 = vunpack.c.h.b16 %v2214
          %v3154 = vunpack.c.l.b16 %v2215
          %v3155 = vunpack.c.h.b16 %v2215
          %v3156 = vunpack.c.l.b16 %v2216
          %v3157 = vunpack.c.h.b16 %v2216
          %v3158 = vunpack.c.l.b16 %v2217
          %v3159 = vunpack.c.h.b16 %v2217
          %v3160 = vunpack.c.l.b16 %v2218
          %v3161 = vunpack.c.h.b16 %v2218
          %v3162 = vunpack.c.l.b16 %v2219
          %v3163 = vunpack.c.h.b16 %v2219
          %v3164 = vunpack.c.l.b16 %v2220
          %v3165 = vunpack.c.h.b16 %v2220
          %v3166 = vunpack.c.l.b16 %v2221
          %v3167 = vunpack.c.h.b16 %v2221
          %v3168 = vunpack.c.l.b16 %v2222
          %v3169 = vunpack.c.h.b16 %v2222
          %v3170 = vunpack.c.l.b16 %v2223
          %v3171 = vunpack.c.h.b16 %v2223
          %v3172 = vunpack.c.l.b16 %v2224
          %v3173 = vunpack.c.h.b16 %v2224
          %v3174 = vunpack.c.l.b16 %v2225
          %v3175 = vunpack.c.h.b16 %v2225
          %v3176 = vunpack.c.l.b16 %v2226
          %v3177 = vunpack.c.h.b16 %v2226
          %v3178 = vunpack.c.l.b16 %v2227
          %v3179 = vunpack.c.h.b16 %v2227
          %v3180 = vunpack.c.l.b16 %v2228
          %v3181 = vunpack.c.h.b16 %v2228
          %v3182 = vunpack.c.l.b16 %v2229
          %v3183 = vunpack.c.h.b16 %v2229
          %v3184 = vunpack.c.l.b16 %v2230
          %v3185 = vunpack.c.h.b16 %v2230
          %v3186 = vunpack.c.l.b16 %v2231
          %v3187 = vunpack.c.h.b16 %v2231
          %v3188 = vunpack.c.l.b16 %v2232
          %v3189 = vunpack.c.h.b16 %v2232
          %v3190 = vunpack.c.l.b16 %v2233
          %v3191 = vunpack.c.h.b16 %v2233
          %v3192 = vunpack.c.l.b16 %v2234
          %v3193 = vunpack.c.h.b16 %v2234
          %v3194 = vunpack.c.l.b16 %v2235
          %v3195 = vunpack.c.h.b16 %v2235
          %v3196 = vunpack.c.l.b16 %v2236
          %v3197 = vunpack.c.h.b16 %v2236
          %v3198 = vunpack.c.l.b16 %v2237
          %v3199 = vunpack.c.h.b16 %v2237
          %v3200 = vunpack.c.l.b16 %v2238
          %v3201 = vunpack.c.h.b16 %v2238
          %v3202 = vunpack.c.l.b16 %v2239
          %v3203 = vunpack.c.h.b16 %v2239
          %v3204 = vunpack.c.l.b16 %v2240
          %v3205 = vunpack.c.h.b16 %v2240
          %v3206 = vunpack.c.l.b16 %v2241
          %v3207 = vunpack.c.h.b16 %v2241
          %v3208 = vunpack.c.l.b16 %v2242
          %v3209 = vunpack.c.h.b16 %v2242
          %v3210 = vunpack.c.l.b16 %v2243
          %v3211 = vunpack.c.h.b16 %v2243
          %v3212 = vunpack.c.l.b16 %v2244
          %v3213 = vunpack.c.h.b16 %v2244
          %v3214 = vunpack.c.l.b16 %v2245
          %v3215 = vunpack.c.h.b16 %v2245
          %v3216 = vunpack.c.l.b16 %v2246
          %v3217 = vunpack.c.h.b16 %v2246
          %v3218 = vunpack.c.l.b16 %v2247
          %v3219 = vunpack.c.h.b16 %v2247
          %v3220 = vunpack.c.l.b16 %v2248
          %v3221 = vunpack.c.h.b16 %v2248
          %v3222 = vunpack.c.l.b16 %v2249
          %v3223 = vunpack.c.h.b16 %v2249
          %v3224 = vunpack.c.l.b16 %v2250
          %v3225 = vunpack.c.h.b16 %v2250
          %v3226 = vunpack.c.l.b16 %v2251
          %v3227 = vunpack.c.h.b16 %v2251
          %v3228 = vunpack.c.l.b16 %v2252
          %v3229 = vunpack.c.h.b16 %v2252
          %v3230 = vunpack.c.l.b16 %v2253
          %v3231 = vunpack.c.h.b16 %v2253
          %v3232 = vunpack.c.l.b16 %v2254
          %v3233 = vunpack.c.h.b16 %v2254
          %v3234 = vunpack.c.l.b16 %v2255
          %v3235 = vunpack.c.h.b16 %v2255
          %v3236 = vunpack.c.l.b16 %v2256
          %v3237 = vunpack.c.h.b16 %v2256
          %v3238 = vunpack.c.l.b16 %v2257
          %v3239 = vunpack.c.h.b16 %v2257
          %v3240 = vunpack.c.l.b16 %v2258
          %v3241 = vunpack.c.h.b16 %v2258
          %v3242 = vunpack.c.l.b16 %v2259
          %v3243 = vunpack.c.h.b16 %v2259
          %v3244 = vunpack.c.l.b16 %v2260
          %v3245 = vunpack.c.h.b16 %v2260
          %v3246 = vunpack.c.l.b16 %v2261
          %v3247 = vunpack.c.h.b16 %v2261
          %v3248 = vunpack.c.l.b16 %v2262
          %v3249 = vunpack.c.h.b16 %v2262
          %v3250 = vunpack.c.l.b16 %v2263
          %v3251 = vunpack.c.h.b16 %v2263
          %v3252 = vunpack.c.l.b16 %v2264
          %v3253 = vunpack.c.h.b16 %v2264
          %v3254 = vunpack.c.l.b16 %v2265
          %v3255 = vunpack.c.h.b16 %v2265
          %v3256 = vunpack.c.l.b16 %v2266
          %v3257 = vunpack.c.h.b16 %v2266
          %v3258 = vunpack.c.l.b16 %v2267
          %v3259 = vunpack.c.h.b16 %v2267
          %v3260 = vunpack.c.l.b16 %v2268
          %v3261 = vunpack.c.h.b16 %v2268
          %v3262 = vunpack.c.l.b16 %v2269
          %v3263 = vunpack.c.h.b16 %v2269
          %v3264 = vunpack.c.l.b16 %v2270
          %v3265 = vunpack.c.h.b16 %v2270
          %v3266 = vunpack.c.l.b16 %v2271
          %v3267 = vunpack.c.h.b16 %v2271
          %v3268 = vunpack.c.l.b16 %v2272
          %v3269 = vunpack.c.h.b16 %v2272
          %v3270 = vunpack.c.l.b16 %v2273
          %v3271 = vunpack.c.h.b16 %v2273
          %v3272 = vunpack.c.l.b16 %v2274
          %v3273 = vunpack.c.h.b16 %v2274
          %v3274 = vunpack.c.l.b16 %v2275
          %v3275 = vunpack.c.h.b16 %v2275
          %v3276 = vunpack.c.l.b16 %v2276
          %v3277 = vunpack.c.h.b16 %v2276
          %v3278 = vunpack.c.l.b16 %v2277
          %v3279 = vunpack.c.h.b16 %v2277
          %v3280 = vunpack.c.l.b16 %v2278
          %v3281 = vunpack.c.h.b16 %v2278
          %v3282 = vunpack.c.l.b16 %v2279
          %v3283 = vunpack.c.h.b16 %v2279
          %v3284 = vunpack.c.l.b16 %v2280
          %v3285 = vunpack.c.h.b16 %v2280
          %v3286 = vunpack.c.l.b16 %v2281
          %v3287 = vunpack.c.h.b16 %v2281
          %v3288 = vunpack.c.l.b16 %v2282
          %v3289 = vunpack.c.h.b16 %v2282
          %v3290 = vunpack.c.l.b16 %v2283
          %v3291 = vunpack.c.h.b16 %v2283
          %v3292 = vunpack.c.l.b16 %v2284
          %v3293 = vunpack.c.h.b16 %v2284
          %v3294 = vunpack.c.l.b16 %v2285
          %v3295 = vunpack.c.h.b16 %v2285
          %v3296 = vunpack.c.l.b16 %v2286
          %v3297 = vunpack.c.h.b16 %v2286
          %v3298 = vunpack.c.l.b16 %v2287
          %v3299 = vunpack.c.h.b16 %v2287
          %v3300 = vunpack.c.l.b16 %v2288
          %v3301 = vunpack.c.h.b16 %v2288
          %v3302 = vunpack.c.l.b16 %v2289
          %v3303 = vunpack.c.h.b16 %v2289
          %v3304 = vunpack.c.l.b16 %v2290
          %v3305 = vunpack.c.h.b16 %v2290
          %v3306 = vunpack.c.l.b16 %v2291
          %v3307 = vunpack.c.h.b16 %v2291
          %v3308 = vunpack.c.l.b16 %v2292
          %v3309 = vunpack.c.h.b16 %v2292
          %v3310 = vunpack.c.l.b16 %v2293
          %v3311 = vunpack.c.h.b16 %v2293
          %v3312 = vunpack.c.l.b16 %v2294
          %v3313 = vunpack.c.h.b16 %v2294
          %v3314 = vunpack.c.l.b16 %v2295
          %v3315 = vunpack.c.h.b16 %v2295
          %v3316 = vunpack.c.l.b16 %v2296
          %v3317 = vunpack.c.h.b16 %v2296
          %v3318 = vunpack.c.l.b16 %v2297
          %v3319 = vunpack.c.h.b16 %v2297
          %v3320 = vunpack.c.l.b16 %v2298
          %v3321 = vunpack.c.h.b16 %v2298
          %v3322 = vunpack.c.l.b16 %v2299
          %v3323 = vunpack.c.h.b16 %v2299
          %v3324 = vunpack.c.l.b16 %v2300
          %v3325 = vunpack.c.h.b16 %v2300
          %v3326 = vunpack.c.l.b16 %v2301
          %v3327 = vunpack.c.h.b16 %v2301
          %v3328 = vunpack.c.l.b16 %v2302
          %v3329 = vunpack.c.h.b16 %v2302
          %v3330 = vunpack.c.l.b16 %v2303
          %v3331 = vunpack.c.h.b16 %v2303
          %v3332 = vunpack.c.l.b16 %v2304
          %v3333 = vunpack.c.h.b16 %v2304
          %v3334 = vunpack.c.l.b16 %v2305
          %v3335 = vunpack.c.h.b16 %v2305
          %v3336 = vunpack.c.l.b16 %v2306
          %v3337 = vunpack.c.h.b16 %v2306
          %v3338 = vunpack.c.l.b16 %v2307
          %v3339 = vunpack.c.h.b16 %v2307
          %v3340 = vunpack.c.l.b16 %v2308
          %v3341 = vunpack.c.h.b16 %v2308
          %v3342 = vunpack.c.l.b16 %v2309
          %v3343 = vunpack.c.h.b16 %v2309
          %v3344 = vunpack.c.l.b16 %v2310
          %v3345 = vunpack.c.h.b16 %v2310
          %v3346 = vunpack.c.l.b16 %v2311
          %v3347 = vunpack.c.h.b16 %v2311
          %v3348 = vunpack.c.l.b16 %v2312
          %v3349 = vunpack.c.h.b16 %v2312
          %v3350 = vunpack.c.l.b16 %v2313
          %v3351 = vunpack.c.h.b16 %v2313
          %v3352 = vunpack.c.l.b16 %v2314
          %v3353 = vunpack.c.h.b16 %v2314
          %v3354 = vunpack.c.l.b16 %v2315
          %v3355 = vunpack.c.h.b16 %v2315
          %v3356 = vunpack.c.l.b16 %v2316
          %v3357 = vunpack.c.h.b16 %v2316
          %v3358 = vunpack.c.l.b16 %v2317
          %v3359 = vunpack.c.h.b16 %v2317
          %v3360 = vunpack.c.l.b16 %v2318
          %v3361 = vunpack.c.h.b16 %v2318
          %v3362 = vunpack.c.l.b16 %v2319
          %v3363 = vunpack.c.h.b16 %v2319
          %v3364 = vunpack.c.l.b16 %v2320
          %v3365 = vunpack.c.h.b16 %v2320
          %v3366 = vunpack.c.l.b16 %v2321
          %v3367 = vunpack.c.h.b16 %v2321
          %v3368 = vunpack.c.l.b16 %v2322
          %v3369 = vunpack.c.h.b16 %v2322
          %v3370 = vunpack.c.l.b16 %v2323
          %v3371 = vunpack.c.h.b16 %v2323
          %v3372 = vunpack.c.l.b16 %v2324
          %v3373 = vunpack.c.h.b16 %v2324
          %v3374 = vunpack.c.l.b16 %v2325
          %v3375 = vunpack.c.h.b16 %v2325
          %v3376 = vunpack.c.l.b16 %v2326
          %v3377 = vunpack.c.h.b16 %v2326
          %v3378 = vunpack.c.l.b16 %v2327
          %v3379 = vunpack.c.h.b16 %v2327
          %v3380 = vunpack.c.l.b16 %v2328
          %v3381 = vunpack.c.h.b16 %v2328
          %v3382 = vunpack.c.l.b16 %v2329
          %v3383 = vunpack.c.h.b16 %v2329
          %v3384 = vunpack.c.l.b16 %v2330
          %v3385 = vunpack.c.h.b16 %v2330
          %v3386 = vunpack.c.l.b16 %v2331
          %v3387 = vunpack.c.h.b16 %v2331
          %v3388 = vunpack.c.l.b16 %v2332
          %v3389 = vunpack.c.h.b16 %v2332
          %v3390 = vunpack.c.l.b16 %v2333
          %v3391 = vunpack.c.h.b16 %v2333
          %v3392 = vunpack.c.l.b16 %v2334
          %v3393 = vunpack.c.h.b16 %v2334
          %v3394 = vunpack.c.l.b16 %v2335
          %v3395 = vunpack.c.h.b16 %v2335
          %v3396 = vunpack.c.l.b16 %v2336
          %v3397 = vunpack.c.h.b16 %v2336
          %v3398 = vunpack.c.l.b16 %v2337
          %v3399 = vunpack.c.h.b16 %v2337
          %v3400 = vunpack.c.l.b16 %v2338
          %v3401 = vunpack.c.h.b16 %v2338
          %v3402 = vunpack.c.l.b16 %v2339
          %v3403 = vunpack.c.h.b16 %v2339
          %v3404 = vunpack.c.l.b16 %v2340
          %v3405 = vunpack.c.h.b16 %v2340
          %v3406 = vunpack.c.l.b16 %v2341
          %v3407 = vunpack.c.h.b16 %v2341
          %v3408 = vunpack.c.l.b16 %v2342
          %v3409 = vunpack.c.h.b16 %v2342
          %v3410 = vunpack.c.l.b16 %v2343
          %v3411 = vunpack.c.h.b16 %v2343
          %v3412 = vunpack.c.l.b16 %v2344
          %v3413 = vunpack.c.h.b16 %v2344
          %v3414 = vunpack.c.l.b16 %v2345
          %v3415 = vunpack.c.h.b16 %v2345
          %v3416 = vunpack.c.l.b16 %v2346
          %v3417 = vunpack.c.h.b16 %v2346
          %v3418 = vunpack.c.l.b16 %v2347
          %v3419 = vunpack.c.h.b16 %v2347
          %v3420 = vunpack.c.l.b16 %v2348
          %v3421 = vunpack.c.h.b16 %v2348
          %v3422 = vunpack.c.l.b16 %v2349
          %v3423 = vunpack.c.h.b16 %v2349
          %v3424 = vunpack.c.l.b16 %v2350
          %v3425 = vunpack.c.h.b16 %v2350
          %v3426 = vunpack.c.l.b16 %v2351
          %v3427 = vunpack.c.h.b16 %v2351
          %v3428 = vunpack.c.l.b16 %v2352
          %v3429 = vunpack.c.h.b16 %v2352
          %v3430 = vunpack.c.l.b16 %v2353
          %v3431 = vunpack.c.h.b16 %v2353
          %v3432 = vunpack.c.l.b16 %v2354
          %v3433 = vunpack.c.h.b16 %v2354
          %v3434 = vunpack.c.l.b16 %v2355
          %v3435 = vunpack.c.h.b16 %v2355
          %v3436 = vunpack.c.l.b16 %v2356
          %v3437 = vunpack.c.h.b16 %v2356
          %v3438 = vunpack.c.l.b16 %v2357
          %v3439 = vunpack.c.h.b16 %v2357
          %v3440 = vunpack.c.l.b16 %v2358
          %v3441 = vunpack.c.h.b16 %v2358
          %v3442 = vunpack.c.l.b16 %v2359
          %v3443 = vunpack.c.h.b16 %v2359
          %v3444 = vunpack.c.l.b16 %v2360
          %v3445 = vunpack.c.h.b16 %v2360
          %v3446 = vunpack.c.l.b16 %v2361
          %v3447 = vunpack.c.h.b16 %v2361
          %v3448 = vunpack.c.l.b16 %v2362
          %v3449 = vunpack.c.h.b16 %v2362
          %v3450 = vunpack.c.l.b16 %v2363
          %v3451 = vunpack.c.h.b16 %v2363
          %v3452 = vunpack.c.l.b16 %v2364
          %v3453 = vunpack.c.h.b16 %v2364
          %v3454 = vunpack.c.l.b16 %v2365
          %v3455 = vunpack.c.h.b16 %v2365
          %v3456 = vunpack.c.l.b16 %v2366
          %v3457 = vunpack.c.h.b16 %v2366
          %v3458 = vunpack.c.l.b16 %v2367
          %v3459 = vunpack.c.h.b16 %v2367
          %v3460 = vunpack.c.l.b16 %v2368
          %v3461 = vunpack.c.h.b16 %v2368
          %v3462 = vunpack.c.l.b16 %v2369
          %v3463 = vunpack.c.h.b16 %v2369
          %v3464 = vunpack.c.l.b16 %v2370
          %v3465 = vunpack.c.h.b16 %v2370
          %v3466 = vunpack.c.l.b16 %v2371
          %v3467 = vunpack.c.h.b16 %v2371
          %v3468 = vunpack.c.l.b16 %v2372
          %v3469 = vunpack.c.h.b16 %v2372
          %v3470 = vunpack.c.l.b16 %v2373
          %v3471 = vunpack.c.h.b16 %v2373
          %v3472 = vunpack.c.l.b16 %v2374
          %v3473 = vunpack.c.h.b16 %v2374
          %v3474 = vunpack.c.l.b16 %v2375
          %v3475 = vunpack.c.h.b16 %v2375
          %v3476 = vunpack.c.l.b16 %v2376
          %v3477 = vunpack.c.h.b16 %v2376
          %v3478 = vunpack.c.l.b16 %v2377
          %v3479 = vunpack.c.h.b16 %v2377
          %v3480 = vunpack.c.l.b16 %v2378
          %v3481 = vunpack.c.h.b16 %v2378
          %v3482 = vunpack.c.l.b16 %v2379
          %v3483 = vunpack.c.h.b16 %v2379
          %v3484 = vunpack.c.l.b16 %v2380
          %v3485 = vunpack.c.h.b16 %v2380
          %v3486 = vunpack.c.l.b16 %v2381
          %v3487 = vunpack.c.h.b16 %v2381
          %v3488 = vunpack.c.l.b16 %v2382
          %v3489 = vunpack.c.h.b16 %v2382
          %v3490 = vunpack.c.l.b16 %v2383
          %v3491 = vunpack.c.h.b16 %v2383
          %v3492 = vunpack.c.l.b16 %v2384
          %v3493 = vunpack.c.h.b16 %v2384
          %v3494 = vunpack.c.l.b16 %v2385
          %v3495 = vunpack.c.h.b16 %v2385
          %v3496 = vunpack.c.l.b16 %v2386
          %v3497 = vunpack.c.h.b16 %v2386
          %v3498 = vunpack.c.l.b16 %v2387
          %v3499 = vunpack.c.h.b16 %v2387
          %v3500 = vunpack.c.l.b16 %v2388
          %v3501 = vunpack.c.h.b16 %v2388
          %v3502 = vunpack.c.l.b16 %v2389
          %v3503 = vunpack.c.h.b16 %v2389
          %v3504 = vunpack.c.l.b16 %v2390
          %v3505 = vunpack.c.h.b16 %v2390
          %v3506 = vunpack.c.l.b16 %v2391
          %v3507 = vunpack.c.h.b16 %v2391
          %v3508 = vunpack.c.l.b16 %v2392
          %v3509 = vunpack.c.h.b16 %v2392
          %v3510 = vunpack.c.l.b16 %v2393
          %v3511 = vunpack.c.h.b16 %v2393
          %v3512 = vunpack.c.l.b16 %v2394
          %v3513 = vunpack.c.h.b16 %v2394
          %v3514 = vunpack.c.l.b16 %v2395
          %v3515 = vunpack.c.h.b16 %v2395
          %v3516 = vunpack.c.l.b16 %v2396
          %v3517 = vunpack.c.h.b16 %v2396
          %v3518 = vunpack.c.l.b16 %v2397
          %v3519 = vunpack.c.h.b16 %v2397
          %v3520 = vunpack.c.l.b16 %v2398
          %v3521 = vunpack.c.h.b16 %v2398
          %v3522 = vunpack.c.l.b16 %v2399
          %v3523 = vunpack.c.h.b16 %v2399
          %v3524 = vunpack.c.l.b16 %v2400
          %v3525 = vunpack.c.h.b16 %v2400
          %v3526 = vunpack.c.l.b16 %v2401
          %v3527 = vunpack.c.h.b16 %v2401
          %v3528 = vunpack.c.l.b16 %v2402
          %v3529 = vunpack.c.h.b16 %v2402
          %v3530 = vunpack.c.l.b16 %v2403
          %v3531 = vunpack.c.h.b16 %v2403
          %v3532 = vunpack.c.l.b16 %v2404
          %v3533 = vunpack.c.h.b16 %v2404
          %v3534 = vunpack.c.l.b16 %v2405
          %v3535 = vunpack.c.h.b16 %v2405
          %v3536 = vunpack.c.l.b16 %v2406
          %v3537 = vunpack.c.h.b16 %v2406
          %v3538 = vunpack.c.l.b16 %v2407
          %v3539 = vunpack.c.h.b16 %v2407
          %v3540 = vunpack.c.l.b16 %v2408
          %v3541 = vunpack.c.h.b16 %v2408
          %v3542 = vunpack.c.l.b16 %v2409
          %v3543 = vunpack.c.h.b16 %v2409
          %v3544 = vunpack.c.l.b16 %v2410
          %v3545 = vunpack.c.h.b16 %v2410
          %v3546 = vunpack.c.l.b16 %v2411
          %v3547 = vunpack.c.h.b16 %v2411
          %v3548 = vunpack.c.l.b16 %v2412
          %v3549 = vunpack.c.h.b16 %v2412
          %v3550 = vunpack.c.l.b16 %v2413
          %v3551 = vunpack.c.h.b16 %v2413
          %v3552 = vunpack.c.l.b16 %v2414
          %v3553 = vunpack.c.h.b16 %v2414
          %v3554 = vunpack.c.l.b16 %v2415
          %v3555 = vunpack.c.h.b16 %v2415
          %v3556 = vunpack.c.l.b16 %v2416
          %v3557 = vunpack.c.h.b16 %v2416
          %v3558 = vunpack.c.l.b16 %v2417
          %v3559 = vunpack.c.h.b16 %v2417
          %v3560 = vunpack.c.l.b16 %v2418
          %v3561 = vunpack.c.h.b16 %v2418
          %v3562 = vunpack.c.l.b16 %v2419
          %v3563 = vunpack.c.h.b16 %v2419
          %v3564 = vunpack.c.l.b16 %v2420
          %v3565 = vunpack.c.h.b16 %v2420
          %v3566 = vunpack.c.l.b16 %v2421
          %v3567 = vunpack.c.h.b16 %v2421
          %v3568 = vunpack.c.l.b16 %v2422
          %v3569 = vunpack.c.h.b16 %v2422
          %v3570 = vunpack.c.l.b16 %v2423
          %v3571 = vunpack.c.h.b16 %v2423
          %v3572 = vunpack.c.l.b16 %v2424
          %v3573 = vunpack.c.h.b16 %v2424
          %v3574 = vunpack.c.l.b16 %v2425
          %v3575 = vunpack.c.h.b16 %v2425
          %v3576 = vunpack.c.l.b16 %v2426
          %v3577 = vunpack.c.h.b16 %v2426
          %v3578 = vunpack.c.l.b16 %v2427
          %v3579 = vunpack.c.h.b16 %v2427
          %v3580 = vunpack.c.l.b16 %v2428
          %v3581 = vunpack.c.h.b16 %v2428
          %v3582 = vpack.c.b16 %v2818, %v2814
          %v3583 = vpack.c.b16 %v2819, %v2815
          %v3584 = vpack.c.b16 %v2820, %v2816
          %v3585 = vpack.c.b16 %v2821, %v2817
          %v3586 = vpack.c.b16 %v2826, %v2822
          %v3587 = vpack.c.b16 %v2827, %v2823
          %v3588 = vpack.c.b16 %v2828, %v2824
          %v3589 = vpack.c.b16 %v2829, %v2825
          %v3590 = vpack.c.b16 %v2834, %v2830
          %v3591 = vpack.c.b16 %v2835, %v2831
          %v3592 = vpack.c.b16 %v2836, %v2832
          %v3593 = vpack.c.b16 %v2837, %v2833
          %v3594 = vpack.c.b16 %v2842, %v2838
          %v3595 = vpack.c.b16 %v2843, %v2839
          %v3596 = vpack.c.b16 %v2844, %v2840
          %v3597 = vpack.c.b16 %v2845, %v2841
          %v3598 = vpack.c.b16 %v2850, %v2846
          %v3599 = vpack.c.b16 %v2851, %v2847
          %v3600 = vpack.c.b16 %v2852, %v2848
          %v3601 = vpack.c.b16 %v2853, %v2849
          %v3602 = vpack.c.b16 %v2858, %v2854
          %v3603 = vpack.c.b16 %v2859, %v2855
          %v3604 = vpack.c.b16 %v2860, %v2856
          %v3605 = vpack.c.b16 %v2861, %v2857
          %v3606 = vpack.c.b16 %v2866, %v2862
          %v3607 = vpack.c.b16 %v2867, %v2863
          %v3608 = vpack.c.b16 %v2868, %v2864
          %v3609 = vpack.c.b16 %v2869, %v2865
          %v3610 = vpack.c.b16 %v2874, %v2870
          %v3611 = vpack.c.b16 %v2875, %v2871
          %v3612 = vpack.c.b16 %v2876, %v2872
          %v3613 = vpack.c.b16 %v2877, %v2873
          %v3614 = vpack.c.b16 %v2882, %v2878
          %v3615 = vpack.c.b16 %v2883, %v2879
          %v3616 = vpack.c.b16 %v2884, %v2880
          %v3617 = vpack.c.b16 %v2885, %v2881
          %v3618 = vpack.c.b16 %v2890, %v2886
          %v3619 = vpack.c.b16 %v2891, %v2887
          %v3620 = vpack.c.b16 %v2892, %v2888
          %v3621 = vpack.c.b16 %v2893, %v2889
          %v3622 = vpack.c.b16 %v2898, %v2894
          %v3623 = vpack.c.b16 %v2899, %v2895
          %v3624 = vpack.c.b16 %v2900, %v2896
          %v3625 = vpack.c.b16 %v2901, %v2897
          %v3626 = vpack.c.b16 %v2906, %v2902
          %v3627 = vpack.c.b16 %v2907, %v2903
          %v3628 = vpack.c.b16 %v2908, %v2904
          %v3629 = vpack.c.b16 %v2909, %v2905
          %v3630 = vpack.c.b16 %v2914, %v2910
          %v3631 = vpack.c.b16 %v2915, %v2911
          %v3632 = vpack.c.b16 %v2916, %v2912
          %v3633 = vpack.c.b16 %v2917, %v2913
          %v3634 = vpack.c.b16 %v2922, %v2918
          %v3635 = vpack.c.b16 %v2923, %v2919
          %v3636 = vpack.c.b16 %v2924, %v2920
          %v3637 = vpack.c.b16 %v2925, %v2921
          %v3638 = vpack.c.b16 %v2930, %v2926
          %v3639 = vpack.c.b16 %v2931, %v2927
          %v3640 = vpack.c.b16 %v2932, %v2928
          %v3641 = vpack.c.b16 %v2933, %v2929
          %v3642 = vpack.c.b16 %v2938, %v2934
          %v3643 = vpack.c.b16 %v2939, %v2935
          %v3644 = vpack.c.b16 %v2940, %v2936
          %v3645 = vpack.c.b16 %v2941, %v2937
          %v3646 = vpack.c.b16 %v2946, %v2942
          %v3647 = vpack.c.b16 %v2947, %v2943
          %v3648 = vpack.c.b16 %v2948, %v2944
          %v3649 = vpack.c.b16 %v2949, %v2945
          %v3650 = vpack.c.b16 %v2954, %v2950
          %v3651 = vpack.c.b16 %v2955, %v2951
          %v3652 = vpack.c.b16 %v2956, %v2952
          %v3653 = vpack.c.b16 %v2957, %v2953
          %v3654 = vpack.c.b16 %v2962, %v2958
          %v3655 = vpack.c.b16 %v2963, %v2959
          %v3656 = vpack.c.b16 %v2964, %v2960
          %v3657 = vpack.c.b16 %v2965, %v2961
          %v3658 = vpack.c.b16 %v2970, %v2966
          %v3659 = vpack.c.b16 %v2971, %v2967
          %v3660 = vpack.c.b16 %v2972, %v2968
          %v3661 = vpack.c.b16 %v2973, %v2969
          %v3662 = vpack.c.b16 %v2978, %v2974
          %v3663 = vpack.c.b16 %v2979, %v2975
          %v3664 = vpack.c.b16 %v2980, %v2976
          %v3665 = vpack.c.b16 %v2981, %v2977
          %v3666 = vpack.c.b16 %v2986, %v2982
          %v3667 = vpack.c.b16 %v2987, %v2983
          %v3668 = vpack.c.b16 %v2988, %v2984
          %v3669 = vpack.c.b16 %v2989, %v2985
          %v3670 = vpack.c.b16 %v2994, %v2990
          %v3671 = vpack.c.b16 %v2995, %v2991
          %v3672 = vpack.c.b16 %v2996, %v2992
          %v3673 = vpack.c.b16 %v2997, %v2993
          %v3674 = vpack.c.b16 %v3002, %v2998
          %v3675 = vpack.c.b16 %v3003, %v2999
          %v3676 = vpack.c.b16 %v3004, %v3000
          %v3677 = vpack.c.b16 %v3005, %v3001
          %v3678 = vpack.c.b16 %v3010, %v3006
          %v3679 = vpack.c.b16 %v3011, %v3007
          %v3680 = vpack.c.b16 %v3012, %v3008
          %v3681 = vpack.c.b16 %v3013, %v3009
          %v3682 = vpack.c.b16 %v3018, %v3014
          %v3683 = vpack.c.b16 %v3019, %v3015
          %v3684 = vpack.c.b16 %v3020, %v3016
          %v3685 = vpack.c.b16 %v3021, %v3017
          %v3686 = vpack.c.b16 %v3026, %v3022
          %v3687 = vpack.c.b16 %v3027, %v3023
          %v3688 = vpack.c.b16 %v3028, %v3024
          %v3689 = vpack.c.b16 %v3029, %v3025
          %v3690 = vpack.c.b16 %v3034, %v3030
          %v3691 = vpack.c.b16 %v3035, %v3031
          %v3692 = vpack.c.b16 %v3036, %v3032
          %v3693 = vpack.c.b16 %v3037, %v3033
          %v3694 = vpack.c.b16 %v3042, %v3038
          %v3695 = vpack.c.b16 %v3043, %v3039
          %v3696 = vpack.c.b16 %v3044, %v3040
          %v3697 = vpack.c.b16 %v3045, %v3041
          %v3698 = vpack.c.b16 %v3050, %v3046
          %v3699 = vpack.c.b16 %v3051, %v3047
          %v3700 = vpack.c.b16 %v3052, %v3048
          %v3701 = vpack.c.b16 %v3053, %v3049
          %v3702 = vpack.c.b16 %v3058, %v3054
          %v3703 = vpack.c.b16 %v3059, %v3055
          %v3704 = vpack.c.b16 %v3060, %v3056
          %v3705 = vpack.c.b16 %v3061, %v3057
          %v3706 = vpack.c.b16 %v3066, %v3062
          %v3707 = vpack.c.b16 %v3067, %v3063
          %v3708 = vpack.c.b16 %v3068, %v3064
          %v3709 = vpack.c.b16 %v3069, %v3065
          %v3710 = vpack.c.b16 %v3074, %v3070
          %v3711 = vpack.c.b16 %v3075, %v3071
          %v3712 = vpack.c.b16 %v3076, %v3072
          %v3713 = vpack.c.b16 %v3077, %v3073
          %v3714 = vpack.c.b16 %v3082, %v3078
          %v3715 = vpack.c.b16 %v3083, %v3079
          %v3716 = vpack.c.b16 %v3084, %v3080
          %v3717 = vpack.c.b16 %v3085, %v3081
          %v3718 = vpack.c.b16 %v3090, %v3086
          %v3719 = vpack.c.b16 %v3091, %v3087
          %v3720 = vpack.c.b16 %v3092, %v3088
          %v3721 = vpack.c.b16 %v3093, %v3089
          %v3722 = vpack.c.b16 %v3098, %v3094
          %v3723 = vpack.c.b16 %v3099, %v3095
          %v3724 = vpack.c.b16 %v3100, %v3096
          %v3725 = vpack.c.b16 %v3101, %v3097
          %v3726 = vpack.c.b16 %v3106, %v3102
          %v3727 = vpack.c.b16 %v3107, %v3103
          %v3728 = vpack.c.b16 %v3108, %v3104
          %v3729 = vpack.c.b16 %v3109, %v3105
          %v3730 = vpack.c.b16 %v3114, %v3110
          %v3731 = vpack.c.b16 %v3115, %v3111
          %v3732 = vpack.c.b16 %v3116, %v3112
          %v3733 = vpack.c.b16 %v3117, %v3113
          %v3734 = vpack.c.b16 %v3122, %v3118
          %v3735 = vpack.c.b16 %v3123, %v3119
          %v3736 = vpack.c.b16 %v3124, %v3120
          %v3737 = vpack.c.b16 %v3125, %v3121
          %v3738 = vpack.c.b16 %v3130, %v3126
          %v3739 = vpack.c.b16 %v3131, %v3127
          %v3740 = vpack.c.b16 %v3132, %v3128
          %v3741 = vpack.c.b16 %v3133, %v3129
          %v3742 = vpack.c.b16 %v3138, %v3134
          %v3743 = vpack.c.b16 %v3139, %v3135
          %v3744 = vpack.c.b16 %v3140, %v3136
          %v3745 = vpack.c.b16 %v3141, %v3137
          %v3746 = vpack.c.b16 %v3146, %v3142
          %v3747 = vpack.c.b16 %v3147, %v3143
          %v3748 = vpack.c.b16 %v3148, %v3144
          %v3749 = vpack.c.b16 %v3149, %v3145
          %v3750 = vpack.c.b16 %v3154, %v3150
          %v3751 = vpack.c.b16 %v3155, %v3151
          %v3752 = vpack.c.b16 %v3156, %v3152
          %v3753 = vpack.c.b16 %v3157, %v3153
          %v3754 = vpack.c.b16 %v3162, %v3158
          %v3755 = vpack.c.b16 %v3163, %v3159
          %v3756 = vpack.c.b16 %v3164, %v3160
          %v3757 = vpack.c.b16 %v3165, %v3161
          %v3758 = vpack.c.b16 %v3170, %v3166
          %v3759 = vpack.c.b16 %v3171, %v3167
          %v3760 = vpack.c.b16 %v3172, %v3168
          %v3761 = vpack.c.b16 %v3173, %v3169
          %v3762 = vpack.c.b16 %v3178, %v3174
          %v3763 = vpack.c.b16 %v3179, %v3175
          %v3764 = vpack.c.b16 %v3180, %v3176
          %v3765 = vpack.c.b16 %v3181, %v3177
          %v3766 = vpack.c.b16 %v3186, %v3182
          %v3767 = vpack.c.b16 %v3187, %v3183
          %v3768 = vpack.c.b16 %v3188, %v3184
          %v3769 = vpack.c.b16 %v3189, %v3185
          %v3770 = vpack.c.b16 %v3194, %v3190
          %v3771 = vpack.c.b16 %v3195, %v3191
          %v3772 = vpack.c.b16 %v3196, %v3192
          %v3773 = vpack.c.b16 %v3197, %v3193
          %v3774 = vpack.c.b16 %v3202, %v3198
          %v3775 = vpack.c.b16 %v3203, %v3199
          %v3776 = vpack.c.b16 %v3204, %v3200
          %v3777 = vpack.c.b16 %v3205, %v3201
          %v3778 = vpack.c.b16 %v3210, %v3206
          %v3779 = vpack.c.b16 %v3211, %v3207
          %v3780 = vpack.c.b16 %v3212, %v3208
          %v3781 = vpack.c.b16 %v3213, %v3209
          %v3782 = vpack.c.b16 %v3218, %v3214
          %v3783 = vpack.c.b16 %v3219, %v3215
          %v3784 = vpack.c.b16 %v3220, %v3216
          %v3785 = vpack.c.b16 %v3221, %v3217
          %v3786 = vpack.c.b16 %v3226, %v3222
          %v3787 = vpack.c.b16 %v3227, %v3223
          %v3788 = vpack.c.b16 %v3228, %v3224
          %v3789 = vpack.c.b16 %v3229, %v3225
          %v3790 = vpack.c.b16 %v3234, %v3230
          %v3791 = vpack.c.b16 %v3235, %v3231
          %v3792 = vpack.c.b16 %v3236, %v3232
          %v3793 = vpack.c.b16 %v3237, %v3233
          %v3794 = vpack.c.b16 %v3242, %v3238
          %v3795 = vpack.c.b16 %v3243, %v3239
          %v3796 = vpack.c.b16 %v3244, %v3240
          %v3797 = vpack.c.b16 %v3245, %v3241
          %v3798 = vpack.c.b16 %v3250, %v3246
          %v3799 = vpack.c.b16 %v3251, %v3247
          %v3800 = vpack.c.b16 %v3252, %v3248
          %v3801 = vpack.c.b16 %v3253, %v3249
          %v3802 = vpack.c.b16 %v3258, %v3254
          %v3803 = vpack.c.b16 %v3259, %v3255
          %v3804 = vpack.c.b16 %v3260, %v3256
          %v3805 = vpack.c.b16 %v3261, %v3257
          %v3806 = vpack.c.b16 %v3266, %v3262
          %v3807 = vpack.c.b16 %v3267, %v3263
          %v3808 = vpack.c.b16 %v3268, %v3264
          %v3809 = vpack.c.b16 %v3269, %v3265
          %v3810 = vpack.c.b16 %v3274, %v3270
          %v3811 = vpack.c.b16 %v3275, %v3271
          %v3812 = vpack.c.b16 %v3276, %v3272
          %v3813 = vpack.c.b16 %v3277, %v3273
          %v3814 = vpack.c.b16 %v3282, %v3278
          %v3815 = vpack.c.b16 %v3283, %v3279
          %v3816 = vpack.c.b16 %v3284, %v3280
          %v3817 = vpack.c.b16 %v3285, %v3281
          %v3818 = vpack.c.b16 %v3290, %v3286
          %v3819 = vpack.c.b16 %v3291, %v3287
          %v3820 = vpack.c.b16 %v3292, %v3288
          %v3821 = vpack.c.b16 %v3293, %v3289
          %v3822 = vpack.c.b16 %v3298, %v3294
          %v3823 = vpack.c.b16 %v3299, %v3295
          %v3824 = vpack.c.b16 %v3300, %v3296
          %v3825 = vpack.c.b16 %v3301, %v3297
          %v3826 = vpack.c.b16 %v3306, %v3302
          %v3827 = vpack.c.b16 %v3307, %v3303
          %v3828 = vpack.c.b16 %v3308, %v3304
          %v3829 = vpack.c.b16 %v3309, %v3305
          %v3830 = vpack.c.b16 %v3314, %v3310
          %v3831 = vpack.c.b16 %v3315, %v3311
          %v3832 = vpack.c.b16 %v3316, %v3312
          %v3833 = vpack.c.b16 %v3317, %v3313
          %v3834 = vpack.c.b16 %v3322, %v3318
          %v3835 = vpack.c.b16 %v3323, %v3319
          %v3836 = vpack.c.b16 %v3324, %v3320
          %v3837 = vpack.c.b16 %v3325, %v3321
          %v3838 = vpack.c.b16 %v3330, %v3326
          %v3839 = vpack.c.b16 %v3331, %v3327
          %v3840 = vpack.c.b16 %v3332, %v3328
          %v3841 = vpack.c.b16 %v3333, %v3329
          %v3842 = vpack.c.b16 %v3338, %v3334
          %v3843 = vpack.c.b16 %v3339, %v3335
          %v3844 = vpack.c.b16 %v3340, %v3336
          %v3845 = vpack.c.b16 %v3341, %v3337
          %v3846 = vpack.c.b16 %v3346, %v3342
          %v3847 = vpack.c.b16 %v3347, %v3343
          %v3848 = vpack.c.b16 %v3348, %v3344
          %v3849 = vpack.c.b16 %v3349, %v3345
          %v3850 = vpack.c.b16 %v3354, %v3350
          %v3851 = vpack.c.b16 %v3355, %v3351
          %v3852 = vpack.c.b16 %v3356, %v3352
          %v3853 = vpack.c.b16 %v3357, %v3353
          %v3854 = vpack.c.b16 %v3362, %v3358
          %v3855 = vpack.c.b16 %v3363, %v3359
          %v3856 = vpack.c.b16 %v3364, %v3360
          %v3857 = vpack.c.b16 %v3365, %v3361
          %v3858 = vpack.c.b16 %v3370, %v3366
          %v3859 = vpack.c.b16 %v3371, %v3367
          %v3860 = vpack.c.b16 %v3372, %v3368
          %v3861 = vpack.c.b16 %v3373, %v3369
          %v3862 = vpack.c.b16 %v3378, %v3374
          %v3863 = vpack.c.b16 %v3379, %v3375
          %v3864 = vpack.c.b16 %v3380, %v3376
          %v3865 = vpack.c.b16 %v3381, %v3377
          %v3866 = vpack.c.b16 %v3386, %v3382
          %v3867 = vpack.c.b16 %v3387, %v3383
          %v3868 = vpack.c.b16 %v3388, %v3384
          %v3869 = vpack.c.b16 %v3389, %v3385
          %v3870 = vpack.c.b16 %v3394, %v3390
          %v3871 = vpack.c.b16 %v3395, %v3391
          %v3872 = vpack.c.b16 %v3396, %v3392
          %v3873 = vpack.c.b16 %v3397, %v3393
          %v3874 = vpack.c.b16 %v3402, %v3398
          %v3875 = vpack.c.b16 %v3403, %v3399
          %v3876 = vpack.c.b16 %v3404, %v3400
          %v3877 = vpack.c.b16 %v3405, %v3401
          %v3878 = vpack.c.b16 %v3410, %v3406
          %v3879 = vpack.c.b16 %v3411, %v3407
          %v3880 = vpack.c.b16 %v3412, %v3408
          %v3881 = vpack.c.b16 %v3413, %v3409
          %v3882 = vpack.c.b16 %v3418, %v3414
          %v3883 = vpack.c.b16 %v3419, %v3415
          %v3884 = vpack.c.b16 %v3420, %v3416
          %v3885 = vpack.c.b16 %v3421, %v3417
          %v3886 = vpack.c.b16 %v3426, %v3422
          %v3887 = vpack.c.b16 %v3427, %v3423
          %v3888 = vpack.c.b16 %v3428, %v3424
          %v3889 = vpack.c.b16 %v3429, %v3425
          %v3890 = vpack.c.b16 %v3434, %v3430
          %v3891 = vpack.c.b16 %v3435, %v3431
          %v3892 = vpack.c.b16 %v3436, %v3432
          %v3893 = vpack.c.b16 %v3437, %v3433
          %v3894 = vpack.c.b16 %v3442, %v3438
          %v3895 = vpack.c.b16 %v3443, %v3439
          %v3896 = vpack.c.b16 %v3444, %v3440
          %v3897 = vpack.c.b16 %v3445, %v3441
          %v3898 = vpack.c.b16 %v3450, %v3446
          %v3899 = vpack.c.b16 %v3451, %v3447
          %v3900 = vpack.c.b16 %v3452, %v3448
          %v3901 = vpack.c.b16 %v3453, %v3449
          %v3902 = vpack.c.b16 %v3458, %v3454
          %v3903 = vpack.c.b16 %v3459, %v3455
          %v3904 = vpack.c.b16 %v3460, %v3456
          %v3905 = vpack.c.b16 %v3461, %v3457
          %v3906 = vpack.c.b16 %v3466, %v3462
          %v3907 = vpack.c.b16 %v3467, %v3463
          %v3908 = vpack.c.b16 %v3468, %v3464
          %v3909 = vpack.c.b16 %v3469, %v3465
          %v3910 = vpack.c.b16 %v3474, %v3470
          %v3911 = vpack.c.b16 %v3475, %v3471
          %v3912 = vpack.c.b16 %v3476, %v3472
          %v3913 = vpack.c.b16 %v3477, %v3473
          %v3914 = vpack.c.b16 %v3482, %v3478
          %v3915 = vpack.c.b16 %v3483, %v3479
          %v3916 = vpack.c.b16 %v3484, %v3480
          %v3917 = vpack.c.b16 %v3485, %v3481
          %v3918 = vpack.c.b16 %v3490, %v3486
          %v3919 = vpack.c.b16 %v3491, %v3487
          %v3920 = vpack.c.b16 %v3492, %v3488
          %v3921 = vpack.c.b16 %v3493, %v3489
          %v3922 = vpack.c.b16 %v3498, %v3494
          %v3923 = vpack.c.b16 %v3499, %v3495
          %v3924 = vpack.c.b16 %v3500, %v3496
          %v3925 = vpack.c.b16 %v3501, %v3497
          %v3926 = vpack.c.b16 %v3506, %v3502
          %v3927 = vpack.c.b16 %v3507, %v3503
          %v3928 = vpack.c.b16 %v3508, %v3504
          %v3929 = vpack.c.b16 %v3509, %v3505
          %v3930 = vpack.c.b16 %v3514, %v3510
          %v3931 = vpack.c.b16 %v3515, %v3511
          %v3932 = vpack.c.b16 %v3516, %v3512
          %v3933 = vpack.c.b16 %v3517, %v3513
          %v3934 = vpack.c.b16 %v3522, %v3518
          %v3935 = vpack.c.b16 %v3523, %v3519
          %v3936 = vpack.c.b16 %v3524, %v3520
          %v3937 = vpack.c.b16 %v3525, %v3521
          %v3938 = vpack.c.b16 %v3530, %v3526
          %v3939 = vpack.c.b16 %v3531, %v3527
          %v3940 = vpack.c.b16 %v3532, %v3528
          %v3941 = vpack.c.b16 %v3533, %v3529
          %v3942 = vpack.c.b16 %v3538, %v3534
          %v3943 = vpack.c.b16 %v3539, %v3535
          %v3944 = vpack.c.b16 %v3540, %v3536
          %v3945 = vpack.c.b16 %v3541, %v3537
          %v3946 = vpack.c.b16 %v3546, %v3542
          %v3947 = vpack.c.b16 %v3547, %v3543
          %v3948 = vpack.c.b16 %v3548, %v3544
          %v3949 = vpack.c.b16 %v3549, %v3545
          %v3950 = vpack.c.b16 %v3554, %v3550
          %v3951 = vpack.c.b16 %v3555, %v3551
          %v3952 = vpack.c.b16 %v3556, %v3552
          %v3953 = vpack.c.b16 %v3557, %v3553
          %v3954 = vpack.c.b16 %v3562, %v3558
          %v3955 = vpack.c.b16 %v3563, %v3559
          %v3956 = vpack.c.b16 %v3564, %v3560
          %v3957 = vpack.c.b16 %v3565, %v3561
          %v3958 = vpack.c.b16 %v3570, %v3566
          %v3959 = vpack.c.b16 %v3571, %v3567
          %v3960 = vpack.c.b16 %v3572, %v3568
          %v3961 = vpack.c.b16 %v3573, %v3569
          %v3962 = vpack.c.b16 %v3578, %v3574
          %v3963 = vpack.c.b16 %v3579, %v3575
          %v3964 = vpack.c.b16 %v3580, %v3576
          %v3965 = vpack.c.b16 %v3581, %v3577
          %v4351 = vlaneseq
          %v4352 = vshrl.u32 %v4351, 7
          %v4353 = vsub.s32 0, %v4352
          %v4354 = vrot.slane %v2429, %v4353
          %v4355 = vlaneseq
          %v4356 = vshrl.u32 %v4355, 7
          %v4357 = vsub.s32 1, %v4356
          %v4358 = vrot.slane %v2429, %v4357
          %v4359 = vlaneseq
          %v4360 = vshrl.u32 %v4359, 7
          %v4361 = vsub.s32 2, %v4360
          %v4362 = vrot.slane %v2429, %v4361
          %v4363 = vlaneseq
          %v4364 = vshrl.u32 %v4363, 7
          %v4365 = vsub.s32 3, %v4364
          %v4366 = vrot.slane %v2429, %v4365
          %4371 = vmatprep.subr.bf16.mxu0 %v3611
          %4372 = vmatpush1.bf16.msra.mxu0 %v3610
          %4373 = vmatprep.subr.bf16.mxu0 %v3607
          %4374 = vmatpush1.bf16.msra.mxu0 %v3606
          %4375 = vmatprep.subr.bf16.mxu0 %v3603
          %4376 = vmatpush1.bf16.msra.mxu0 %v3602
          %4377 = vmatprep.subr.bf16.mxu0 %v3599
          %4378 = vmatpush1.bf16.msra.mxu0 %v3598
          %4379 = vmatprep.subr.bf16.mxu0 %v3595
          %4380 = vmatpush1.bf16.msra.mxu0 %v3594
          %4381 = vmatprep.subr.bf16.mxu0 %v3591
          %4382 = vmatpush1.bf16.msra.mxu0 %v3590
          %4383 = vmatprep.subr.bf16.mxu0 %v3587
          %4384 = vmatpush1.bf16.msra.mxu0 %v3586
          %4385 = vmatprep.subr.bf16.mxu0 %v3583
          %4386 = vmatpush1.bf16.msra.mxu0 %v3582
          %4387 = vmatprep.subr.bf16.mxu0 %v3643
          %4388 = vmatpush2.bf16.msra.mxu0 %v3642
          %4389 = vmatprep.subr.bf16.mxu0 %v3639
          %4390 = vmatpush2.bf16.msra.mxu0 %v3638
          %4391 = vmatprep.subr.bf16.mxu0 %v3635
          %4392 = vmatpush2.bf16.msra.mxu0 %v3634
          %4393 = vmatprep.subr.bf16.mxu0 %v3631
          %4394 = vmatpush2.bf16.msra.mxu0 %v3630
          %4395 = vmatprep.subr.bf16.mxu0 %v3627
          %4396 = vmatpush2.bf16.msra.mxu0 %v3626
          %4397 = vmatprep.subr.bf16.mxu0 %v3623
          %4398 = vmatpush2.bf16.msra.mxu0 %v3622
          %4399 = vmatprep.subr.bf16.mxu0 %v3619
          %4400 = vmatpush2.bf16.msra.mxu0 %v3618
          %4401 = vmatprep.subr.bf16.mxu0 %v3615
          %4402 = vmatpush2.bf16.msra.mxu0 %v3614
          %4403 = vmatprep.mubr.bf16.mxu0 %v2034
          %4404 = vmatmul.mubr.bf16.gmra.mxu0 %v2033
          %v4405 = vpop.f32.mrf.mxu0
          %v4406 = vadd.f32 %v4354, %v4405
          %v4407 = vpop.f32.mrf.mxu0
          %v4408 = vadd.f32 %v4358, %v4407
          %v4409 = vpop.f32.mrf.mxu0
          %v4410 = vpop.f32.mrf.mxu0
          %4411 = vdwg.mxu0
          %4412 = vmatprep.subr.bf16.mxu0 %v3675
          %4413 = vmatpush1.bf16.msra.mxu0 %v3674
          %4414 = vmatprep.subr.bf16.mxu0 %v3671
          %4415 = vmatpush1.bf16.msra.mxu0 %v3670
          %4416 = vmatprep.subr.bf16.mxu0 %v3667
          %4417 = vmatpush1.bf16.msra.mxu0 %v3666
          %4418 = vmatprep.subr.bf16.mxu0 %v3663
          %4419 = vmatpush1.bf16.msra.mxu0 %v3662
          %4420 = vmatprep.subr.bf16.mxu0 %v3659
          %4421 = vmatpush1.bf16.msra.mxu0 %v3658
          %4422 = vmatprep.subr.bf16.mxu0 %v3655
          %4423 = vmatpush1.bf16.msra.mxu0 %v3654
          %4424 = vmatprep.subr.bf16.mxu0 %v3651
          %4425 = vmatpush1.bf16.msra.mxu0 %v3650
          %4426 = vmatprep.subr.bf16.mxu0 %v3647
          %4427 = vmatpush1.bf16.msra.mxu0 %v3646
          %4428 = vmatprep.subr.bf16.mxu0 %v3707
          %4429 = vmatpush2.bf16.msra.mxu0 %v3706
          %4430 = vmatprep.subr.bf16.mxu0 %v3703
          %4431 = vmatpush2.bf16.msra.mxu0 %v3702
          %4432 = vmatprep.subr.bf16.mxu0 %v3699
          %4433 = vmatpush2.bf16.msra.mxu0 %v3698
          %4434 = vmatprep.subr.bf16.mxu0 %v3695
          %4435 = vmatpush2.bf16.msra.mxu0 %v3694
          %4436 = vmatprep.subr.bf16.mxu0 %v3691
          %4437 = vmatpush2.bf16.msra.mxu0 %v3690
          %4438 = vmatprep.subr.bf16.mxu0 %v3687
          %4439 = vmatpush2.bf16.msra.mxu0 %v3686
          %4440 = vmatprep.subr.bf16.mxu0 %v3683
          %4441 = vmatpush2.bf16.msra.mxu0 %v3682
          %4442 = vmatprep.subr.bf16.mxu0 %v3679
          %4443 = vmatpush2.bf16.msra.mxu0 %v3678
          %4444 = vmatprep.mubr.bf16.mxu0 %v2036
          %4445 = vmatmul.mubr.bf16.gmra.mxu0 %v2035
          %v4446 = vpop.f32.mrf.mxu0
          %v4447 = vadd.f32 %v4406, %v4446
          %v4448 = vpop.f32.mrf.mxu0
          %v4449 = vadd.f32 %v4408, %v4448
          %v4450 = vpop.f32.mrf.mxu0
          %v4451 = vpop.f32.mrf.mxu0
          %4452 = vdwg.mxu0
          %4453 = vmatprep.subr.bf16.mxu0 %v3739
          %4454 = vmatpush1.bf16.msra.mxu0 %v3738
          %4455 = vmatprep.subr.bf16.mxu0 %v3735
          %4456 = vmatpush1.bf16.msra.mxu0 %v3734
          %4457 = vmatprep.subr.bf16.mxu0 %v3731
          %4458 = vmatpush1.bf16.msra.mxu0 %v3730
          %4459 = vmatprep.subr.bf16.mxu0 %v3727
          %4460 = vmatpush1.bf16.msra.mxu0 %v3726
          %4461 = vmatprep.subr.bf16.mxu0 %v3723
          %4462 = vmatpush1.bf16.msra.mxu0 %v3722
          %4463 = vmatprep.subr.bf16.mxu0 %v3719
          %4464 = vmatpush1.bf16.msra.mxu0 %v3718
          %4465 = vmatprep.subr.bf16.mxu0 %v3715
          %4466 = vmatpush1.bf16.msra.mxu0 %v3714
          %4467 = vmatprep.subr.bf16.mxu0 %v3711
          %4468 = vmatpush1.bf16.msra.mxu0 %v3710
          %4469 = vmatprep.subr.bf16.mxu0 %v3771
          %4470 = vmatpush2.bf16.msra.mxu0 %v3770
          %4471 = vmatprep.subr.bf16.mxu0 %v3767
          %4472 = vmatpush2.bf16.msra.mxu0 %v3766
          %4473 = vmatprep.subr.bf16.mxu0 %v3763
          %4474 = vmatpush2.bf16.msra.mxu0 %v3762
          %4475 = vmatprep.subr.bf16.mxu0 %v3759
          %4476 = vmatpush2.bf16.msra.mxu0 %v3758
          %4477 = vmatprep.subr.bf16.mxu0 %v3755
          %4478 = vmatpush2.bf16.msra.mxu0 %v3754
          %4479 = vmatprep.subr.bf16.mxu0 %v3751
          %4480 = vmatpush2.bf16.msra.mxu0 %v3750
          %4481 = vmatprep.subr.bf16.mxu0 %v3747
          %4482 = vmatpush2.bf16.msra.mxu0 %v3746
          %4483 = vmatprep.subr.bf16.mxu0 %v3743
          %4484 = vmatpush2.bf16.msra.mxu0 %v3742
          %4485 = vmatprep.mubr.bf16.mxu0 %v2038
          %4486 = vmatmul.mubr.bf16.gmra.mxu0 %v2037
          %v4487 = vpop.f32.mrf.mxu0
          %v4488 = vadd.f32 %v4447, %v4487
          %v4489 = vpop.f32.mrf.mxu0
          %v4490 = vadd.f32 %v4449, %v4489
          %v4491 = vpop.f32.mrf.mxu0
          %v4492 = vpop.f32.mrf.mxu0
          %4493 = vdwg.mxu0
          %4494 = vmatprep.subr.bf16.mxu0 %v3803
          %4495 = vmatpush1.bf16.msra.mxu0 %v3802
          %4496 = vmatprep.subr.bf16.mxu0 %v3799
          %4497 = vmatpush1.bf16.msra.mxu0 %v3798
          %4498 = vmatprep.subr.bf16.mxu0 %v3795
          %4499 = vmatpush1.bf16.msra.mxu0 %v3794
          %4500 = vmatprep.subr.bf16.mxu0 %v3791
          %4501 = vmatpush1.bf16.msra.mxu0 %v3790
          %4502 = vmatprep.subr.bf16.mxu0 %v3787
          %4503 = vmatpush1.bf16.msra.mxu0 %v3786
          %4504 = vmatprep.subr.bf16.mxu0 %v3783
          %4505 = vmatpush1.bf16.msra.mxu0 %v3782
          %4506 = vmatprep.subr.bf16.mxu0 %v3779
          %4507 = vmatpush1.bf16.msra.mxu0 %v3778
          %4508 = vmatprep.subr.bf16.mxu0 %v3775
          %4509 = vmatpush1.bf16.msra.mxu0 %v3774
          %4510 = vmatprep.subr.bf16.mxu0 %v3835
          %4511 = vmatpush2.bf16.msra.mxu0 %v3834
          %4512 = vmatprep.subr.bf16.mxu0 %v3831
          %4513 = vmatpush2.bf16.msra.mxu0 %v3830
          %4514 = vmatprep.subr.bf16.mxu0 %v3827
          %4515 = vmatpush2.bf16.msra.mxu0 %v3826
          %4516 = vmatprep.subr.bf16.mxu0 %v3823
          %4517 = vmatpush2.bf16.msra.mxu0 %v3822
          %4518 = vmatprep.subr.bf16.mxu0 %v3819
          %4519 = vmatpush2.bf16.msra.mxu0 %v3818
          %4520 = vmatprep.subr.bf16.mxu0 %v3815
          %4521 = vmatpush2.bf16.msra.mxu0 %v3814
          %4522 = vmatprep.subr.bf16.mxu0 %v3811
          %4523 = vmatpush2.bf16.msra.mxu0 %v3810
          %4524 = vmatprep.subr.bf16.mxu0 %v3807
          %4525 = vmatpush2.bf16.msra.mxu0 %v3806
          %4526 = vmatprep.mubr.bf16.mxu0 %v2040
          %4527 = vmatmul.mubr.bf16.gmra.mxu0 %v2039
          %v4528 = vpop.f32.mrf.mxu0
          %v4529 = vadd.f32 %v4488, %v4528
          %v4530 = vpop.f32.mrf.mxu0
          %v4531 = vadd.f32 %v4490, %v4530
          %v4532 = vpop.f32.mrf.mxu0
          %v4533 = vpop.f32.mrf.mxu0
          %4534 = vdwg.mxu0
          %4535 = vmatprep.subr.bf16.mxu0 %v3867
          %4536 = vmatpush1.bf16.msra.mxu0 %v3866
          %4537 = vmatprep.subr.bf16.mxu0 %v3863
          %4538 = vmatpush1.bf16.msra.mxu0 %v3862
          %4539 = vmatprep.subr.bf16.mxu0 %v3859
          %4540 = vmatpush1.bf16.msra.mxu0 %v3858
          %4541 = vmatprep.subr.bf16.mxu0 %v3855
          %4542 = vmatpush1.bf16.msra.mxu0 %v3854
          %4543 = vmatprep.subr.bf16.mxu0 %v3851
          %4544 = vmatpush1.bf16.msra.mxu0 %v3850
          %4545 = vmatprep.subr.bf16.mxu0 %v3847
          %4546 = vmatpush1.bf16.msra.mxu0 %v3846
          %4547 = vmatprep.subr.bf16.mxu0 %v3843
          %4548 = vmatpush1.bf16.msra.mxu0 %v3842
          %4549 = vmatprep.subr.bf16.mxu0 %v3839
          %4550 = vmatpush1.bf16.msra.mxu0 %v3838
          %4551 = vmatprep.subr.bf16.mxu0 %v3899
          %4552 = vmatpush2.bf16.msra.mxu0 %v3898
          %4553 = vmatprep.subr.bf16.mxu0 %v3895
          %4554 = vmatpush2.bf16.msra.mxu0 %v3894
          %4555 = vmatprep.subr.bf16.mxu0 %v3891
          %4556 = vmatpush2.bf16.msra.mxu0 %v3890
          %4557 = vmatprep.subr.bf16.mxu0 %v3887
          %4558 = vmatpush2.bf16.msra.mxu0 %v3886
          %4559 = vmatprep.subr.bf16.mxu0 %v3883
          %4560 = vmatpush2.bf16.msra.mxu0 %v3882
          %4561 = vmatprep.subr.bf16.mxu0 %v3879
          %4562 = vmatpush2.bf16.msra.mxu0 %v3878
          %4563 = vmatprep.subr.bf16.mxu0 %v3875
          %4564 = vmatpush2.bf16.msra.mxu0 %v3874
          %4565 = vmatprep.subr.bf16.mxu0 %v3871
          %4566 = vmatpush2.bf16.msra.mxu0 %v3870
          %4567 = vmatprep.mubr.bf16.mxu0 %v2042
          %4568 = vmatmul.mubr.bf16.gmra.mxu0 %v2041
          %v4569 = vpop.f32.mrf.mxu0
          %v4570 = vadd.f32 %v4529, %v4569
          %v4571 = vpop.f32.mrf.mxu0
          %v4572 = vadd.f32 %v4531, %v4571
          %v4573 = vpop.f32.mrf.mxu0
          %v4574 = vpop.f32.mrf.mxu0
          %4575 = vdwg.mxu0
          %4576 = vmatprep.subr.bf16.mxu0 %v3931
          %4577 = vmatpush1.bf16.msra.mxu0 %v3930
          %4578 = vmatprep.subr.bf16.mxu0 %v3927
          %4579 = vmatpush1.bf16.msra.mxu0 %v3926
          %4580 = vmatprep.subr.bf16.mxu0 %v3923
          %4581 = vmatpush1.bf16.msra.mxu0 %v3922
          %4582 = vmatprep.subr.bf16.mxu0 %v3919
          %4583 = vmatpush1.bf16.msra.mxu0 %v3918
          %4584 = vmatprep.subr.bf16.mxu0 %v3915
          %4585 = vmatpush1.bf16.msra.mxu0 %v3914
          %4586 = vmatprep.subr.bf16.mxu0 %v3911
          %4587 = vmatpush1.bf16.msra.mxu0 %v3910
          %4588 = vmatprep.subr.bf16.mxu0 %v3907
          %4589 = vmatpush1.bf16.msra.mxu0 %v3906
          %4590 = vmatprep.subr.bf16.mxu0 %v3903
          %4591 = vmatpush1.bf16.msra.mxu0 %v3902
          %4592 = vmatprep.subr.bf16.mxu0 %v3963
          %4593 = vmatpush2.bf16.msra.mxu0 %v3962
          %4594 = vmatprep.subr.bf16.mxu0 %v3959
          %4595 = vmatpush2.bf16.msra.mxu0 %v3958
          %4596 = vmatprep.subr.bf16.mxu0 %v3955
          %4597 = vmatpush2.bf16.msra.mxu0 %v3954
          %4598 = vmatprep.subr.bf16.mxu0 %v3951
          %4599 = vmatpush2.bf16.msra.mxu0 %v3950
          %4600 = vmatprep.subr.bf16.mxu0 %v3947
          %4601 = vmatpush2.bf16.msra.mxu0 %v3946
          %4602 = vmatprep.subr.bf16.mxu0 %v3943
          %4603 = vmatpush2.bf16.msra.mxu0 %v3942
          %4604 = vmatprep.subr.bf16.mxu0 %v3939
          %4605 = vmatpush2.bf16.msra.mxu0 %v3938
          %4606 = vmatprep.subr.bf16.mxu0 %v3935
          %4607 = vmatpush2.bf16.msra.mxu0 %v3934
          %4608 = vmatprep.mubr.bf16.mxu0 %v2044
          %4609 = vmatmul.mubr.bf16.gmra.mxu0 %v2043
          %v4610 = vpop.f32.mrf.mxu0
          %v4611 = vadd.f32 %v4570, %v4610
          %v4612 = vpop.f32.mrf.mxu0
          %v4613 = vadd.f32 %v4572, %v4612
          %v4614 = vpop.f32.mrf.mxu0
          %v4615 = vpop.f32.mrf.mxu0
          %4616 = vdwg.mxu0
          %4617 = vmatprep.subr.bf16.mxu0 %v3613
          %4618 = vmatpush1.bf16.msra.mxu0 %v3612
          %4619 = vmatprep.subr.bf16.mxu0 %v3609
          %4620 = vmatpush1.bf16.msra.mxu0 %v3608
          %4621 = vmatprep.subr.bf16.mxu0 %v3605
          %4622 = vmatpush1.bf16.msra.mxu0 %v3604
          %4623 = vmatprep.subr.bf16.mxu0 %v3601
          %4624 = vmatpush1.bf16.msra.mxu0 %v3600
          %4625 = vmatprep.subr.bf16.mxu0 %v3597
          %4626 = vmatpush1.bf16.msra.mxu0 %v3596
          %4627 = vmatprep.subr.bf16.mxu0 %v3593
          %4628 = vmatpush1.bf16.msra.mxu0 %v3592
          %4629 = vmatprep.subr.bf16.mxu0 %v3589
          %4630 = vmatpush1.bf16.msra.mxu0 %v3588
          %4631 = vmatprep.subr.bf16.mxu0 %v3585
          %4632 = vmatpush1.bf16.msra.mxu0 %v3584
          %4633 = vmatprep.subr.bf16.mxu0 %v3645
          %4634 = vmatpush2.bf16.msra.mxu0 %v3644
          %4635 = vmatprep.subr.bf16.mxu0 %v3641
          %4636 = vmatpush2.bf16.msra.mxu0 %v3640
          %4637 = vmatprep.subr.bf16.mxu0 %v3637
          %4638 = vmatpush2.bf16.msra.mxu0 %v3636
          %4639 = vmatprep.subr.bf16.mxu0 %v3633
          %4640 = vmatpush2.bf16.msra.mxu0 %v3632
          %4641 = vmatprep.subr.bf16.mxu0 %v3629
          %4642 = vmatpush2.bf16.msra.mxu0 %v3628
          %4643 = vmatprep.subr.bf16.mxu0 %v3625
          %4644 = vmatpush2.bf16.msra.mxu0 %v3624
          %4645 = vmatprep.subr.bf16.mxu0 %v3621
          %4646 = vmatpush2.bf16.msra.mxu0 %v3620
          %4647 = vmatprep.subr.bf16.mxu0 %v3617
          %4648 = vmatpush2.bf16.msra.mxu0 %v3616
          %4649 = vmatprep.mubr.bf16.mxu0 %v2034
          %4650 = vmatmul.mubr.bf16.gmra.mxu0 %v2033
          %v4651 = vpop.f32.mrf.mxu0
          %v4652 = vadd.f32 %v4362, %v4651
          %v4653 = vpop.f32.mrf.mxu0
          %v4654 = vadd.f32 %v4366, %v4653
          %v4655 = vpop.f32.mrf.mxu0
          %v4656 = vpop.f32.mrf.mxu0
          %4657 = vdwg.mxu0
          %4658 = vmatprep.subr.bf16.mxu0 %v3677
          %4659 = vmatpush1.bf16.msra.mxu0 %v3676
          %4660 = vmatprep.subr.bf16.mxu0 %v3673
          %4661 = vmatpush1.bf16.msra.mxu0 %v3672
          %4662 = vmatprep.subr.bf16.mxu0 %v3669
          %4663 = vmatpush1.bf16.msra.mxu0 %v3668
          %4664 = vmatprep.subr.bf16.mxu0 %v3665
          %4665 = vmatpush1.bf16.msra.mxu0 %v3664
          %4666 = vmatprep.subr.bf16.mxu0 %v3661
          %4667 = vmatpush1.bf16.msra.mxu0 %v3660
          %4668 = vmatprep.subr.bf16.mxu0 %v3657
          %4669 = vmatpush1.bf16.msra.mxu0 %v3656
          %4670 = vmatprep.subr.bf16.mxu0 %v3653
          %4671 = vmatpush1.bf16.msra.mxu0 %v3652
          %4672 = vmatprep.subr.bf16.mxu0 %v3649
          %4673 = vmatpush1.bf16.msra.mxu0 %v3648
          %4674 = vmatprep.subr.bf16.mxu0 %v3709
          %4675 = vmatpush2.bf16.msra.mxu0 %v3708
          %4676 = vmatprep.subr.bf16.mxu0 %v3705
          %4677 = vmatpush2.bf16.msra.mxu0 %v3704
          %4678 = vmatprep.subr.bf16.mxu0 %v3701
          %4679 = vmatpush2.bf16.msra.mxu0 %v3700
          %4680 = vmatprep.subr.bf16.mxu0 %v3697
          %4681 = vmatpush2.bf16.msra.mxu0 %v3696
          %4682 = vmatprep.subr.bf16.mxu0 %v3693
          %4683 = vmatpush2.bf16.msra.mxu0 %v3692
          %4684 = vmatprep.subr.bf16.mxu0 %v3689
          %4685 = vmatpush2.bf16.msra.mxu0 %v3688
          %4686 = vmatprep.subr.bf16.mxu0 %v3685
          %4687 = vmatpush2.bf16.msra.mxu0 %v3684
          %4688 = vmatprep.subr.bf16.mxu0 %v3681
          %4689 = vmatpush2.bf16.msra.mxu0 %v3680
          %4690 = vmatprep.mubr.bf16.mxu0 %v2036
          %4691 = vmatmul.mubr.bf16.gmra.mxu0 %v2035
          %v4692 = vpop.f32.mrf.mxu0
          %v4693 = vadd.f32 %v4652, %v4692
          %v4694 = vpop.f32.mrf.mxu0
          %v4695 = vadd.f32 %v4654, %v4694
          %v4696 = vpop.f32.mrf.mxu0
          %v4697 = vpop.f32.mrf.mxu0
          %4698 = vdwg.mxu0
          %4699 = vmatprep.subr.bf16.mxu0 %v3741
          %4700 = vmatpush1.bf16.msra.mxu0 %v3740
          %4701 = vmatprep.subr.bf16.mxu0 %v3737
          %4702 = vmatpush1.bf16.msra.mxu0 %v3736
          %4703 = vmatprep.subr.bf16.mxu0 %v3733
          %4704 = vmatpush1.bf16.msra.mxu0 %v3732
          %4705 = vmatprep.subr.bf16.mxu0 %v3729
          %4706 = vmatpush1.bf16.msra.mxu0 %v3728
          %4707 = vmatprep.subr.bf16.mxu0 %v3725
          %4708 = vmatpush1.bf16.msra.mxu0 %v3724
          %4709 = vmatprep.subr.bf16.mxu0 %v3721
          %4710 = vmatpush1.bf16.msra.mxu0 %v3720
          %4711 = vmatprep.subr.bf16.mxu0 %v3717
          %4712 = vmatpush1.bf16.msra.mxu0 %v3716
          %4713 = vmatprep.subr.bf16.mxu0 %v3713
          %4714 = vmatpush1.bf16.msra.mxu0 %v3712
          %4715 = vmatprep.subr.bf16.mxu0 %v3773
          %4716 = vmatpush2.bf16.msra.mxu0 %v3772
          %4717 = vmatprep.subr.bf16.mxu0 %v3769
          %4718 = vmatpush2.bf16.msra.mxu0 %v3768
          %4719 = vmatprep.subr.bf16.mxu0 %v3765
          %4720 = vmatpush2.bf16.msra.mxu0 %v3764
          %4721 = vmatprep.subr.bf16.mxu0 %v3761
          %4722 = vmatpush2.bf16.msra.mxu0 %v3760
          %4723 = vmatprep.subr.bf16.mxu0 %v3757
          %4724 = vmatpush2.bf16.msra.mxu0 %v3756
          %4725 = vmatprep.subr.bf16.mxu0 %v3753
          %4726 = vmatpush2.bf16.msra.mxu0 %v3752
          %4727 = vmatprep.subr.bf16.mxu0 %v3749
          %4728 = vmatpush2.bf16.msra.mxu0 %v3748
          %4729 = vmatprep.subr.bf16.mxu0 %v3745
          %4730 = vmatpush2.bf16.msra.mxu0 %v3744
          %4731 = vmatprep.mubr.bf16.mxu0 %v2038
          %4732 = vmatmul.mubr.bf16.gmra.mxu0 %v2037
          %v4733 = vpop.f32.mrf.mxu0
          %v4734 = vadd.f32 %v4693, %v4733
          %v4735 = vpop.f32.mrf.mxu0
          %v4736 = vadd.f32 %v4695, %v4735
          %v4737 = vpop.f32.mrf.mxu0
          %v4738 = vpop.f32.mrf.mxu0
          %4739 = vdwg.mxu0
          %4740 = vmatprep.subr.bf16.mxu0 %v3805
          %4741 = vmatpush1.bf16.msra.mxu0 %v3804
          %4742 = vmatprep.subr.bf16.mxu0 %v3801
          %4743 = vmatpush1.bf16.msra.mxu0 %v3800
          %4744 = vmatprep.subr.bf16.mxu0 %v3797
          %4745 = vmatpush1.bf16.msra.mxu0 %v3796
          %4746 = vmatprep.subr.bf16.mxu0 %v3793
          %4747 = vmatpush1.bf16.msra.mxu0 %v3792
          %4748 = vmatprep.subr.bf16.mxu0 %v3789
          %4749 = vmatpush1.bf16.msra.mxu0 %v3788
          %4750 = vmatprep.subr.bf16.mxu0 %v3785
          %4751 = vmatpush1.bf16.msra.mxu0 %v3784
          %4752 = vmatprep.subr.bf16.mxu0 %v3781
          %4753 = vmatpush1.bf16.msra.mxu0 %v3780
          %4754 = vmatprep.subr.bf16.mxu0 %v3777
          %4755 = vmatpush1.bf16.msra.mxu0 %v3776
          %4756 = vmatprep.subr.bf16.mxu0 %v3837
          %4757 = vmatpush2.bf16.msra.mxu0 %v3836
          %4758 = vmatprep.subr.bf16.mxu0 %v3833
          %4759 = vmatpush2.bf16.msra.mxu0 %v3832
          %4760 = vmatprep.subr.bf16.mxu0 %v3829
          %4761 = vmatpush2.bf16.msra.mxu0 %v3828
          %4762 = vmatprep.subr.bf16.mxu0 %v3825
          %4763 = vmatpush2.bf16.msra.mxu0 %v3824
          %4764 = vmatprep.subr.bf16.mxu0 %v3821
          %4765 = vmatpush2.bf16.msra.mxu0 %v3820
          %4766 = vmatprep.subr.bf16.mxu0 %v3817
          %4767 = vmatpush2.bf16.msra.mxu0 %v3816
          %4768 = vmatprep.subr.bf16.mxu0 %v3813
          %4769 = vmatpush2.bf16.msra.mxu0 %v3812
          %4770 = vmatprep.subr.bf16.mxu0 %v3809
          %4771 = vmatpush2.bf16.msra.mxu0 %v3808
          %4772 = vmatprep.mubr.bf16.mxu0 %v2040
          %4773 = vmatmul.mubr.bf16.gmra.mxu0 %v2039
          %v4774 = vpop.f32.mrf.mxu0
          %v4775 = vadd.f32 %v4734, %v4774
          %v4776 = vpop.f32.mrf.mxu0
          %v4777 = vadd.f32 %v4736, %v4776
          %v4778 = vpop.f32.mrf.mxu0
          %v4779 = vpop.f32.mrf.mxu0
          %4780 = vdwg.mxu0
          %4781 = vmatprep.subr.bf16.mxu0 %v3869
          %4782 = vmatpush1.bf16.msra.mxu0 %v3868
          %4783 = vmatprep.subr.bf16.mxu0 %v3865
          %4784 = vmatpush1.bf16.msra.mxu0 %v3864
          %4785 = vmatprep.subr.bf16.mxu0 %v3861
          %4786 = vmatpush1.bf16.msra.mxu0 %v3860
          %4787 = vmatprep.subr.bf16.mxu0 %v3857
          %4788 = vmatpush1.bf16.msra.mxu0 %v3856
          %4789 = vmatprep.subr.bf16.mxu0 %v3853
          %4790 = vmatpush1.bf16.msra.mxu0 %v3852
          %4791 = vmatprep.subr.bf16.mxu0 %v3849
          %4792 = vmatpush1.bf16.msra.mxu0 %v3848
          %4793 = vmatprep.subr.bf16.mxu0 %v3845
          %4794 = vmatpush1.bf16.msra.mxu0 %v3844
          %4795 = vmatprep.subr.bf16.mxu0 %v3841
          %4796 = vmatpush1.bf16.msra.mxu0 %v3840
          %4797 = vmatprep.subr.bf16.mxu0 %v3901
          %4798 = vmatpush2.bf16.msra.mxu0 %v3900
          %4799 = vmatprep.subr.bf16.mxu0 %v3897
          %4800 = vmatpush2.bf16.msra.mxu0 %v3896
          %4801 = vmatprep.subr.bf16.mxu0 %v3893
          %4802 = vmatpush2.bf16.msra.mxu0 %v3892
          %4803 = vmatprep.subr.bf16.mxu0 %v3889
          %4804 = vmatpush2.bf16.msra.mxu0 %v3888
          %4805 = vmatprep.subr.bf16.mxu0 %v3885
          %4806 = vmatpush2.bf16.msra.mxu0 %v3884
          %4807 = vmatprep.subr.bf16.mxu0 %v3881
          %4808 = vmatpush2.bf16.msra.mxu0 %v3880
          %4809 = vmatprep.subr.bf16.mxu0 %v3877
          %4810 = vmatpush2.bf16.msra.mxu0 %v3876
          %4811 = vmatprep.subr.bf16.mxu0 %v3873
          %4812 = vmatpush2.bf16.msra.mxu0 %v3872
          %4813 = vmatprep.mubr.bf16.mxu0 %v2042
          %4814 = vmatmul.mubr.bf16.gmra.mxu0 %v2041
          %v4815 = vpop.f32.mrf.mxu0
          %v4816 = vadd.f32 %v4775, %v4815
          %v4817 = vpop.f32.mrf.mxu0
          %v4818 = vadd.f32 %v4777, %v4817
          %v4819 = vpop.f32.mrf.mxu0
          %v4820 = vpop.f32.mrf.mxu0
          %4821 = vdwg.mxu0
          %4822 = vmatprep.subr.bf16.mxu0 %v3933
          %4823 = vmatpush1.bf16.msra.mxu0 %v3932
          %4824 = vmatprep.subr.bf16.mxu0 %v3929
          %4825 = vmatpush1.bf16.msra.mxu0 %v3928
          %4826 = vmatprep.subr.bf16.mxu0 %v3925
          %4827 = vmatpush1.bf16.msra.mxu0 %v3924
          %4828 = vmatprep.subr.bf16.mxu0 %v3921
          %4829 = vmatpush1.bf16.msra.mxu0 %v3920
          %4830 = vmatprep.subr.bf16.mxu0 %v3917
          %4831 = vmatpush1.bf16.msra.mxu0 %v3916
          %4832 = vmatprep.subr.bf16.mxu0 %v3913
          %4833 = vmatpush1.bf16.msra.mxu0 %v3912
          %4834 = vmatprep.subr.bf16.mxu0 %v3909
          %4835 = vmatpush1.bf16.msra.mxu0 %v3908
          %4836 = vmatprep.subr.bf16.mxu0 %v3905
          %4837 = vmatpush1.bf16.msra.mxu0 %v3904
          %4838 = vmatprep.subr.bf16.mxu0 %v3965
          %4839 = vmatpush2.bf16.msra.mxu0 %v3964
          %4840 = vmatprep.subr.bf16.mxu0 %v3961
          %4841 = vmatpush2.bf16.msra.mxu0 %v3960
          %4842 = vmatprep.subr.bf16.mxu0 %v3957
          %4843 = vmatpush2.bf16.msra.mxu0 %v3956
          %4844 = vmatprep.subr.bf16.mxu0 %v3953
          %4845 = vmatpush2.bf16.msra.mxu0 %v3952
          %4846 = vmatprep.subr.bf16.mxu0 %v3949
          %4847 = vmatpush2.bf16.msra.mxu0 %v3948
          %4848 = vmatprep.subr.bf16.mxu0 %v3945
          %4849 = vmatpush2.bf16.msra.mxu0 %v3944
          %4850 = vmatprep.subr.bf16.mxu0 %v3941
          %4851 = vmatpush2.bf16.msra.mxu0 %v3940
          %4852 = vmatprep.subr.bf16.mxu0 %v3937
          %4853 = vmatpush2.bf16.msra.mxu0 %v3936
          %4854 = vmatprep.mubr.bf16.mxu0 %v2044
          %4855 = vmatmul.mubr.bf16.gmra.mxu0 %v2043
          %v4856 = vpop.f32.mrf.mxu0
          %v4857 = vadd.f32 %v4816, %v4856
          %v4858 = vpop.f32.mrf.mxu0
          %v4859 = vadd.f32 %v4818, %v4858
          %v4860 = vpop.f32.mrf.mxu0
          %v4861 = vpop.f32.mrf.mxu0
          %4862 = vdwg.mxu0
          %v4863 = vmax.f32 %v4611, 0.0
          %v4864 = vmax.f32 %v4613, 0.0
          %v4865 = vmax.f32 %v4857, 0.0
          %v4866 = vmax.f32 %v4859, 0.0
          %v4867 = vpack.c.bf16 %v4863, %v4863
          %v4868 = vpack.c.bf16 %v4864, %v4864
          %v4869 = vpack.c.bf16 %v4865, %v4865
          %v4870 = vpack.c.bf16 %v4866, %v4866
          %v4871 = vld [vmem:[#allocation6] sm:$0xff]
          %v4872 = vld [vmem:[#allocation6 + $0x8] sm:$0xff]
          %v4873 = vld [vmem:[#allocation6 + $0x10] sm:$0xff]
          %v4874 = vld [vmem:[#allocation6 + $0x18] sm:$0xff]
          %v4875 = vld [vmem:[#allocation6 + $0x20] sm:$0xff]
          %v4876 = vld [vmem:[#allocation6 + $0x28] sm:$0xff]
          %v4877 = vld [vmem:[#allocation6 + $0x30] sm:$0xff]
          %v4878 = vld [vmem:[#allocation6 + $0x38] sm:$0xff]
          %v4879 = vld [vmem:[#allocation6 + $0x40] sm:$0xff]
          %v4880 = vld [vmem:[#allocation6 + $0x48] sm:$0xff]
          %v4881 = vld [vmem:[#allocation6 + $0x50] sm:$0xff]
          %v4882 = vld [vmem:[#allocation6 + $0x58] sm:$0xff]
          %v4883 = vld [vmem:[#allocation6 + $0x60] sm:$0xff]
          %v4884 = vld [vmem:[#allocation6 + $0x68] sm:$0xff]
          %v4885 = vld [vmem:[#allocation6 + $0x70] sm:$0xff]
          %v4886 = vld [vmem:[#allocation6 + $0x78] sm:$0xff]
          %v4887 = vld [vmem:[#allocation6 + $0x80] sm:$0xff]
          %v4888 = vld [vmem:[#allocation6 + $0x88] sm:$0xff]
          %v4889 = vld [vmem:[#allocation6 + $0x90] sm:$0xff]
          %v4890 = vld [vmem:[#allocation6 + $0x98] sm:$0xff]
          %v4891 = vld [vmem:[#allocation6 + $0xa0] sm:$0xff]
          %v4892 = vld [vmem:[#allocation6 + $0xa8] sm:$0xff]
          %v4893 = vld [vmem:[#allocation6 + $0xb0] sm:$0xff]
          %v4894 = vld [vmem:[#allocation6 + $0xb8] sm:$0xff]
          %v4895 = vld [vmem:[#allocation6 + $0xc0] sm:$0xff]
          %v4896 = vld [vmem:[#allocation6 + $0xc8] sm:$0xff]
          %v4897 = vld [vmem:[#allocation6 + $0xd0] sm:$0xff]
          %v4898 = vld [vmem:[#allocation6 + $0xd8] sm:$0xff]
          %v4899 = vld [vmem:[#allocation6 + $0xe0] sm:$0xff]
          %v4900 = vld [vmem:[#allocation6 + $0xe8] sm:$0xff]
          %v4901 = vld [vmem:[#allocation6 + $0xf0] sm:$0xff]
          %v4902 = vld [vmem:[#allocation6 + $0xf8] sm:$0xff]
          %v4903 = vld [vmem:[#allocation6 + $0x100] sm:$0xff]
          %v4904 = vld [vmem:[#allocation6 + $0x108] sm:$0xff]
          %v4905 = vld [vmem:[#allocation6 + $0x110] sm:$0xff]
          %v4906 = vld [vmem:[#allocation6 + $0x118] sm:$0xff]
          %v4907 = vld [vmem:[#allocation6 + $0x120] sm:$0xff]
          %v4908 = vld [vmem:[#allocation6 + $0x128] sm:$0xff]
          %v4909 = vld [vmem:[#allocation6 + $0x130] sm:$0xff]
          %v4910 = vld [vmem:[#allocation6 + $0x138] sm:$0xff]
          %v4911 = vld [vmem:[#allocation6 + $0x140] sm:$0xff]
          %v4912 = vld [vmem:[#allocation6 + $0x148] sm:$0xff]
          %v4913 = vld [vmem:[#allocation6 + $0x150] sm:$0xff]
          %v4914 = vld [vmem:[#allocation6 + $0x158] sm:$0xff]
          %v4915 = vld [vmem:[#allocation6 + $0x160] sm:$0xff]
          %v4916 = vld [vmem:[#allocation6 + $0x168] sm:$0xff]
          %v4917 = vld [vmem:[#allocation6 + $0x170] sm:$0xff]
          %v4918 = vld [vmem:[#allocation6 + $0x178] sm:$0xff]
          %v4919 = vld [vmem:[#allocation6 + $0x180] sm:$0xff]
          %v4920 = vld [vmem:[#allocation6 + $0x188] sm:$0xff]
          %v4921 = vld [vmem:[#allocation6 + $0x190] sm:$0xff]
          %v4922 = vld [vmem:[#allocation6 + $0x198] sm:$0xff]
          %v4923 = vld [vmem:[#allocation6 + $0x1a0] sm:$0xff]
          %v4924 = vld [vmem:[#allocation6 + $0x1a8] sm:$0xff]
          %v4925 = vld [vmem:[#allocation6 + $0x1b0] sm:$0xff]
          %v4926 = vld [vmem:[#allocation6 + $0x1b8] sm:$0xff]
          %v4927 = vld [vmem:[#allocation6 + $0x1c0] sm:$0xff]
          %v4928 = vld [vmem:[#allocation6 + $0x1c8] sm:$0xff]
          %v4929 = vld [vmem:[#allocation6 + $0x1d0] sm:$0xff]
          %v4930 = vld [vmem:[#allocation6 + $0x1d8] sm:$0xff]
          %v4931 = vld [vmem:[#allocation6 + $0x1e0] sm:$0xff]
          %v4932 = vld [vmem:[#allocation6 + $0x1e8] sm:$0xff]
          %v4933 = vld [vmem:[#allocation6 + $0x1f0] sm:$0xff]
          %v4934 = vld [vmem:[#allocation6 + $0x1f8] sm:$0xff]
          %v4935 = vld [vmem:[%s8] sm:$0x3]
          %v5000 = vunpack.c.l.b16 %v4871
          %v5001 = vunpack.c.h.b16 %v4871
          %v5002 = vunpack.c.l.b16 %v4872
          %v5003 = vunpack.c.h.b16 %v4872
          %v5004 = vunpack.c.l.b16 %v4873
          %v5005 = vunpack.c.h.b16 %v4873
          %v5006 = vunpack.c.l.b16 %v4874
          %v5007 = vunpack.c.h.b16 %v4874
          %v5008 = vunpack.c.l.b16 %v4875
          %v5009 = vunpack.c.h.b16 %v4875
          %v5010 = vunpack.c.l.b16 %v4876
          %v5011 = vunpack.c.h.b16 %v4876
          %v5012 = vunpack.c.l.b16 %v4877
          %v5013 = vunpack.c.h.b16 %v4877
          %v5014 = vunpack.c.l.b16 %v4878
          %v5015 = vunpack.c.h.b16 %v4878
          %v5016 = vunpack.c.l.b16 %v4879
          %v5017 = vunpack.c.h.b16 %v4879
          %v5018 = vunpack.c.l.b16 %v4880
          %v5019 = vunpack.c.h.b16 %v4880
          %v5020 = vunpack.c.l.b16 %v4881
          %v5021 = vunpack.c.h.b16 %v4881
          %v5022 = vunpack.c.l.b16 %v4882
          %v5023 = vunpack.c.h.b16 %v4882
          %v5024 = vunpack.c.l.b16 %v4883
          %v5025 = vunpack.c.h.b16 %v4883
          %v5026 = vunpack.c.l.b16 %v4884
          %v5027 = vunpack.c.h.b16 %v4884
          %v5028 = vunpack.c.l.b16 %v4885
          %v5029 = vunpack.c.h.b16 %v4885
          %v5030 = vunpack.c.l.b16 %v4886
          %v5031 = vunpack.c.h.b16 %v4886
          %v5032 = vunpack.c.l.b16 %v4887
          %v5033 = vunpack.c.h.b16 %v4887
          %v5034 = vunpack.c.l.b16 %v4888
          %v5035 = vunpack.c.h.b16 %v4888
          %v5036 = vunpack.c.l.b16 %v4889
          %v5037 = vunpack.c.h.b16 %v4889
          %v5038 = vunpack.c.l.b16 %v4890
          %v5039 = vunpack.c.h.b16 %v4890
          %v5040 = vunpack.c.l.b16 %v4891
          %v5041 = vunpack.c.h.b16 %v4891
          %v5042 = vunpack.c.l.b16 %v4892
          %v5043 = vunpack.c.h.b16 %v4892
          %v5044 = vunpack.c.l.b16 %v4893
          %v5045 = vunpack.c.h.b16 %v4893
          %v5046 = vunpack.c.l.b16 %v4894
          %v5047 = vunpack.c.h.b16 %v4894
          %v5048 = vunpack.c.l.b16 %v4895
          %v5049 = vunpack.c.h.b16 %v4895
          %v5050 = vunpack.c.l.b16 %v4896
          %v5051 = vunpack.c.h.b16 %v4896
          %v5052 = vunpack.c.l.b16 %v4897
          %v5053 = vunpack.c.h.b16 %v4897
          %v5054 = vunpack.c.l.b16 %v4898
          %v5055 = vunpack.c.h.b16 %v4898
          %v5056 = vunpack.c.l.b16 %v4899
          %v5057 = vunpack.c.h.b16 %v4899
          %v5058 = vunpack.c.l.b16 %v4900
          %v5059 = vunpack.c.h.b16 %v4900
          %v5060 = vunpack.c.l.b16 %v4901
          %v5061 = vunpack.c.h.b16 %v4901
          %v5062 = vunpack.c.l.b16 %v4902
          %v5063 = vunpack.c.h.b16 %v4902
          %v5064 = vunpack.c.l.b16 %v4903
          %v5065 = vunpack.c.h.b16 %v4903
          %v5066 = vunpack.c.l.b16 %v4904
          %v5067 = vunpack.c.h.b16 %v4904
          %v5068 = vunpack.c.l.b16 %v4905
          %v5069 = vunpack.c.h.b16 %v4905
          %v5070 = vunpack.c.l.b16 %v4906
          %v5071 = vunpack.c.h.b16 %v4906
          %v5072 = vunpack.c.l.b16 %v4907
          %v5073 = vunpack.c.h.b16 %v4907
          %v5074 = vunpack.c.l.b16 %v4908
          %v5075 = vunpack.c.h.b16 %v4908
          %v5076 = vunpack.c.l.b16 %v4909
          %v5077 = vunpack.c.h.b16 %v4909
          %v5078 = vunpack.c.l.b16 %v4910
          %v5079 = vunpack.c.h.b16 %v4910
          %v5080 = vunpack.c.l.b16 %v4911
          %v5081 = vunpack.c.h.b16 %v4911
          %v5082 = vunpack.c.l.b16 %v4912
          %v5083 = vunpack.c.h.b16 %v4912
          %v5084 = vunpack.c.l.b16 %v4913
          %v5085 = vunpack.c.h.b16 %v4913
          %v5086 = vunpack.c.l.b16 %v4914
          %v5087 = vunpack.c.h.b16 %v4914
          %v5088 = vunpack.c.l.b16 %v4915
          %v5089 = vunpack.c.h.b16 %v4915
          %v5090 = vunpack.c.l.b16 %v4916
          %v5091 = vunpack.c.h.b16 %v4916
          %v5092 = vunpack.c.l.b16 %v4917
          %v5093 = vunpack.c.h.b16 %v4917
          %v5094 = vunpack.c.l.b16 %v4918
          %v5095 = vunpack.c.h.b16 %v4918
          %v5096 = vunpack.c.l.b16 %v4919
          %v5097 = vunpack.c.h.b16 %v4919
          %v5098 = vunpack.c.l.b16 %v4920
          %v5099 = vunpack.c.h.b16 %v4920
          %v5100 = vunpack.c.l.b16 %v4921
          %v5101 = vunpack.c.h.b16 %v4921
          %v5102 = vunpack.c.l.b16 %v4922
          %v5103 = vunpack.c.h.b16 %v4922
          %v5104 = vunpack.c.l.b16 %v4923
          %v5105 = vunpack.c.h.b16 %v4923
          %v5106 = vunpack.c.l.b16 %v4924
          %v5107 = vunpack.c.h.b16 %v4924
          %v5108 = vunpack.c.l.b16 %v4925
          %v5109 = vunpack.c.h.b16 %v4925
          %v5110 = vunpack.c.l.b16 %v4926
          %v5111 = vunpack.c.h.b16 %v4926
          %v5112 = vunpack.c.l.b16 %v4927
          %v5113 = vunpack.c.h.b16 %v4927
          %v5114 = vunpack.c.l.b16 %v4928
          %v5115 = vunpack.c.h.b16 %v4928
          %v5116 = vunpack.c.l.b16 %v4929
          %v5117 = vunpack.c.h.b16 %v4929
          %v5118 = vunpack.c.l.b16 %v4930
          %v5119 = vunpack.c.h.b16 %v4930
          %v5120 = vunpack.c.l.b16 %v4931
          %v5121 = vunpack.c.h.b16 %v4931
          %v5122 = vunpack.c.l.b16 %v4932
          %v5123 = vunpack.c.h.b16 %v4932
          %v5124 = vunpack.c.l.b16 %v4933
          %v5125 = vunpack.c.h.b16 %v4933
          %v5126 = vunpack.c.l.b16 %v4934
          %v5127 = vunpack.c.h.b16 %v4934
          %v5128 = vpack.c.b16 %v5002, %v5000
          %v5129 = vpack.c.b16 %v5003, %v5001
          %v5130 = vpack.c.b16 %v5006, %v5004
          %v5131 = vpack.c.b16 %v5007, %v5005
          %v5132 = vpack.c.b16 %v5010, %v5008
          %v5133 = vpack.c.b16 %v5011, %v5009
          %v5134 = vpack.c.b16 %v5014, %v5012
          %v5135 = vpack.c.b16 %v5015, %v5013
          %v5136 = vpack.c.b16 %v5018, %v5016
          %v5137 = vpack.c.b16 %v5019, %v5017
          %v5138 = vpack.c.b16 %v5022, %v5020
          %v5139 = vpack.c.b16 %v5023, %v5021
          %v5140 = vpack.c.b16 %v5026, %v5024
          %v5141 = vpack.c.b16 %v5027, %v5025
          %v5142 = vpack.c.b16 %v5030, %v5028
          %v5143 = vpack.c.b16 %v5031, %v5029
          %v5144 = vpack.c.b16 %v5034, %v5032
          %v5145 = vpack.c.b16 %v5035, %v5033
          %v5146 = vpack.c.b16 %v5038, %v5036
          %v5147 = vpack.c.b16 %v5039, %v5037
          %v5148 = vpack.c.b16 %v5042, %v5040
          %v5149 = vpack.c.b16 %v5043, %v5041
          %v5150 = vpack.c.b16 %v5046, %v5044
          %v5151 = vpack.c.b16 %v5047, %v5045
          %v5152 = vpack.c.b16 %v5050, %v5048
          %v5153 = vpack.c.b16 %v5051, %v5049
          %v5154 = vpack.c.b16 %v5054, %v5052
          %v5155 = vpack.c.b16 %v5055, %v5053
          %v5156 = vpack.c.b16 %v5058, %v5056
          %v5157 = vpack.c.b16 %v5059, %v5057
          %v5158 = vpack.c.b16 %v5062, %v5060
          %v5159 = vpack.c.b16 %v5063, %v5061
          %v5160 = vpack.c.b16 %v5066, %v5064
          %v5161 = vpack.c.b16 %v5067, %v5065
          %v5162 = vpack.c.b16 %v5070, %v5068
          %v5163 = vpack.c.b16 %v5071, %v5069
          %v5164 = vpack.c.b16 %v5074, %v5072
          %v5165 = vpack.c.b16 %v5075, %v5073
          %v5166 = vpack.c.b16 %v5078, %v5076
          %v5167 = vpack.c.b16 %v5079, %v5077
          %v5168 = vpack.c.b16 %v5082, %v5080
          %v5169 = vpack.c.b16 %v5083, %v5081
          %v5170 = vpack.c.b16 %v5086, %v5084
          %v5171 = vpack.c.b16 %v5087, %v5085
          %v5172 = vpack.c.b16 %v5090, %v5088
          %v5173 = vpack.c.b16 %v5091, %v5089
          %v5174 = vpack.c.b16 %v5094, %v5092
          %v5175 = vpack.c.b16 %v5095, %v5093
          %v5176 = vpack.c.b16 %v5098, %v5096
          %v5177 = vpack.c.b16 %v5099, %v5097
          %v5178 = vpack.c.b16 %v5102, %v5100
          %v5179 = vpack.c.b16 %v5103, %v5101
          %v5180 = vpack.c.b16 %v5106, %v5104
          %v5181 = vpack.c.b16 %v5107, %v5105
          %v5182 = vpack.c.b16 %v5110, %v5108
          %v5183 = vpack.c.b16 %v5111, %v5109
          %v5184 = vpack.c.b16 %v5114, %v5112
          %v5185 = vpack.c.b16 %v5115, %v5113
          %v5186 = vpack.c.b16 %v5118, %v5116
          %v5187 = vpack.c.b16 %v5119, %v5117
          %v5188 = vpack.c.b16 %v5122, %v5120
          %v5189 = vpack.c.b16 %v5123, %v5121
          %v5190 = vpack.c.b16 %v5126, %v5124
          %v5191 = vpack.c.b16 %v5127, %v5125
          %v5257 = vlaneseq
          %v5258 = vshrl.u32 %v5257, 7
          %v5259 = vsub.s32 0, %v5258
          %v5260 = vrot.slane %v4935, %v5259
          %v5261 = vlaneseq
          %v5262 = vshrl.u32 %v5261, 7
          %v5263 = vsub.s32 1, %v5262
          %v5264 = vrot.slane %v4935, %v5263
          %5267 = vmatprep.subr.bf16.mxu0 %v5143
          %5268 = vmatpush1.bf16.msra.mxu0 %v5142
          %5269 = vmatprep.subr.bf16.mxu0 %v5141
          %5270 = vmatpush1.bf16.msra.mxu0 %v5140
          %5271 = vmatprep.subr.bf16.mxu0 %v5139
          %5272 = vmatpush1.bf16.msra.mxu0 %v5138
          %5273 = vmatprep.subr.bf16.mxu0 %v5137
          %5274 = vmatpush1.bf16.msra.mxu0 %v5136
          %5275 = vmatprep.subr.bf16.mxu0 %v5135
          %5276 = vmatpush1.bf16.msra.mxu0 %v5134
          %5277 = vmatprep.subr.bf16.mxu0 %v5133
          %5278 = vmatpush1.bf16.msra.mxu0 %v5132
          %5279 = vmatprep.subr.bf16.mxu0 %v5131
          %5280 = vmatpush1.bf16.msra.mxu0 %v5130
          %5281 = vmatprep.subr.bf16.mxu0 %v5129
          %5282 = vmatpush1.bf16.msra.mxu0 %v5128
          %5283 = vmatprep.subr.bf16.mxu0 %v5159
          %5284 = vmatpush2.bf16.msra.mxu0 %v5158
          %5285 = vmatprep.subr.bf16.mxu0 %v5157
          %5286 = vmatpush2.bf16.msra.mxu0 %v5156
          %5287 = vmatprep.subr.bf16.mxu0 %v5155
          %5288 = vmatpush2.bf16.msra.mxu0 %v5154
          %5289 = vmatprep.subr.bf16.mxu0 %v5153
          %5290 = vmatpush2.bf16.msra.mxu0 %v5152
          %5291 = vmatprep.subr.bf16.mxu0 %v5151
          %5292 = vmatpush2.bf16.msra.mxu0 %v5150
          %5293 = vmatprep.subr.bf16.mxu0 %v5149
          %5294 = vmatpush2.bf16.msra.mxu0 %v5148
          %5295 = vmatprep.subr.bf16.mxu0 %v5147
          %5296 = vmatpush2.bf16.msra.mxu0 %v5146
          %5297 = vmatprep.subr.bf16.mxu0 %v5145
          %5298 = vmatpush2.bf16.msra.mxu0 %v5144
          %5299 = vmatprep.mubr.bf16.mxu0 %v4868
          %5300 = vmatmul.mubr.bf16.gmra.mxu0 %v4867
          %v5301 = vpop.f32.mrf.mxu0
          %v5302 = vadd.f32 %v5260, %v5301
          %v5303 = vpop.f32.mrf.mxu0
          %v5304 = vadd.f32 %v5264, %v5303
          %v5305 = vpop.f32.mrf.mxu0
          %v5306 = vpop.f32.mrf.mxu0
          %5307 = vdwg.mxu0
          %5308 = vmatprep.subr.bf16.mxu0 %v5175
          %5309 = vmatpush1.bf16.msra.mxu0 %v5174
          %5310 = vmatprep.subr.bf16.mxu0 %v5173
          %5311 = vmatpush1.bf16.msra.mxu0 %v5172
          %5312 = vmatprep.subr.bf16.mxu0 %v5171
          %5313 = vmatpush1.bf16.msra.mxu0 %v5170
          %5314 = vmatprep.subr.bf16.mxu0 %v5169
          %5315 = vmatpush1.bf16.msra.mxu0 %v5168
          %5316 = vmatprep.subr.bf16.mxu0 %v5167
          %5317 = vmatpush1.bf16.msra.mxu0 %v5166
          %5318 = vmatprep.subr.bf16.mxu0 %v5165
          %5319 = vmatpush1.bf16.msra.mxu0 %v5164
          %5320 = vmatprep.subr.bf16.mxu0 %v5163
          %5321 = vmatpush1.bf16.msra.mxu0 %v5162
          %5322 = vmatprep.subr.bf16.mxu0 %v5161
          %5323 = vmatpush1.bf16.msra.mxu0 %v5160
          %5324 = vmatprep.subr.bf16.mxu0 %v5191
          %5325 = vmatpush2.bf16.msra.mxu0 %v5190
          %5326 = vmatprep.subr.bf16.mxu0 %v5189
          %5327 = vmatpush2.bf16.msra.mxu0 %v5188
          %5328 = vmatprep.subr.bf16.mxu0 %v5187
          %5329 = vmatpush2.bf16.msra.mxu0 %v5186
          %5330 = vmatprep.subr.bf16.mxu0 %v5185
          %5331 = vmatpush2.bf16.msra.mxu0 %v5184
          %5332 = vmatprep.subr.bf16.mxu0 %v5183
          %5333 = vmatpush2.bf16.msra.mxu0 %v5182
          %5334 = vmatprep.subr.bf16.mxu0 %v5181
          %5335 = vmatpush2.bf16.msra.mxu0 %v5180
          %5336 = vmatprep.subr.bf16.mxu0 %v5179
          %5337 = vmatpush2.bf16.msra.mxu0 %v5178
          %5338 = vmatprep.subr.bf16.mxu0 %v5177
          %5339 = vmatpush2.bf16.msra.mxu0 %v5176
          %5340 = vmatprep.mubr.bf16.mxu0 %v4870
          %5341 = vmatmul.mubr.bf16.gmra.mxu0 %v4869
          %v5342 = vpop.f32.mrf.mxu0
          %v5343 = vadd.f32 %v5302, %v5342
          %v5344 = vpop.f32.mrf.mxu0
          %v5345 = vadd.f32 %v5304, %v5344
          %v5346 = vpop.f32.mrf.mxu0
          %v5347 = vpop.f32.mrf.mxu0
          %5348 = vdwg.mxu0
          %v5349 = vmax.f32 %v5343, 0.0
          %v5350 = vmax.f32 %v5345, 0.0
          %v5351 = vpack.c.bf16 %v5349, %v5349
          %v5352 = vpack.c.bf16 %v5350, %v5350
          %v5353 = vld [vmem:[%s9] sm:$0xf]
          %v5354 = vld [vmem:[%s9 + $0x4] sm:$0xf]
          %v5355 = vld [vmem:[%s9 + $0x8] sm:$0xf]
          %v5356 = vld [vmem:[%s9 + $0xc] sm:$0xf]
          %v5357 = vld [vmem:[%s9 + $0x10] sm:$0xf]
          %v5358 = vld [vmem:[%s9 + $0x14] sm:$0xf]
          %v5359 = vld [vmem:[%s9 + $0x18] sm:$0xf]
          %v5360 = vld [vmem:[%s9 + $0x1c] sm:$0xf]
          %v5361 = vld [vmem:[%s9 + $0x20] sm:$0xf]
          %v5362 = vld [vmem:[%s9 + $0x24] sm:$0xf]
          %v5363 = vld [vmem:[%s9 + $0x28] sm:$0xf]
          %v5364 = vld [vmem:[%s9 + $0x2c] sm:$0xf]
          %v5365 = vld [vmem:[%s9 + $0x30] sm:$0xf]
          %v5366 = vld [vmem:[%s9 + $0x34] sm:$0xf]
          %v5367 = vld [vmem:[%s9 + $0x38] sm:$0xf]
          %v5368 = vld [vmem:[%s9 + $0x3c] sm:$0xf]
          %v5369 = vld [vmem:[%s9 + $0x40] sm:$0xf]
          %v5370 = vld [vmem:[%s9 + $0x44] sm:$0xf]
          %v5371 = vld [vmem:[%s9 + $0x48] sm:$0xf]
          %v5372 = vld [vmem:[%s9 + $0x4c] sm:$0xf]
          %v5373 = vld [vmem:[%s9 + $0x50] sm:$0xf]
          %v5374 = vld [vmem:[%s9 + $0x54] sm:$0xf]
          %v5375 = vld [vmem:[%s9 + $0x58] sm:$0xf]
          %v5376 = vld [vmem:[%s9 + $0x5c] sm:$0xf]
          %v5377 = vld [vmem:[%s9 + $0x60] sm:$0xf]
          %v5378 = vld [vmem:[%s9 + $0x64] sm:$0xf]
          %v5379 = vld [vmem:[%s9 + $0x68] sm:$0xf]
          %v5380 = vld [vmem:[%s9 + $0x6c] sm:$0xf]
          %v5381 = vld [vmem:[%s9 + $0x70] sm:$0xf]
          %v5382 = vld [vmem:[%s9 + $0x74] sm:$0xf]
          %v5383 = vld [vmem:[%s9 + $0x78] sm:$0xf]
          %v5384 = vld [vmem:[%s9 + $0x7c] sm:$0xf]
          %v5385 = vld [vmem:[%s10] sm:$0x1]
          %v5418 = vunpack.c.l.b16 %v5353
          %v5419 = vunpack.c.l.b16 %v5354
          %v5420 = vunpack.c.l.b16 %v5355
          %v5421 = vunpack.c.l.b16 %v5356
          %v5422 = vunpack.c.l.b16 %v5357
          %v5423 = vunpack.c.l.b16 %v5358
          %v5424 = vunpack.c.l.b16 %v5359
          %v5425 = vunpack.c.l.b16 %v5360
          %v5426 = vunpack.c.l.b16 %v5361
          %v5427 = vunpack.c.l.b16 %v5362
          %v5428 = vunpack.c.l.b16 %v5363
          %v5429 = vunpack.c.l.b16 %v5364
          %v5430 = vunpack.c.l.b16 %v5365
          %v5431 = vunpack.c.l.b16 %v5366
          %v5432 = vunpack.c.l.b16 %v5367
          %v5433 = vunpack.c.l.b16 %v5368
          %v5434 = vunpack.c.l.b16 %v5369
          %v5435 = vunpack.c.l.b16 %v5370
          %v5436 = vunpack.c.l.b16 %v5371
          %v5437 = vunpack.c.l.b16 %v5372
          %v5438 = vunpack.c.l.b16 %v5373
          %v5439 = vunpack.c.l.b16 %v5374
          %v5440 = vunpack.c.l.b16 %v5375
          %v5441 = vunpack.c.l.b16 %v5376
          %v5442 = vunpack.c.l.b16 %v5377
          %v5443 = vunpack.c.l.b16 %v5378
          %v5444 = vunpack.c.l.b16 %v5379
          %v5445 = vunpack.c.l.b16 %v5380
          %v5446 = vunpack.c.l.b16 %v5381
          %v5447 = vunpack.c.l.b16 %v5382
          %v5448 = vunpack.c.l.b16 %v5383
          %v5449 = vunpack.c.l.b16 %v5384
          %v5450 = vpack.c.b16 %v5419, %v5418
          %v5451 = vpack.c.b16 %v5421, %v5420
          %v5452 = vpack.c.b16 %v5423, %v5422
          %v5453 = vpack.c.b16 %v5425, %v5424
          %v5454 = vpack.c.b16 %v5427, %v5426
          %v5455 = vpack.c.b16 %v5429, %v5428
          %v5456 = vpack.c.b16 %v5431, %v5430
          %v5457 = vpack.c.b16 %v5433, %v5432
          %v5458 = vpack.c.b16 %v5435, %v5434
          %v5459 = vpack.c.b16 %v5437, %v5436
          %v5460 = vpack.c.b16 %v5439, %v5438
          %v5461 = vpack.c.b16 %v5441, %v5440
          %v5462 = vpack.c.b16 %v5443, %v5442
          %v5463 = vpack.c.b16 %v5445, %v5444
          %v5464 = vpack.c.b16 %v5447, %v5446
          %v5465 = vpack.c.b16 %v5449, %v5448
          %5482 = vmatprep.subr.bf16.mxu0 0
          %5483 = vmatpush1.bf16.msra.mxu0 %v5457
          %5484 = vmatprep.subr.bf16.mxu0 0
          %5485 = vmatpush1.bf16.msra.mxu0 %v5456
          %5486 = vmatprep.subr.bf16.mxu0 0
          %5487 = vmatpush1.bf16.msra.mxu0 %v5455
          %5488 = vmatprep.subr.bf16.mxu0 0
          %5489 = vmatpush1.bf16.msra.mxu0 %v5454
          %5490 = vmatprep.subr.bf16.mxu0 0
          %5491 = vmatpush1.bf16.msra.mxu0 %v5453
          %5492 = vmatprep.subr.bf16.mxu0 0
          %5493 = vmatpush1.bf16.msra.mxu0 %v5452
          %5494 = vmatprep.subr.bf16.mxu0 0
          %5495 = vmatpush1.bf16.msra.mxu0 %v5451
          %5496 = vmatprep.subr.bf16.mxu0 0
          %5497 = vmatpush1.bf16.msra.mxu0 %v5450
          %5498 = vmatprep.subr.bf16.mxu0 0
          %5499 = vmatpush2.bf16.msra.mxu0 %v5465
          %5500 = vmatprep.subr.bf16.mxu0 0
          %5501 = vmatpush2.bf16.msra.mxu0 %v5464
          %5502 = vmatprep.subr.bf16.mxu0 0
          %5503 = vmatpush2.bf16.msra.mxu0 %v5463
          %5504 = vmatprep.subr.bf16.mxu0 0
          %5505 = vmatpush2.bf16.msra.mxu0 %v5462
          %5506 = vmatprep.subr.bf16.mxu0 0
          %5507 = vmatpush2.bf16.msra.mxu0 %v5461
          %5508 = vmatprep.subr.bf16.mxu0 0
          %5509 = vmatpush2.bf16.msra.mxu0 %v5460
          %5510 = vmatprep.subr.bf16.mxu0 0
          %5511 = vmatpush2.bf16.msra.mxu0 %v5459
          %5512 = vmatprep.subr.bf16.mxu0 0
          %5513 = vmatpush2.bf16.msra.mxu0 %v5458
          %5514 = vmatprep.mubr.bf16.mxu0 %v5352
          %5515 = vmatmul.mubr.bf16.gmra.mxu0 %v5351
          %v5516 = vpop.f32.mrf.mxu0
          %v5517 = vadd.f32 %v5385, %v5516
          %v5518 = vpop.f32.mrf.mxu0
          %v5519 = vpop.f32.mrf.mxu0
          %v5520 = vpop.f32.mrf.mxu0
          %5521 = vdwg.mxu0
          %5522 = vst [vmem:[%s431] sm:$0x1] %v5517
        $region80: #{skin_cancer_classifier_forward.1} parent=63 // pred_fallthru
          _
        %s5523 = sand.u32 %s285, 1
        %s5524 = scalar_lea.sflag [#allocation5], %s5523
        %s5525 = sand.u32 %s285, 1
        %s5526 = scalar_lea.vmem [#allocation8], %s5525
        // Predicated region
        $region81: #{skin_cancer_classifier_forward.1} parent=63 // pred_check
          %p5527 = pneg %p295
        $region82: #{skin_cancer_classifier_forward.1} parent=63 // pred_check_branch
          %5529 = sbr.rel (%p5527) target = $region84
        $region83: #{skin_cancer_classifier_forward.1} parent=63 // pred_region
          %s5531 = ssub.s32 16, 16
          %5532 = vsyncadd %s5524, %s5531
          %s5533 = smul.addr %s31, 16
          %s5534 = scalar_lea.hbm %s11, %s5533
          %s5536 = sshll.u32 %s5526, 4
          %s5537 = int_to_ptr.vmem [resolvable:$true] %s5536
          %5539 = dma.vmem_to_hbm [thread:$0]  %s5537, 16, %s5534, %s5524
        $region84: #{skin_cancer_classifier_forward.1} parent=63 // pred_fallthru
          _
      $region64: #{skin_cancer_classifier_forward.1} parent=5 // pred_fallthru
        _
      %p5540 = scmp.le.s32.totalorder 2, %s22
      // Predicated region
      $region85: #{skin_cancer_classifier_forward.1} parent=5 // pred_check
        %p5541 = pneg %p5540
      $region86: #{skin_cancer_classifier_forward.1} parent=5 // pred_check_branch
        %5543 = sbr.rel (%p5541) target = $region88
      $region87: #{skin_cancer_classifier_forward.1} parent=5 // pred_region
        %s5544 = ssub.s32 %s22, 2
        // Predicated region
        $region89: #{skin_cancer_classifier_forward.1} parent=87 // pred_check
          %p5545 = pneg %p301
        $region90: #{skin_cancer_classifier_forward.1} parent=87 // pred_check_branch
          %5547 = sbr.rel (%p5545) target = $region92
        $region91: #{skin_cancer_classifier_forward.1} parent=87 // pred_region
          %s5548 = sand.u32 %s286, 1
          %s5549 = scalar_lea.sflag [#allocation5], %s5548
          %s5550 = sand.u32 %s286, 1
          %s5551 = scalar_lea.vmem [#allocation8], %s5550
          %5552 = dma.done %s5549, 16
        $region92: #{skin_cancer_classifier_forward.1} parent=87 // pred_fallthru
          _
      $region88: #{skin_cancer_classifier_forward.1} parent=5 // pred_fallthru
        _
    $region6: #{skin_cancer_classifier_forward.1} parent=1 // loop_footer
      %s26 = sadd.s32 1, %s22
    $region7: #{skin_cancer_classifier_forward.1} parent=1 // loop_footer_branch
      %21 = sbr.rel target = $region3
    $region8: #{skin_cancer_classifier_forward.1} parent=1 // loop_exit
      _
    %5553 = vsyncpa [#allocation4], 1
    %s5554 = scalar_lea.sflag [#allocation4], 1
    %5555 = vsyncpa %s5554, 1
    %5556 = vsyncpa [#allocation7], 1
    %5557 = vsyncpa [#allocation5], 1
    %s5558 = scalar_lea.sflag [#allocation5], 1
    %5559 = vsyncpa %s5558, 1

</llo_original>
